<compile_context>
chip_gen: v7x
topology: tpu7x:2x2x1
jax: 0.10.0
libtpu: 0.0.40
codegen_flags: <defaults>
</compile_context>

<pallas_src>
import jax
import jax.numpy as jnp
from jax.experimental import pallas as pl
from jax.experimental.pallas import tpu as pltpu


# ----------------------------------------------------------------------------
# Helpers
# ----------------------------------------------------------------------------
def _round_up(v, m):
    return ((v + m - 1) // m) * m


def _choose_tm(batch, tm_req):
    """Pick a 128-multiple row tile: as large as requested, but keep >= 2 grid
    steps (when the batch allows) so the parallel axis can shard across TCs."""
    batch128 = _round_up(max(batch, 1), 128)
    tm = max(128, min(_round_up(tm_req, 128), batch128))
    while tm > 128 and -(-batch128 // tm) < 2:
        tm = max(128, (tm // 2) // 128 * 128)
    return tm


# ----------------------------------------------------------------------------
# Pallas kernel: full 6-layer autoencoder forward for one row-tile of the batch.
# ----------------------------------------------------------------------------
def _make_kernel(in_p, hid_p):
    def kernel(x_ref, w1, w2, w3, w4, w5, w6, b_ref, enc_ref, dec_ref):
        b = b_ref[...]                       # (6, Fmax) f32, packed biases

        def layer(h_lo, w_ref, bias_row, relu):
            # bf16 x bf16 -> f32 accumulation on the MXU; bias/ReLU in f32.
            y = jnp.dot(h_lo, w_ref[...],
                        preferred_element_type=jnp.float32) + bias_row
            return jnp.maximum(y, 0.0) if relu else y

        # ---- encoder ----
        h = layer(x_ref[...], w1, b[0:1, :hid_p], True)
        h = layer(h.astype(jnp.bfloat16), w2, b[1:2, :hid_p], True)
        enc = layer(h.astype(jnp.bfloat16), w3, b[2:3, :hid_p], False)
        enc_ref[...] = enc.astype(enc_ref.dtype)        # no ReLU on encoder out

        # ---- decoder (consumes encoder output, as in the reference forward) --
        h = layer(enc.astype(jnp.bfloat16), w4, b[3:4, :hid_p], True)
        h = layer(h.astype(jnp.bfloat16), w5, b[4:5, :hid_p], True)
        dec = layer(h.astype(jnp.bfloat16), w6, b[5:6, :in_p], False)
        dec_ref[...] = dec.astype(dec_ref.dtype)        # no ReLU on decoder out

    return kernel


# ----------------------------------------------------------------------------
# Wrapper: pad/cast inputs, build grid + BlockSpecs, invoke pallas_call.
# ----------------------------------------------------------------------------
def autoencoder_forward(x, params, *, tm=512):
    """params: list of 6 (W, b) pairs, W: (f_in, f_out), b: (f_out,)."""
    assert len(params) == 6
    batch, in_feats = x.shape
    hidden = params[0][0].shape[1]
    assert params[5][0].shape[1] == in_feats

    in_p = _round_up(in_feats, 128)
    hid_p = _round_up(hidden, 128)
    fmax = max(in_p, hid_p)

    tm = _choose_tm(batch, tm)
    batch_p = _round_up(batch, tm)
    grid = (batch_p // tm,)

    # --- pad + cast operands (done once, outside the kernel) -----------------
    x_p = jnp.zeros((batch_p, in_p), jnp.bfloat16)
    x_p = x_p.at[:batch, :in_feats].set(x.astype(jnp.bfloat16))

    pad_dims = [(in_p, hid_p), (hid_p, hid_p), (hid_p, hid_p),
                (hid_p, hid_p), (hid_p, hid_p), (hid_p, in_p)]
    ws = []
    bpack = jnp.zeros((6, fmax), jnp.float32)
    for li, ((w, b), (r, c)) in enumerate(zip(params, pad_dims)):
        wp = jnp.zeros((r, c), jnp.bfloat16)
        wp = wp.at[:w.shape[0], :w.shape[1]].set(w.astype(jnp.bfloat16))
        ws.append(wp)
        bpack = bpack.at[li, :b.shape[0]].set(b.astype(jnp.float32))

    row_map = lambda i: (i, 0)       # x / outputs: stream row tiles
    const_map = lambda i: (0, 0)     # weights / biases: same block every step

    def build(single_buffer_weights):
        def const_spec(shape):
            if single_buffer_weights:
                return pl.BlockSpec(shape, const_map,
                                    pipeline_mode=pl.Buffered(1))
            return pl.BlockSpec(shape, const_map)

        in_specs = [pl.BlockSpec((tm, in_p), row_map)]
        in_specs += [const_spec(w.shape) for w in ws]
        in_specs += [const_spec((6, fmax))]
        out_specs = (pl.BlockSpec((tm, hid_p), row_map),
                     pl.BlockSpec((tm, in_p), row_map))
        out_shape = (jax.ShapeDtypeStruct((batch_p, hid_p), jnp.float32),
                     jax.ShapeDtypeStruct((batch_p, in_p), jnp.float32))

        # VMEM budget: resident weights/biases (+ their buffer count) plus the
        # double-buffered streamed x/enc/dec tiles, with headroom, clamped to
        # 3/4 of the physical per-core VMEM (64 MiB on v7x, 128 MiB v5e/v6e).
        wbuf = 1 if single_buffer_weights else 2
        footprint = (wbuf * sum(int(w.size) * 2 for w in ws)      # bf16 weights
                     + wbuf * 6 * fmax * 4                        # f32 biases
                     + 2 * tm * in_p * 2                          # x tile
                     + 2 * tm * hid_p * 4                         # encoded tile
                     + 2 * tm * in_p * 4)                         # decoded tile
        try:
            vmem_cap = int(pltpu.get_tpu_info().vmem_capacity_bytes)
        except Exception:
            vmem_cap = 64 << 20
        vmem_limit = max(2 * footprint + (8 << 20), 16 << 20)
        vmem_limit = min(vmem_limit, vmem_cap * 3 // 4)

        return pl.pallas_call(
            _make_kernel(in_p, hid_p),
            out_shape=out_shape,
            grid=grid,
            in_specs=in_specs,
            out_specs=out_specs,
            compiler_params=pltpu.CompilerParams(
                dimension_semantics=("parallel",),
                vmem_limit_bytes=int(vmem_limit)),
        )

    args = (x_p, *ws, bpack)
    try:
        enc_p, dec_p = build(True)(*args)
    except Exception:
        # Fallback for JAX versions without single-buffered constant operands:
        # default double buffering is still correct and fits VMEM here.
        enc_p, dec_p = build(False)(*args)

    return enc_p[:batch, :hidden], dec_p[:batch, :in_feats]


# ----------------------------------------------------------------------------
# Parameter init (PyTorch nn.Linear default: U(-1/sqrt(fan_in), 1/sqrt(fan_in)))
# and a pure-JAX f32 reference for correctness checking.
# ----------------------------------------------------------------------------
def init_autoencoder_params(key, input_size, hidden_size):
    dims = [
        (input_size, hidden_size), (hidden_size, hidden_size), (hidden_size, hidden_size),
        (hidden_size, hidden_size), (hidden_size, hidden_size), (hidden_size, input_size),
    ]
    params = []
    for f_in, f_out in dims:
        key, kw, kb = jax.random.split(key, 3)
        bound = 1.0 / (f_in ** 0.5)
        w = jax.random.uniform(kw, (f_in, f_out), jnp.float32, -bound, bound)
        b = jax.random.uniform(kb, (f_out,), jnp.float32, -bound, bound)
        params.append((w, b))
    return params


def autoencoder_ref(x, params):
    (w1, b1), (w2, b2), (w3, b3), (w4, b4), (w5, b5), (w6, b6) = params
    h = jnp.maximum(x @ w1 + b1, 0.0)
    h = jnp.maximum(h @ w2 + b2, 0.0)
    enc = h @ w3 + b3
    h = jnp.maximum(enc @ w4 + b4, 0.0)
    h = jnp.maximum(h @ w5 + b5, 0.0)
    dec = h @ w6 + b6
    return enc, dec


if __name__ == "__main__":
    # Small, deterministic shapes that deliberately exercise the padding paths:
    # batch not a multiple of the tile, features not multiples of 128.
    BATCH, INPUT_SIZE, HIDDEN_SIZE = 300, 100, 96

    key = jax.random.PRNGKey(0)
    kx, kp = jax.random.split(key)

    x = jax.random.normal(kx, (BATCH, INPUT_SIZE), jnp.float32)
    params = init_autoencoder_params(kp, INPUT_SIZE, HIDDEN_SIZE)

    encoded, decoded = autoencoder_forward(x, params)
    encoded = jax.block_until_ready(encoded)
    decoded = jax.block_until_ready(decoded)

    enc_ref, dec_ref = autoencoder_ref(x, params)
    assert encoded.shape == (BATCH, HIDDEN_SIZE)
    assert decoded.shape == (BATCH, INPUT_SIZE)
    # bf16 MXU path with f32 accumulation -> loose tolerance vs. the f32 ref.
    assert jnp.allclose(encoded, enc_ref, rtol=5e-2, atol=5e-2), "encoded mismatch"
    assert jnp.allclose(decoded, dec_ref, rtol=5e-2, atol=5e-2), "decoded mismatch"

    print("KERNEL_OK")
</pallas_src>

<mosaic_0001>
module attributes {stable_mosaic.version = 11 : i64} {
  func.func @kernel(%arg0: i32, %arg1: memref<128x128xbf16, #tpu.memory_space<vmem>>, %arg2: memref<128x128xbf16, #tpu.memory_space<vmem>>, %arg3: memref<128x128xbf16, #tpu.memory_space<vmem>>, %arg4: memref<128x128xbf16, #tpu.memory_space<vmem>>, %arg5: memref<128x128xbf16, #tpu.memory_space<vmem>>, %arg6: memref<128x128xbf16, #tpu.memory_space<vmem>>, %arg7: memref<128x128xbf16, #tpu.memory_space<vmem>>, %arg8: memref<6x128xf32, #tpu.memory_space<vmem>>, %arg9: memref<128x128xf32, #tpu.memory_space<vmem>>, %arg10: memref<128x128xf32, #tpu.memory_space<vmem>>) attributes {dimension_semantics = [#tpu.dimension_semantics<parallel>], iteration_bounds = array<i64: 3>, scalar_prefetch = 0 : i64, scratch_operands = 0 : i64, tpu.core_type = #tpu.core_type<tc>, window_params = [{transform_indices = @transform_0, window_bounds = array<i64: 128, 128>}, {pipeline_mode = #tpu.pipeline_mode<synchronous>, transform_indices = @transform_1, window_bounds = array<i64: 128, 128>}, {pipeline_mode = #tpu.pipeline_mode<synchronous>, transform_indices = @transform_2, window_bounds = array<i64: 128, 128>}, {pipeline_mode = #tpu.pipeline_mode<synchronous>, transform_indices = @transform_3, window_bounds = array<i64: 128, 128>}, {pipeline_mode = #tpu.pipeline_mode<synchronous>, transform_indices = @transform_4, window_bounds = array<i64: 128, 128>}, {pipeline_mode = #tpu.pipeline_mode<synchronous>, transform_indices = @transform_5, window_bounds = array<i64: 128, 128>}, {pipeline_mode = #tpu.pipeline_mode<synchronous>, transform_indices = @transform_6, window_bounds = array<i64: 128, 128>}, {pipeline_mode = #tpu.pipeline_mode<synchronous>, transform_indices = @transform_7, window_bounds = array<i64: 6, 128>}, {transform_indices = @transform_8, window_bounds = array<i64: 128, 128>}, {transform_indices = @transform_9, window_bounds = array<i64: 128, 128>}]} {
    %c0 = arith.constant 0 : index
    %c0_0 = arith.constant 0 : index
    %0 = vector.load %arg8[%c0, %c0_0] : memref<6x128xf32, #tpu.memory_space<vmem>>, vector<6x128xf32>
    %c0_1 = arith.constant 0 : index
    %c0_2 = arith.constant 0 : index
    %1 = vector.load %arg1[%c0_1, %c0_2] : memref<128x128xbf16, #tpu.memory_space<vmem>>, vector<128x128xbf16>
    %2 = vector.extract_strided_slice %0 {offsets = [0, 0], sizes = [1, 128], strides = [1, 1]} : vector<6x128xf32> to vector<1x128xf32>
    %c0_3 = arith.constant 0 : index
    %c0_4 = arith.constant 0 : index
    %3 = vector.load %arg2[%c0_3, %c0_4] : memref<128x128xbf16, #tpu.memory_space<vmem>>, vector<128x128xbf16>
    %cst = arith.constant dense<0.000000e+00> : vector<128x128xf32>
    %4 = tpu.matmul %1, %3, %cst {dimension_numbers = #tpu.dot_dimension_numbers<[1], [0], [0], [1], [0, 0, 1, 1], [], []>} : vector<128x128xbf16>, vector<128x128xbf16>, vector<128x128xf32> -> vector<128x128xf32>
    %5 = vector.broadcast %2 : vector<1x128xf32> to vector<128x128xf32>
    %6 = arith.addf %4, %5 : vector<128x128xf32>
    %cst_5 = arith.constant 0.000000e+00 : f32
    %7 = vector.broadcast %cst_5 : f32 to vector<128x128xf32>
    %8 = arith.maximumf %6, %7 : vector<128x128xf32>
    %9 = arith.truncf %8 : vector<128x128xf32> to vector<128x128xbf16>
    %10 = vector.extract_strided_slice %0 {offsets = [1, 0], sizes = [1, 128], strides = [1, 1]} : vector<6x128xf32> to vector<1x128xf32>
    %c0_6 = arith.constant 0 : index
    %c0_7 = arith.constant 0 : index
    %11 = vector.load %arg3[%c0_6, %c0_7] : memref<128x128xbf16, #tpu.memory_space<vmem>>, vector<128x128xbf16>
    %cst_8 = arith.constant dense<0.000000e+00> : vector<128x128xf32>
    %12 = tpu.matmul %9, %11, %cst_8 {dimension_numbers = #tpu.dot_dimension_numbers<[1], [0], [0], [1], [0, 0, 1, 1], [], []>} : vector<128x128xbf16>, vector<128x128xbf16>, vector<128x128xf32> -> vector<128x128xf32>
    %13 = vector.broadcast %10 : vector<1x128xf32> to vector<128x128xf32>
    %14 = arith.addf %12, %13 : vector<128x128xf32>
    %cst_9 = arith.constant 0.000000e+00 : f32
    %15 = vector.broadcast %cst_9 : f32 to vector<128x128xf32>
    %16 = arith.maximumf %14, %15 : vector<128x128xf32>
    %17 = arith.truncf %16 : vector<128x128xf32> to vector<128x128xbf16>
    %18 = vector.extract_strided_slice %0 {offsets = [2, 0], sizes = [1, 128], strides = [1, 1]} : vector<6x128xf32> to vector<1x128xf32>
    %c0_10 = arith.constant 0 : index
    %c0_11 = arith.constant 0 : index
    %19 = vector.load %arg4[%c0_10, %c0_11] : memref<128x128xbf16, #tpu.memory_space<vmem>>, vector<128x128xbf16>
    %cst_12 = arith.constant dense<0.000000e+00> : vector<128x128xf32>
    %20 = tpu.matmul %17, %19, %cst_12 {dimension_numbers = #tpu.dot_dimension_numbers<[1], [0], [0], [1], [0, 0, 1, 1], [], []>} : vector<128x128xbf16>, vector<128x128xbf16>, vector<128x128xf32> -> vector<128x128xf32>
    %21 = vector.broadcast %18 : vector<1x128xf32> to vector<128x128xf32>
    %22 = arith.addf %20, %21 : vector<128x128xf32>
    %c0_13 = arith.constant 0 : index
    %c0_14 = arith.constant 0 : index
    %23 = vector.load %arg9[%c0_13, %c0_14] : memref<128x128xf32, #tpu.memory_space<vmem>>, vector<128x128xf32>
    tpu.vector_store %arg9[%c0_13, %c0_14], %22 {strides = array<i32>} : memref<128x128xf32, #tpu.memory_space<vmem>>, vector<128x128xf32>,
    %24 = arith.truncf %22 : vector<128x128xf32> to vector<128x128xbf16>
    %25 = vector.extract_strided_slice %0 {offsets = [3, 0], sizes = [1, 128], strides = [1, 1]} : vector<6x128xf32> to vector<1x128xf32>
    %c0_15 = arith.constant 0 : index
    %c0_16 = arith.constant 0 : index
    %26 = vector.load %arg5[%c0_15, %c0_16] : memref<128x128xbf16, #tpu.memory_space<vmem>>, vector<128x128xbf16>
    %cst_17 = arith.constant dense<0.000000e+00> : vector<128x128xf32>
    %27 = tpu.matmul %24, %26, %cst_17 {dimension_numbers = #tpu.dot_dimension_numbers<[1], [0], [0], [1], [0, 0, 1, 1], [], []>} : vector<128x128xbf16>, vector<128x128xbf16>, vector<128x128xf32> -> vector<128x128xf32>
    %28 = vector.broadcast %25 : vector<1x128xf32> to vector<128x128xf32>
    %29 = arith.addf %27, %28 : vector<128x128xf32>
    %cst_18 = arith.constant 0.000000e+00 : f32
    %30 = vector.broadcast %cst_18 : f32 to vector<128x128xf32>
    %31 = arith.maximumf %29, %30 : vector<128x128xf32>
    %32 = arith.truncf %31 : vector<128x128xf32> to vector<128x128xbf16>
    %33 = vector.extract_strided_slice %0 {offsets = [4, 0], sizes = [1, 128], strides = [1, 1]} : vector<6x128xf32> to vector<1x128xf32>
    %c0_19 = arith.constant 0 : index
    %c0_20 = arith.constant 0 : index
    %34 = vector.load %arg6[%c0_19, %c0_20] : memref<128x128xbf16, #tpu.memory_space<vmem>>, vector<128x128xbf16>
    %cst_21 = arith.constant dense<0.000000e+00> : vector<128x128xf32>
    %35 = tpu.matmul %32, %34, %cst_21 {dimension_numbers = #tpu.dot_dimension_numbers<[1], [0], [0], [1], [0, 0, 1, 1], [], []>} : vector<128x128xbf16>, vector<128x128xbf16>, vector<128x128xf32> -> vector<128x128xf32>
    %36 = vector.broadcast %33 : vector<1x128xf32> to vector<128x128xf32>
    %37 = arith.addf %35, %36 : vector<128x128xf32>
    %cst_22 = arith.constant 0.000000e+00 : f32
    %38 = vector.broadcast %cst_22 : f32 to vector<128x128xf32>
    %39 = arith.maximumf %37, %38 : vector<128x128xf32>
    %40 = arith.truncf %39 : vector<128x128xf32> to vector<128x128xbf16>
    %41 = vector.extract_strided_slice %0 {offsets = [5, 0], sizes = [1, 128], strides = [1, 1]} : vector<6x128xf32> to vector<1x128xf32>
    %c0_23 = arith.constant 0 : index
    %c0_24 = arith.constant 0 : index
    %42 = vector.load %arg7[%c0_23, %c0_24] : memref<128x128xbf16, #tpu.memory_space<vmem>>, vector<128x128xbf16>
    %cst_25 = arith.constant dense<0.000000e+00> : vector<128x128xf32>
    %43 = tpu.matmul %40, %42, %cst_25 {dimension_numbers = #tpu.dot_dimension_numbers<[1], [0], [0], [1], [0, 0, 1, 1], [], []>} : vector<128x128xbf16>, vector<128x128xbf16>, vector<128x128xf32> -> vector<128x128xf32>
    %44 = vector.broadcast %41 : vector<1x128xf32> to vector<128x128xf32>
    %45 = arith.addf %43, %44 : vector<128x128xf32>
    %c0_26 = arith.constant 0 : index
    %c0_27 = arith.constant 0 : index
    %46 = vector.load %arg10[%c0_26, %c0_27] : memref<128x128xf32, #tpu.memory_space<vmem>>, vector<128x128xf32>
    tpu.vector_store %arg10[%c0_26, %c0_27], %45 {strides = array<i32>} : memref<128x128xf32, #tpu.memory_space<vmem>>, vector<128x128xf32>,
    return
  }
  func.func @transform_0(%arg0: i32) -> (i32, i32) {
    %c0_i32 = arith.constant 0 : i32
    %c0_i32_0 = arith.constant 0 : i32
    return %arg0, %c0_i32 : i32, i32
  }
  func.func @transform_1(%arg0: i32) -> (i32, i32) {
    %c0_i32 = arith.constant 0 : i32
    %c0_i32_0 = arith.constant 0 : i32
    %c0_i32_1 = arith.constant 0 : i32
    return %c0_i32, %c0_i32_0 : i32, i32
  }
  func.func @transform_2(%arg0: i32) -> (i32, i32) {
    %c0_i32 = arith.constant 0 : i32
    %c0_i32_0 = arith.constant 0 : i32
    %c0_i32_1 = arith.constant 0 : i32
    return %c0_i32, %c0_i32_0 : i32, i32
  }
  func.func @transform_3(%arg0: i32) -> (i32, i32) {
    %c0_i32 = arith.constant 0 : i32
    %c0_i32_0 = arith.constant 0 : i32
    %c0_i32_1 = arith.constant 0 : i32
    return %c0_i32, %c0_i32_0 : i32, i32
  }
  func.func @transform_4(%arg0: i32) -> (i32, i32) {
    %c0_i32 = arith.constant 0 : i32
    %c0_i32_0 = arith.constant 0 : i32
    %c0_i32_1 = arith.constant 0 : i32
    return %c0_i32, %c0_i32_0 : i32, i32
  }
  func.func @transform_5(%arg0: i32) -> (i32, i32) {
    %c0_i32 = arith.constant 0 : i32
    %c0_i32_0 = arith.constant 0 : i32
    %c0_i32_1 = arith.constant 0 : i32
    return %c0_i32, %c0_i32_0 : i32, i32
  }
  func.func @transform_6(%arg0: i32) -> (i32, i32) {
    %c0_i32 = arith.constant 0 : i32
    %c0_i32_0 = arith.constant 0 : i32
    %c0_i32_1 = arith.constant 0 : i32
    return %c0_i32, %c0_i32_0 : i32, i32
  }
  func.func @transform_7(%arg0: i32) -> (i32, i32) {
    %c0_i32 = arith.constant 0 : i32
    %c0_i32_0 = arith.constant 0 : i32
    %c0_i32_1 = arith.constant 0 : i32
    return %c0_i32, %c0_i32_0 : i32, i32
  }
  func.func @transform_8(%arg0: i32) -> (i32, i32) {
    %c0_i32 = arith.constant 0 : i32
    %c0_i32_0 = arith.constant 0 : i32
    return %arg0, %c0_i32 : i32, i32
  }
  func.func @transform_9(%arg0: i32) -> (i32, i32) {
    %c0_i32 = arith.constant 0 : i32
    %c0_i32_0 = arith.constant 0 : i32
    return %arg0, %c0_i32 : i32, i32
  }
}

module attributes {stable_mosaic.version = 11 : i64} {
  func.func @kernel(%arg0: i32, %arg1: memref<128x128xbf16, #tpu.memory_space<vmem>>, %arg2: memref<128x128xbf16, #tpu.memory_space<vmem>>, %arg3: memref<128x128xbf16, #tpu.memory_space<vmem>>, %arg4: memref<128x128xbf16, #tpu.memory_space<vmem>>, %arg5: memref<128x128xbf16, #tpu.memory_space<vmem>>, %arg6: memref<128x128xbf16, #tpu.memory_space<vmem>>, %arg7: memref<128x128xbf16, #tpu.memory_space<vmem>>, %arg8: memref<6x128xf32, #tpu.memory_space<vmem>>, %arg9: memref<128x128xf32, #tpu.memory_space<vmem>>, %arg10: memref<128x128xf32, #tpu.memory_space<vmem>>) attributes {dimension_semantics = [#tpu.dimension_semantics<parallel>], iteration_bounds = array<i64: 3>, scalar_prefetch = 0 : i64, scratch_operands = 0 : i64, tpu.core_type = #tpu.core_type<tc>, window_params = [{transform_indices = @transform_0, window_bounds = array<i64: 128, 128>}, {pipeline_mode = #tpu.pipeline_mode<synchronous>, transform_indices = @transform_1, window_bounds = array<i64: 128, 128>}, {pipeline_mode = #tpu.pipeline_mode<synchronous>, transform_indices = @transform_2, window_bounds = array<i64: 128, 128>}, {pipeline_mode = #tpu.pipeline_mode<synchronous>, transform_indices = @transform_3, window_bounds = array<i64: 128, 128>}, {pipeline_mode = #tpu.pipeline_mode<synchronous>, transform_indices = @transform_4, window_bounds = array<i64: 128, 128>}, {pipeline_mode = #tpu.pipeline_mode<synchronous>, transform_indices = @transform_5, window_bounds = array<i64: 128, 128>}, {pipeline_mode = #tpu.pipeline_mode<synchronous>, transform_indices = @transform_6, window_bounds = array<i64: 128, 128>}, {pipeline_mode = #tpu.pipeline_mode<synchronous>, transform_indices = @transform_7, window_bounds = array<i64: 6, 128>}, {transform_indices = @transform_8, window_bounds = array<i64: 128, 128>}, {transform_indices = @transform_9, window_bounds = array<i64: 128, 128>}]} {
    %c0 = arith.constant 0 : index
    %c0_0 = arith.constant 0 : index
    %0 = vector.load %arg8[%c0, %c0_0] : memref<6x128xf32, #tpu.memory_space<vmem>>, vector<6x128xf32>
    %c0_1 = arith.constant 0 : index
    %c0_2 = arith.constant 0 : index
    %1 = vector.load %arg1[%c0_1, %c0_2] : memref<128x128xbf16, #tpu.memory_space<vmem>>, vector<128x128xbf16>
    %2 = vector.extract_strided_slice %0 {offsets = [0, 0], sizes = [1, 128], strides = [1, 1]} : vector<6x128xf32> to vector<1x128xf32>
    %c0_3 = arith.constant 0 : index
    %c0_4 = arith.constant 0 : index
    %3 = vector.load %arg2[%c0_3, %c0_4] : memref<128x128xbf16, #tpu.memory_space<vmem>>, vector<128x128xbf16>
    %cst = arith.constant dense<0.000000e+00> : vector<128x128xf32>
    %4 = tpu.matmul %1, %3, %cst {dimension_numbers = #tpu.dot_dimension_numbers<[1], [0], [0], [1], [0, 0, 1, 1], [], []>} : vector<128x128xbf16>, vector<128x128xbf16>, vector<128x128xf32> -> vector<128x128xf32>
    %5 = vector.broadcast %2 : vector<1x128xf32> to vector<128x128xf32>
    %6 = arith.addf %4, %5 : vector<128x128xf32>
    %cst_5 = arith.constant 0.000000e+00 : f32
    %7 = vector.broadcast %cst_5 : f32 to vector<128x128xf32>
    %8 = arith.maximumf %6, %7 : vector<128x128xf32>
    %9 = arith.truncf %8 : vector<128x128xf32> to vector<128x128xbf16>
    %10 = vector.extract_strided_slice %0 {offsets = [1, 0], sizes = [1, 128], strides = [1, 1]} : vector<6x128xf32> to vector<1x128xf32>
    %c0_6 = arith.constant 0 : index
    %c0_7 = arith.constant 0 : index
    %11 = vector.load %arg3[%c0_6, %c0_7] : memref<128x128xbf16, #tpu.memory_space<vmem>>, vector<128x128xbf16>
    %cst_8 = arith.constant dense<0.000000e+00> : vector<128x128xf32>
    %12 = tpu.matmul %9, %11, %cst_8 {dimension_numbers = #tpu.dot_dimension_numbers<[1], [0], [0], [1], [0, 0, 1, 1], [], []>} : vector<128x128xbf16>, vector<128x128xbf16>, vector<128x128xf32> -> vector<128x128xf32>
    %13 = vector.broadcast %10 : vector<1x128xf32> to vector<128x128xf32>
    %14 = arith.addf %12, %13 : vector<128x128xf32>
    %cst_9 = arith.constant 0.000000e+00 : f32
    %15 = vector.broadcast %cst_9 : f32 to vector<128x128xf32>
    %16 = arith.maximumf %14, %15 : vector<128x128xf32>
    %17 = arith.truncf %16 : vector<128x128xf32> to vector<128x128xbf16>
    %18 = vector.extract_strided_slice %0 {offsets = [2, 0], sizes = [1, 128], strides = [1, 1]} : vector<6x128xf32> to vector<1x128xf32>
    %c0_10 = arith.constant 0 : index
    %c0_11 = arith.constant 0 : index
    %19 = vector.load %arg4[%c0_10, %c0_11] : memref<128x128xbf16, #tpu.memory_space<vmem>>, vector<128x128xbf16>
    %cst_12 = arith.constant dense<0.000000e+00> : vector<128x128xf32>
    %20 = tpu.matmul %17, %19, %cst_12 {dimension_numbers = #tpu.dot_dimension_numbers<[1], [0], [0], [1], [0, 0, 1, 1], [], []>} : vector<128x128xbf16>, vector<128x128xbf16>, vector<128x128xf32> -> vector<128x128xf32>
    %21 = vector.broadcast %18 : vector<1x128xf32> to vector<128x128xf32>
    %22 = arith.addf %20, %21 : vector<128x128xf32>
    %c0_13 = arith.constant 0 : index
    %c0_14 = arith.constant 0 : index
    %23 = vector.load %arg9[%c0_13, %c0_14] : memref<128x128xf32, #tpu.memory_space<vmem>>, vector<128x128xf32>
    tpu.vector_store %arg9[%c0_13, %c0_14], %22 {strides = array<i32>} : memref<128x128xf32, #tpu.memory_space<vmem>>, vector<128x128xf32>,
    %24 = arith.truncf %22 : vector<128x128xf32> to vector<128x128xbf16>
    %25 = vector.extract_strided_slice %0 {offsets = [3, 0], sizes = [1, 128], strides = [1, 1]} : vector<6x128xf32> to vector<1x128xf32>
    %c0_15 = arith.constant 0 : index
    %c0_16 = arith.constant 0 : index
    %26 = vector.load %arg5[%c0_15, %c0_16] : memref<128x128xbf16, #tpu.memory_space<vmem>>, vector<128x128xbf16>
    %cst_17 = arith.constant dense<0.000000e+00> : vector<128x128xf32>
    %27 = tpu.matmul %24, %26, %cst_17 {dimension_numbers = #tpu.dot_dimension_numbers<[1], [0], [0], [1], [0, 0, 1, 1], [], []>} : vector<128x128xbf16>, vector<128x128xbf16>, vector<128x128xf32> -> vector<128x128xf32>
    %28 = vector.broadcast %25 : vector<1x128xf32> to vector<128x128xf32>
    %29 = arith.addf %27, %28 : vector<128x128xf32>
    %cst_18 = arith.constant 0.000000e+00 : f32
    %30 = vector.broadcast %cst_18 : f32 to vector<128x128xf32>
    %31 = arith.maximumf %29, %30 : vector<128x128xf32>
    %32 = arith.truncf %31 : vector<128x128xf32> to vector<128x128xbf16>
    %33 = vector.extract_strided_slice %0 {offsets = [4, 0], sizes = [1, 128], strides = [1, 1]} : vector<6x128xf32> to vector<1x128xf32>
    %c0_19 = arith.constant 0 : index
    %c0_20 = arith.constant 0 : index
    %34 = vector.load %arg6[%c0_19, %c0_20] : memref<128x128xbf16, #tpu.memory_space<vmem>>, vector<128x128xbf16>
    %cst_21 = arith.constant dense<0.000000e+00> : vector<128x128xf32>
    %35 = tpu.matmul %32, %34, %cst_21 {dimension_numbers = #tpu.dot_dimension_numbers<[1], [0], [0], [1], [0, 0, 1, 1], [], []>} : vector<128x128xbf16>, vector<128x128xbf16>, vector<128x128xf32> -> vector<128x128xf32>
    %36 = vector.broadcast %33 : vector<1x128xf32> to vector<128x128xf32>
    %37 = arith.addf %35, %36 : vector<128x128xf32>
    %cst_22 = arith.constant 0.000000e+00 : f32
    %38 = vector.broadcast %cst_22 : f32 to vector<128x128xf32>
    %39 = arith.maximumf %37, %38 : vector<128x128xf32>
    %40 = arith.truncf %39 : vector<128x128xf32> to vector<128x128xbf16>
    %41 = vector.extract_strided_slice %0 {offsets = [5, 0], sizes = [1, 128], strides = [1, 1]} : vector<6x128xf32> to vector<1x128xf32>
    %c0_23 = arith.constant 0 : index
    %c0_24 = arith.constant 0 : index
    %42 = vector.load %arg7[%c0_23, %c0_24] : memref<128x128xbf16, #tpu.memory_space<vmem>>, vector<128x128xbf16>
    %cst_25 = arith.constant dense<0.000000e+00> : vector<128x128xf32>
    %43 = tpu.matmul %40, %42, %cst_25 {dimension_numbers = #tpu.dot_dimension_numbers<[1], [0], [0], [1], [0, 0, 1, 1], [], []>} : vector<128x128xbf16>, vector<128x128xbf16>, vector<128x128xf32> -> vector<128x128xf32>
    %44 = vector.broadcast %41 : vector<1x128xf32> to vector<128x128xf32>
    %45 = arith.addf %43, %44 : vector<128x128xf32>
    %c0_26 = arith.constant 0 : index
    %c0_27 = arith.constant 0 : index
    %46 = vector.load %arg10[%c0_26, %c0_27] : memref<128x128xf32, #tpu.memory_space<vmem>>, vector<128x128xf32>
    tpu.vector_store %arg10[%c0_26, %c0_27], %45 {strides = array<i32>} : memref<128x128xf32, #tpu.memory_space<vmem>>, vector<128x128xf32>,
    return
  }
  func.func @transform_0(%arg0: i32) -> (i32, i32) {
    %c0_i32 = arith.constant 0 : i32
    %c0_i32_0 = arith.constant 0 : i32
    return %arg0, %c0_i32 : i32, i32
  }
  func.func @transform_1(%arg0: i32) -> (i32, i32) {
    %c0_i32 = arith.constant 0 : i32
    %c0_i32_0 = arith.constant 0 : i32
    %c0_i32_1 = arith.constant 0 : i32
    return %c0_i32, %c0_i32_0 : i32, i32
  }
  func.func @transform_2(%arg0: i32) -> (i32, i32) {
    %c0_i32 = arith.constant 0 : i32
    %c0_i32_0 = arith.constant 0 : i32
    %c0_i32_1 = arith.constant 0 : i32
    return %c0_i32, %c0_i32_0 : i32, i32
  }
  func.func @transform_3(%arg0: i32) -> (i32, i32) {
    %c0_i32 = arith.constant 0 : i32
    %c0_i32_0 = arith.constant 0 : i32
    %c0_i32_1 = arith.constant 0 : i32
    return %c0_i32, %c0_i32_0 : i32, i32
  }
  func.func @transform_4(%arg0: i32) -> (i32, i32) {
    %c0_i32 = arith.constant 0 : i32
    %c0_i32_0 = arith.constant 0 : i32
    %c0_i32_1 = arith.constant 0 : i32
    return %c0_i32, %c0_i32_0 : i32, i32
  }
  func.func @transform_5(%arg0: i32) -> (i32, i32) {
    %c0_i32 = arith.constant 0 : i32
    %c0_i32_0 = arith.constant 0 : i32
    %c0_i32_1 = arith.constant 0 : i32
    return %c0_i32, %c0_i32_0 : i32, i32
  }
  func.func @transform_6(%arg0: i32) -> (i32, i32) {
    %c0_i32 = arith.constant 0 : i32
    %c0_i32_0 = arith.constant 0 : i32
    %c0_i32_1 = arith.constant 0 : i32
    return %c0_i32, %c0_i32_0 : i32, i32
  }
  func.func @transform_7(%arg0: i32) -> (i32, i32) {
    %c0_i32 = arith.constant 0 : i32
    %c0_i32_0 = arith.constant 0 : i32
    %c0_i32_1 = arith.constant 0 : i32
    return %c0_i32, %c0_i32_0 : i32, i32
  }
  func.func @transform_8(%arg0: i32) -> (i32, i32) {
    %c0_i32 = arith.constant 0 : i32
    %c0_i32_0 = arith.constant 0 : i32
    return %arg0, %c0_i32 : i32, i32
  }
  func.func @transform_9(%arg0: i32) -> (i32, i32) {
    %c0_i32 = arith.constant 0 : i32
    %c0_i32_0 = arith.constant 0 : i32
    return %arg0, %c0_i32 : i32, i32
  }
}

</mosaic_0001>

<llo_original>
// kernel: tpu_custom_call.1
$region0: #{tpu_custom_call.1}
  #allocation0 [shape = 'u32[]', space=smem, size = 0x4, offset = 0x4, fixed_abs, tag = 'smem constant byte address 0x4 - core index']
  #allocation1 [shape = 'u32[144,128]{1,0:T(1,128)}', space=vmem, size = 0x12000, scoped, tag = 'internal scratch']
  %s0 = inlined_call_operand.hbm [shape: bf16[384,128], index: 0, kind: input, shape index: {}]
  %s1 = inlined_call_operand.hbm [shape: bf16[128,128], index: 1, kind: input, shape index: {}]
  %s2 = inlined_call_operand.hbm [shape: bf16[128,128], index: 2, kind: input, shape index: {}]
  %s3 = inlined_call_operand.hbm [shape: bf16[128,128], index: 3, kind: input, shape index: {}]
  %s4 = inlined_call_operand.hbm [shape: bf16[128,128], index: 4, kind: input, shape index: {}]
  %s5 = inlined_call_operand.hbm [shape: bf16[128,128], index: 5, kind: input, shape index: {}]
  %s6 = inlined_call_operand.hbm [shape: bf16[128,128], index: 6, kind: input, shape index: {}]
  %s7 = inlined_call_operand.vmem [shape: f32[6,128], index: 7, kind: input, shape index: {}]
  %s8 = inlined_call_operand.hbm [shape: f32[384,128], index: 8, kind: output, shape index: {0}]
  %s9 = inlined_call_operand.hbm [shape: f32[384,128], index: 9, kind: output, shape index: {1}]
  %10 = xla_tuple %s8, %s9
  %s11 = sld [smem:[#allocation0]]
  $region101: #{tpu_custom_call.1} parent=0
    _
  %s13 = ssub.s32 1, %s11
  %s14 = scalar_select 0, %s13, %s11
  $region1: #{tpu_custom_call.1} parent=0
    #allocation2 [shape = 'u8[65536]{0}', space=vmem, size = 0x10000, scoped, tag = 'input window, operand 0']
    #allocation3 [shape = 's32[2]{0}', space=sflag, size = 0x8, scoped, tag = 'scoped memory for tpu_custom_call.1']
    #allocation4 [shape = 's32[2]{0}', space=sflag, size = 0x8, scoped, tag = 'scoped memory for tpu_custom_call.1']
    #allocation5 [shape = 'u8[32768]{0}', space=vmem, size = 0x8000, scoped, tag = 'input window, operand 1, single buffered']
    #allocation6 [shape = 's32[1]{0}', space=sflag, size = 0x4, scoped, tag = 'scoped memory for tpu_custom_call.1']
    #allocation7 [shape = 'u8[32768]{0}', space=vmem, size = 0x8000, scoped, tag = 'input window, operand 2, single buffered']
    #allocation8 [shape = 'u8[32768]{0}', space=vmem, size = 0x8000, scoped, tag = 'input window, operand 3, single buffered']
    #allocation9 [shape = 's32[1]{0}', space=sflag, size = 0x4, scoped, tag = 'scoped memory for tpu_custom_call.1']
    #allocation10 [shape = 'u8[32768]{0}', space=vmem, size = 0x8000, scoped, tag = 'input window, operand 4, single buffered']
    #allocation11 [shape = 'u8[32768]{0}', space=vmem, size = 0x8000, scoped, tag = 'input window, operand 5, single buffered']
    #allocation12 [shape = 's32[1]{0}', space=sflag, size = 0x4, scoped, tag = 'scoped memory for tpu_custom_call.1']
    #allocation13 [shape = 'u8[32768]{0}', space=vmem, size = 0x8000, scoped, tag = 'input window, operand 6, single buffered']
    #allocation14 [shape = 'u8[131072]{0}', space=vmem, size = 0x20000, scoped, tag = 'output window, operand 0']
    #allocation15 [shape = 'u8[131072]{0}', space=vmem, size = 0x20000, scoped, tag = 'output window, operand 1']
    #allocation16 [shape = 's32[2]{0}', space=sflag, size = 0x8, scoped, tag = 'scoped memory for tpu_custom_call.1']
    %15 = vsyncpa [#allocation3], 0
    %s16 = scalar_lea.sflag [#allocation3], 1
    %17 = vsyncpa %s16, 0
    %18 = vsyncpa [#allocation6], 0
    %19 = vsyncpa [#allocation9], 0
    %20 = vsyncpa [#allocation12], 0
    %21 = vsyncpa [#allocation4], 0
    %s22 = scalar_lea.sflag [#allocation4], 1
    %23 = vsyncpa %s22, 0
    %24 = vsyncpa [#allocation16], 0
    %s25 = scalar_lea.sflag [#allocation16], 1
    %26 = vsyncpa %s25, 0
    loop: start=0, step=1, limit=5
    $region2: #{tpu_custom_call.1} parent=1 // loop_pre_header
      _
    $region3: #{tpu_custom_call.1} parent=1 // loop_header
      %s28 = sphi 0, %s32
      %p29 = scmp.ge.s32.totalorder %s28, 5
      %s38 = sphi 0, %s40
      %s41 = sphi 0, %s38
      %s42 = sphi 0, %s41
      %s58 = sphi 0, %s42
      %s62 = sphi 0, %s62
      %s64 = sphi 0, %s62
      %s65 = sphi 0, %s64
      %s79 = sphi 0, %s65
      %s83 = sphi 0, %s83
      %s85 = sphi 0, %s83
      %s86 = sphi 0, %s85
      %s100 = sphi 0, %s86
      %s104 = sphi 0, %s104
      %s106 = sphi 0, %s104
      %s107 = sphi 0, %s106
      %s121 = sphi 0, %s107
      %s125 = sphi 0, %s125
      %s127 = sphi 0, %s125
      %s128 = sphi 0, %s127
      %s142 = sphi 0, %s128
      %s146 = sphi 0, %s146
      %s148 = sphi 0, %s146
      %s149 = sphi 0, %s148
      %s163 = sphi 0, %s149
      %s167 = sphi 0, %s167
      %s169 = sphi 0, %s167
      %s170 = sphi 0, %s169
      %s184 = sphi 0, %s170
      %s188 = sphi 0, %s188
      %s190 = sphi 0, %s188
      %s191 = sphi 0, %s190
      %s205 = sphi 0, %s191
      %s211 = sphi 0, %s213
      %s214 = sphi 0, %s211
      %s215 = sphi 0, %s214
      %s231 = sphi 0, %s215
      %s237 = sphi 0, %s239
      %s240 = sphi 0, %s237
      %s241 = sphi 0, %s240
      %s257 = sphi 0, %s241
    $region4: #{tpu_custom_call.1} parent=1 // loop_header_branch
      %31 = sbr.rel (%p29) target = $region8
    $region5: #{tpu_custom_call.1} parent=1 // loop_body
      %s33 = ssub.s32 %s28, 1
      %s34 = ssub.s32 %s28, 2
      %s35 = sadd.s32 %s28, 1
      %s36 = ssub.s32 %s28, %s35
      %p37 = scmp.eq.s32.totalorder %s36, 0
      %s39 = sadd.s32 %s38, 1
      %s40 = scalar_select %p37, %s38, %s39
      %p43 = pneg %p37
      %p44 = scmp.eq.s32.totalorder %s28, 2
      %p45 = por %p43, %p44
      %p46 = scmp.ne.s32.totalorder %s38, %s41
      %p47 = scmp.eq.s32.totalorder %s28, 0
      %p48 = por %p46, %p47
      %p49 = scmp.ne.s32.totalorder %s38, %s41
      %p50 = scmp.eq.s32.totalorder %s33, 2
      %p51 = por %p49, %p50
      %p52 = scmp.ne.s32.totalorder %s41, %s42
      %p53 = scmp.eq.s32.totalorder %s33, 0
      %p54 = por %p52, %p53
      %p55 = scmp.ne.s32.totalorder %s41, %s42
      %p56 = scmp.eq.s32.totalorder %s34, 2
      %p57 = por %p55, %p56
      %p59 = scmp.ne.s32.totalorder %s42, %s58
      %p60 = scmp.eq.s32.totalorder %s34, 0
      %p61 = por %p59, %p60
      %s63 = sadd.s32 %s62, 1
      %p66 = scmp.eq.s32.totalorder %s28, 2
      %p67 = scmp.ne.s32.totalorder %s62, %s64
      %p68 = scmp.eq.s32.totalorder %s28, 0
      %p69 = por %p67, %p68
      %p70 = scmp.ne.s32.totalorder %s62, %s64
      %p71 = scmp.eq.s32.totalorder %s33, 2
      %p72 = por %p70, %p71
      %p73 = scmp.ne.s32.totalorder %s64, %s65
      %p74 = scmp.eq.s32.totalorder %s33, 0
      %p75 = por %p73, %p74
      %p76 = scmp.ne.s32.totalorder %s64, %s65
      %p77 = scmp.eq.s32.totalorder %s34, 2
      %p78 = por %p76, %p77
      %p80 = scmp.ne.s32.totalorder %s65, %s79
      %p81 = scmp.eq.s32.totalorder %s34, 0
      %p82 = por %p80, %p81
      %s84 = sadd.s32 %s83, 1
      %p87 = scmp.eq.s32.totalorder %s28, 2
      %p88 = scmp.ne.s32.totalorder %s83, %s85
      %p89 = scmp.eq.s32.totalorder %s28, 0
      %p90 = por %p88, %p89
      %p91 = scmp.ne.s32.totalorder %s83, %s85
      %p92 = scmp.eq.s32.totalorder %s33, 2
      %p93 = por %p91, %p92
      %p94 = scmp.ne.s32.totalorder %s85, %s86
      %p95 = scmp.eq.s32.totalorder %s33, 0
      %p96 = por %p94, %p95
      %p97 = scmp.ne.s32.totalorder %s85, %s86
      %p98 = scmp.eq.s32.totalorder %s34, 2
      %p99 = por %p97, %p98
      %p101 = scmp.ne.s32.totalorder %s86, %s100
      %p102 = scmp.eq.s32.totalorder %s34, 0
      %p103 = por %p101, %p102
      %s105 = sadd.s32 %s104, 1
      %p108 = scmp.eq.s32.totalorder %s28, 2
      %p109 = scmp.ne.s32.totalorder %s104, %s106
      %p110 = scmp.eq.s32.totalorder %s28, 0
      %p111 = por %p109, %p110
      %p112 = scmp.ne.s32.totalorder %s104, %s106
      %p113 = scmp.eq.s32.totalorder %s33, 2
      %p114 = por %p112, %p113
      %p115 = scmp.ne.s32.totalorder %s106, %s107
      %p116 = scmp.eq.s32.totalorder %s33, 0
      %p117 = por %p115, %p116
      %p118 = scmp.ne.s32.totalorder %s106, %s107
      %p119 = scmp.eq.s32.totalorder %s34, 2
      %p120 = por %p118, %p119
      %p122 = scmp.ne.s32.totalorder %s107, %s121
      %p123 = scmp.eq.s32.totalorder %s34, 0
      %p124 = por %p122, %p123
      %s126 = sadd.s32 %s125, 1
      %p129 = scmp.eq.s32.totalorder %s28, 2
      %p130 = scmp.ne.s32.totalorder %s125, %s127
      %p131 = scmp.eq.s32.totalorder %s28, 0
      %p132 = por %p130, %p131
      %p133 = scmp.ne.s32.totalorder %s125, %s127
      %p134 = scmp.eq.s32.totalorder %s33, 2
      %p135 = por %p133, %p134
      %p136 = scmp.ne.s32.totalorder %s127, %s128
      %p137 = scmp.eq.s32.totalorder %s33, 0
      %p138 = por %p136, %p137
      %p139 = scmp.ne.s32.totalorder %s127, %s128
      %p140 = scmp.eq.s32.totalorder %s34, 2
      %p141 = por %p139, %p140
      %p143 = scmp.ne.s32.totalorder %s128, %s142
      %p144 = scmp.eq.s32.totalorder %s34, 0
      %p145 = por %p143, %p144
      %s147 = sadd.s32 %s146, 1
      %p150 = scmp.eq.s32.totalorder %s28, 2
      %p151 = scmp.ne.s32.totalorder %s146, %s148
      %p152 = scmp.eq.s32.totalorder %s28, 0
      %p153 = por %p151, %p152
      %p154 = scmp.ne.s32.totalorder %s146, %s148
      %p155 = scmp.eq.s32.totalorder %s33, 2
      %p156 = por %p154, %p155
      %p157 = scmp.ne.s32.totalorder %s148, %s149
      %p158 = scmp.eq.s32.totalorder %s33, 0
      %p159 = por %p157, %p158
      %p160 = scmp.ne.s32.totalorder %s148, %s149
      %p161 = scmp.eq.s32.totalorder %s34, 2
      %p162 = por %p160, %p161
      %p164 = scmp.ne.s32.totalorder %s149, %s163
      %p165 = scmp.eq.s32.totalorder %s34, 0
      %p166 = por %p164, %p165
      %s168 = sadd.s32 %s167, 1
      %p171 = scmp.eq.s32.totalorder %s28, 2
      %p172 = scmp.ne.s32.totalorder %s167, %s169
      %p173 = scmp.eq.s32.totalorder %s28, 0
      %p174 = por %p172, %p173
      %p175 = scmp.ne.s32.totalorder %s167, %s169
      %p176 = scmp.eq.s32.totalorder %s33, 2
      %p177 = por %p175, %p176
      %p178 = scmp.ne.s32.totalorder %s169, %s170
      %p179 = scmp.eq.s32.totalorder %s33, 0
      %p180 = por %p178, %p179
      %p181 = scmp.ne.s32.totalorder %s169, %s170
      %p182 = scmp.eq.s32.totalorder %s34, 2
      %p183 = por %p181, %p182
      %p185 = scmp.ne.s32.totalorder %s170, %s184
      %p186 = scmp.eq.s32.totalorder %s34, 0
      %p187 = por %p185, %p186
      %s189 = sadd.s32 %s188, 1
      %p192 = scmp.eq.s32.totalorder %s28, 2
      %p193 = scmp.ne.s32.totalorder %s188, %s190
      %p194 = scmp.eq.s32.totalorder %s28, 0
      %p195 = por %p193, %p194
      %p196 = scmp.ne.s32.totalorder %s188, %s190
      %p197 = scmp.eq.s32.totalorder %s33, 2
      %p198 = por %p196, %p197
      %p199 = scmp.ne.s32.totalorder %s190, %s191
      %p200 = scmp.eq.s32.totalorder %s33, 0
      %p201 = por %p199, %p200
      %p202 = scmp.ne.s32.totalorder %s190, %s191
      %p203 = scmp.eq.s32.totalorder %s34, 2
      %p204 = por %p202, %p203
      %p206 = scmp.ne.s32.totalorder %s191, %s205
      %p207 = scmp.eq.s32.totalorder %s34, 0
      %p208 = por %p206, %p207
      %s209 = ssub.s32 %s28, %s35
      %p210 = scmp.eq.s32.totalorder %s209, 0
      %s212 = sadd.s32 %s211, 1
      %s213 = scalar_select %p210, %s211, %s212
      %p216 = pneg %p210
      %p217 = scmp.eq.s32.totalorder %s28, 2
      %p218 = por %p216, %p217
      %p219 = scmp.ne.s32.totalorder %s211, %s214
      %p220 = scmp.eq.s32.totalorder %s28, 0
      %p221 = por %p219, %p220
      %p222 = scmp.ne.s32.totalorder %s211, %s214
      %p223 = scmp.eq.s32.totalorder %s33, 2
      %p224 = por %p222, %p223
      %p225 = scmp.ne.s32.totalorder %s214, %s215
      %p226 = scmp.eq.s32.totalorder %s33, 0
      %p227 = por %p225, %p226
      %p228 = scmp.ne.s32.totalorder %s214, %s215
      %p229 = scmp.eq.s32.totalorder %s34, 2
      %p230 = por %p228, %p229
      %p232 = scmp.ne.s32.totalorder %s215, %s231
      %p233 = scmp.eq.s32.totalorder %s34, 0
      %p234 = por %p232, %p233
      %s235 = ssub.s32 %s28, %s35
      %p236 = scmp.eq.s32.totalorder %s235, 0
      %s238 = sadd.s32 %s237, 1
      %s239 = scalar_select %p236, %s237, %s238
      %p242 = pneg %p236
      %p243 = scmp.eq.s32.totalorder %s28, 2
      %p244 = por %p242, %p243
      %p245 = scmp.ne.s32.totalorder %s237, %s240
      %p246 = scmp.eq.s32.totalorder %s28, 0
      %p247 = por %p245, %p246
      %p248 = scmp.ne.s32.totalorder %s237, %s240
      %p249 = scmp.eq.s32.totalorder %s33, 2
      %p250 = por %p248, %p249
      %p251 = scmp.ne.s32.totalorder %s240, %s241
      %p252 = scmp.eq.s32.totalorder %s33, 0
      %p253 = por %p251, %p252
      %p254 = scmp.ne.s32.totalorder %s240, %s241
      %p255 = scmp.eq.s32.totalorder %s34, 2
      %p256 = por %p254, %p255
      %p258 = scmp.ne.s32.totalorder %s241, %s257
      %p259 = scmp.eq.s32.totalorder %s34, 0
      %p260 = por %p258, %p259
      %p261 = scmp.le.s32.totalorder 1, %s28
      %p262 = scmp.lt.s32.totalorder %s28, 4
      %p263 = pnand %p261, %p262
      %p264 = pneg %p263
      // Predicated region
      $region9: #{tpu_custom_call.1} parent=5 // pred_check
        _
      $region10: #{tpu_custom_call.1} parent=5 // pred_check_branch
        %266 = sbr.rel (%p263) target = $region12
      $region11: #{tpu_custom_call.1} parent=5 // pred_region
        %s267 = ssub.s32 %s28, 1
        // Predicated region
        $region13: #{tpu_custom_call.1} parent=11 // pred_check
          %p268 = pneg %p75
        $region14: #{tpu_custom_call.1} parent=11 // pred_check_branch
          %270 = sbr.rel (%p268) target = $region16
        $region15: #{tpu_custom_call.1} parent=11 // pred_region
          %s272 = ssub.s32 1024, 1024
          %273 = vsyncadd [#allocation6], %s272
          %s274 = sshll.u32 [#allocation5], 4
          %s275 = int_to_ptr.vmem [resolvable:$true] %s274
          %280 = dma.hbm_to_vmem [thread:$0]  %s1, 1024, %s275, [#allocation6], 64, 64, 4
        $region16: #{tpu_custom_call.1} parent=11 // pred_fallthru
          _
        // Predicated region
        $region17: #{tpu_custom_call.1} parent=11 // pred_check
          %p281 = pneg %p96
        $region18: #{tpu_custom_call.1} parent=11 // pred_check_branch
          %283 = sbr.rel (%p281) target = $region20
        $region19: #{tpu_custom_call.1} parent=11 // pred_region
          %s285 = ssub.s32 1024, 1024
          %286 = vsyncadd [#allocation6], %s285
          %s287 = sshll.u32 [#allocation7], 4
          %s288 = int_to_ptr.vmem [resolvable:$true] %s287
          %293 = dma.hbm_to_vmem [thread:$0]  %s2, 1024, %s288, [#allocation6], 64, 64, 4
        $region20: #{tpu_custom_call.1} parent=11 // pred_fallthru
          _
        // Predicated region
        $region21: #{tpu_custom_call.1} parent=11 // pred_check
          %p294 = pneg %p117
        $region22: #{tpu_custom_call.1} parent=11 // pred_check_branch
          %296 = sbr.rel (%p294) target = $region24
        $region23: #{tpu_custom_call.1} parent=11 // pred_region
          %s298 = ssub.s32 1024, 1024
          %299 = vsyncadd [#allocation9], %s298
          %s300 = sshll.u32 [#allocation8], 4
          %s301 = int_to_ptr.vmem [resolvable:$true] %s300
          %306 = dma.hbm_to_vmem [thread:$0]  %s3, 1024, %s301, [#allocation9], 64, 64, 4
        $region24: #{tpu_custom_call.1} parent=11 // pred_fallthru
          _
        // Predicated region
        $region25: #{tpu_custom_call.1} parent=11 // pred_check
          %p307 = pneg %p138
        $region26: #{tpu_custom_call.1} parent=11 // pred_check_branch
          %309 = sbr.rel (%p307) target = $region28
        $region27: #{tpu_custom_call.1} parent=11 // pred_region
          %s311 = ssub.s32 1024, 1024
          %312 = vsyncadd [#allocation9], %s311
          %s313 = sshll.u32 [#allocation10], 4
          %s314 = int_to_ptr.vmem [resolvable:$true] %s313
          %319 = dma.hbm_to_vmem [thread:$0]  %s4, 1024, %s314, [#allocation9], 64, 64, 4
        $region28: #{tpu_custom_call.1} parent=11 // pred_fallthru
          _
        // Predicated region
        $region29: #{tpu_custom_call.1} parent=11 // pred_check
          %p320 = pneg %p159
        $region30: #{tpu_custom_call.1} parent=11 // pred_check_branch
          %322 = sbr.rel (%p320) target = $region32
        $region31: #{tpu_custom_call.1} parent=11 // pred_region
          %s324 = ssub.s32 1024, 1024
          %325 = vsyncadd [#allocation12], %s324
          %s326 = sshll.u32 [#allocation11], 4
          %s327 = int_to_ptr.vmem [resolvable:$true] %s326
          %332 = dma.hbm_to_vmem [thread:$0]  %s5, 1024, %s327, [#allocation12], 64, 64, 4
        $region32: #{tpu_custom_call.1} parent=11 // pred_fallthru
          _
        // Predicated region
        $region33: #{tpu_custom_call.1} parent=11 // pred_check
          %p333 = pneg %p180
        $region34: #{tpu_custom_call.1} parent=11 // pred_check_branch
          %335 = sbr.rel (%p333) target = $region36
        $region35: #{tpu_custom_call.1} parent=11 // pred_region
          %s337 = ssub.s32 1024, 1024
          %338 = vsyncadd [#allocation12], %s337
          %s339 = sshll.u32 [#allocation13], 4
          %s340 = int_to_ptr.vmem [resolvable:$true] %s339
          %345 = dma.hbm_to_vmem [thread:$0]  %s6, 1024, %s340, [#allocation12], 64, 64, 4
        $region36: #{tpu_custom_call.1} parent=11 // pred_fallthru
          _
        // Predicated region
        $region37: #{tpu_custom_call.1} parent=11 // pred_check
          %p346 = pneg %p201
        $region38: #{tpu_custom_call.1} parent=11 // pred_check_branch
          %348 = sbr.rel (%p346) target = $region40
        $region39: #{tpu_custom_call.1} parent=11 // pred_region
          _
        $region40: #{tpu_custom_call.1} parent=11 // pred_fallthru
          _
      $region12: #{tpu_custom_call.1} parent=5 // pred_fallthru
        _
      %p349 = scmp.lt.s32.totalorder %s28, 3
      // Predicated region
      $region41: #{tpu_custom_call.1} parent=5 // pred_check
        %p350 = pneg %p349
      $region42: #{tpu_custom_call.1} parent=5 // pred_check_branch
        %352 = sbr.rel (%p350) target = $region44
      $region43: #{tpu_custom_call.1} parent=5 // pred_region
        // Predicated region
        $region45: #{tpu_custom_call.1} parent=43 // pred_check
          %p353 = pneg %p48
        $region46: #{tpu_custom_call.1} parent=43 // pred_check_branch
          %355 = sbr.rel (%p353) target = $region48
        $region47: #{tpu_custom_call.1} parent=43 // pred_region
          %s356 = sand.u32 %s38, 1
          %s357 = scalar_lea.sflag [#allocation3], %s356
          %s358 = sand.u32 %s38, 1
          %s359 = smul.addr %s358, 64
          %s360 = scalar_lea.vmem [#allocation2], %s359
          %s361 = smul.u32 16, %s28
          %s363 = ssub.s32 1024, 1024
          %364 = vsyncadd %s357, %s363
          %s365 = smul.addr %s361, 64
          %s366 = scalar_lea.hbm %s0, %s365
          %s367 = sshll.u32 %s360, 4
          %s368 = int_to_ptr.vmem [resolvable:$true] %s367
          %373 = dma.hbm_to_vmem [thread:$0]  %s366, 1024, %s368, %s357, 64, 64, 4
        $region48: #{tpu_custom_call.1} parent=43 // pred_fallthru
          _
      $region44: #{tpu_custom_call.1} parent=5 // pred_fallthru
        _
      %p374 = scmp.le.s32.totalorder 1, %s28
      %p375 = scmp.lt.s32.totalorder %s28, 4
      %p376 = pnand %p374, %p375
      %p377 = pneg %p376
      // Predicated region
      $region49: #{tpu_custom_call.1} parent=5 // pred_check
        _
      $region50: #{tpu_custom_call.1} parent=5 // pred_check_branch
        %379 = sbr.rel (%p376) target = $region52
      $region51: #{tpu_custom_call.1} parent=5 // pred_region
        %s380 = ssub.s32 %s28, 1
        %s381 = sand.u32 %s41, 1
        %s382 = scalar_lea.sflag [#allocation3], %s381
        %s383 = sand.u32 %s41, 1
        %s384 = smul.addr %s383, 64
        %s385 = scalar_lea.vmem [#allocation2], %s384
        // Predicated region
        $region53: #{tpu_custom_call.1} parent=51 // pred_check
          %p386 = pneg %p54
        $region54: #{tpu_custom_call.1} parent=51 // pred_check_branch
          %388 = sbr.rel (%p386) target = $region56
        $region55: #{tpu_custom_call.1} parent=51 // pred_region
          %389 = dma.done %s382, 1024
        $region56: #{tpu_custom_call.1} parent=51 // pred_fallthru
          _
        // Predicated region
        $region57: #{tpu_custom_call.1} parent=51 // pred_check
          %p390 = pneg %p75
        $region58: #{tpu_custom_call.1} parent=51 // pred_check_branch
          %392 = sbr.rel (%p390) target = $region60
        $region59: #{tpu_custom_call.1} parent=51 // pred_region
          %393 = dma.done [#allocation6], 1024
        $region60: #{tpu_custom_call.1} parent=51 // pred_fallthru
          _
        // Predicated region
        $region61: #{tpu_custom_call.1} parent=51 // pred_check
          %p394 = pneg %p96
        $region62: #{tpu_custom_call.1} parent=51 // pred_check_branch
          %396 = sbr.rel (%p394) target = $region64
        $region63: #{tpu_custom_call.1} parent=51 // pred_region
          %397 = dma.done [#allocation6], 1024
        $region64: #{tpu_custom_call.1} parent=51 // pred_fallthru
          _
        // Predicated region
        $region65: #{tpu_custom_call.1} parent=51 // pred_check
          %p398 = pneg %p117
        $region66: #{tpu_custom_call.1} parent=51 // pred_check_branch
          %400 = sbr.rel (%p398) target = $region68
        $region67: #{tpu_custom_call.1} parent=51 // pred_region
          %401 = dma.done [#allocation9], 1024
        $region68: #{tpu_custom_call.1} parent=51 // pred_fallthru
          _
        // Predicated region
        $region69: #{tpu_custom_call.1} parent=51 // pred_check
          %p402 = pneg %p138
        $region70: #{tpu_custom_call.1} parent=51 // pred_check_branch
          %404 = sbr.rel (%p402) target = $region72
        $region71: #{tpu_custom_call.1} parent=51 // pred_region
          %405 = dma.done [#allocation9], 1024
        $region72: #{tpu_custom_call.1} parent=51 // pred_fallthru
          _
        // Predicated region
        $region73: #{tpu_custom_call.1} parent=51 // pred_check
          %p406 = pneg %p159
        $region74: #{tpu_custom_call.1} parent=51 // pred_check_branch
          %408 = sbr.rel (%p406) target = $region76
        $region75: #{tpu_custom_call.1} parent=51 // pred_region
          %409 = dma.done [#allocation12], 1024
        $region76: #{tpu_custom_call.1} parent=51 // pred_fallthru
          _
        // Predicated region
        $region77: #{tpu_custom_call.1} parent=51 // pred_check
          %p410 = pneg %p180
        $region78: #{tpu_custom_call.1} parent=51 // pred_check_branch
          %412 = sbr.rel (%p410) target = $region80
        $region79: #{tpu_custom_call.1} parent=51 // pred_region
          %413 = dma.done [#allocation12], 1024
        $region80: #{tpu_custom_call.1} parent=51 // pred_fallthru
          _
        %s414 = sand.u32 %s41, 1
        %s415 = scalar_lea.sflag [#allocation3], %s414
        %s416 = sand.u32 %s41, 1
        %s417 = smul.addr %s416, 64
        %s418 = scalar_lea.vmem [#allocation2], %s417
        %p419 = pneg %p54
        %p420 = pneg %p51
        %p421 = pneg %p75
        %p422 = pneg %p72
        %p423 = pneg %p96
        %p424 = pneg %p93
        %p425 = pneg %p117
        %p426 = pneg %p114
        %p427 = pneg %p138
        %p428 = pneg %p135
        %p429 = pneg %p159
        %p430 = pneg %p156
        %p431 = pneg %p180
        %p432 = pneg %p177
        %p433 = pneg %p201
        %p434 = pneg %p198
        %p435 = pneg %p227
        %p436 = pneg %p224
        %s437 = sand.u32 %s214, 1
        %s438 = scalar_lea.sflag [#allocation4], %s437
        %s439 = sand.u32 %s214, 1
        %s440 = smul.addr %s439, 128
        %s441 = scalar_lea.vmem [#allocation14], %s440
        %p442 = pneg %p253
        %p443 = pneg %p250
        %s444 = sand.u32 %s240, 1
        %s445 = scalar_lea.sflag [#allocation16], %s444
        %s446 = sand.u32 %s240, 1
        %s447 = smul.addr %s446, 128
        %s448 = scalar_lea.vmem [#allocation15], %s447
        %s449 = smul.u32 16, %s33
        %s450 = smul.u32 16, %s33
        %s451 = smul.u32 16, %s33
        %v453 = vld [vmem:[%s7] sm:$0x3f]
        %v454 = vld [vmem:[%s385] sm:$0xf]
        %v455 = vld [vmem:[%s385 + $0x4] sm:$0xf]
        %v456 = vld [vmem:[%s385 + $0x8] sm:$0xf]
        %v457 = vld [vmem:[%s385 + $0xc] sm:$0xf]
        %v458 = vld [vmem:[%s385 + $0x10] sm:$0xf]
        %v459 = vld [vmem:[%s385 + $0x14] sm:$0xf]
        %v460 = vld [vmem:[%s385 + $0x18] sm:$0xf]
        %v461 = vld [vmem:[%s385 + $0x1c] sm:$0xf]
        %v462 = vld [vmem:[%s385 + $0x20] sm:$0xf]
        %v463 = vld [vmem:[%s385 + $0x24] sm:$0xf]
        %v464 = vld [vmem:[%s385 + $0x28] sm:$0xf]
        %v465 = vld [vmem:[%s385 + $0x2c] sm:$0xf]
        %v466 = vld [vmem:[%s385 + $0x30] sm:$0xf]
        %v467 = vld [vmem:[%s385 + $0x34] sm:$0xf]
        %v468 = vld [vmem:[%s385 + $0x38] sm:$0xf]
        %v469 = vld [vmem:[%s385 + $0x3c] sm:$0xf]
        %v470 = vld [vmem:[#allocation5] sm:$0xf]
        %v471 = vld [vmem:[#allocation5 + $0x4] sm:$0xf]
        %v472 = vld [vmem:[#allocation5 + $0x8] sm:$0xf]
        %v473 = vld [vmem:[#allocation5 + $0xc] sm:$0xf]
        %v474 = vld [vmem:[#allocation5 + $0x10] sm:$0xf]
        %v475 = vld [vmem:[#allocation5 + $0x14] sm:$0xf]
        %v476 = vld [vmem:[#allocation5 + $0x18] sm:$0xf]
        %v477 = vld [vmem:[#allocation5 + $0x1c] sm:$0xf]
        %v478 = vld [vmem:[#allocation5 + $0x20] sm:$0xf]
        %v479 = vld [vmem:[#allocation5 + $0x24] sm:$0xf]
        %v480 = vld [vmem:[#allocation5 + $0x28] sm:$0xf]
        %v481 = vld [vmem:[#allocation5 + $0x2c] sm:$0xf]
        %v482 = vld [vmem:[#allocation5 + $0x30] sm:$0xf]
        %v483 = vld [vmem:[#allocation5 + $0x34] sm:$0xf]
        %v484 = vld [vmem:[#allocation5 + $0x38] sm:$0xf]
        %v485 = vld [vmem:[#allocation5 + $0x3c] sm:$0xf]
        %v486 = vlaneseq
        %v487 = vshrl.u32 %v486, 7
        %v488 = vsub.s32 0, %v487
        %v489 = vrot.slane %v453, %v488
        %v506 = vunpack.c.l.b16 %v454
        %v507 = vunpack.c.l.b16 %v455
        %v508 = vunpack.c.l.b16 %v456
        %v509 = vunpack.c.l.b16 %v457
        %v510 = vunpack.c.l.b16 %v458
        %v511 = vunpack.c.l.b16 %v459
        %v512 = vunpack.c.l.b16 %v460
        %v513 = vunpack.c.l.b16 %v461
        %v514 = vunpack.c.l.b16 %v462
        %v515 = vunpack.c.l.b16 %v463
        %v516 = vunpack.c.l.b16 %v464
        %v517 = vunpack.c.l.b16 %v465
        %v518 = vunpack.c.l.b16 %v466
        %v519 = vunpack.c.l.b16 %v467
        %v520 = vunpack.c.l.b16 %v468
        %v521 = vunpack.c.l.b16 %v469
        %v522 = vpack.c.b16 %v507, %v506
        %v523 = vpack.c.b16 %v509, %v508
        %v524 = vpack.c.b16 %v511, %v510
        %v525 = vpack.c.b16 %v513, %v512
        %v526 = vpack.c.b16 %v515, %v514
        %v527 = vpack.c.b16 %v517, %v516
        %v528 = vpack.c.b16 %v519, %v518
        %v529 = vpack.c.b16 %v521, %v520
        %v554 = vunpack.c.l.b16 %v470
        %v555 = vunpack.c.l.b16 %v471
        %v556 = vunpack.c.l.b16 %v472
        %v557 = vunpack.c.l.b16 %v473
        %v558 = vunpack.c.l.b16 %v474
        %v559 = vunpack.c.l.b16 %v475
        %v560 = vunpack.c.l.b16 %v476
        %v561 = vunpack.c.l.b16 %v477
        %v562 = vunpack.c.l.b16 %v478
        %v563 = vunpack.c.l.b16 %v479
        %v564 = vunpack.c.l.b16 %v480
        %v565 = vunpack.c.l.b16 %v481
        %v566 = vunpack.c.l.b16 %v482
        %v567 = vunpack.c.l.b16 %v483
        %v568 = vunpack.c.l.b16 %v484
        %v569 = vunpack.c.l.b16 %v485
        %v570 = vpack.c.b16 %v555, %v554
        %v571 = vpack.c.b16 %v557, %v556
        %v572 = vpack.c.b16 %v559, %v558
        %v573 = vpack.c.b16 %v561, %v560
        %v574 = vpack.c.b16 %v563, %v562
        %v575 = vpack.c.b16 %v565, %v564
        %v576 = vpack.c.b16 %v567, %v566
        %v577 = vpack.c.b16 %v569, %v568
        %586 = vmatprep.subr.bf16.mxu0 0
        %587 = vmatpush1.bf16.msra.mxu0 %v570
        %588 = vmatprep.subr.bf16.mxu0 0
        %589 = vmatpush1.bf16.msra.mxu0 %v571
        %590 = vmatprep.subr.bf16.mxu0 0
        %591 = vmatpush1.bf16.msra.mxu0 %v572
        %592 = vmatprep.subr.bf16.mxu0 0
        %593 = vmatpush1.bf16.msra.mxu0 %v573
        %594 = vmatprep.subr.bf16.mxu0 0
        %595 = vmatpush1.bf16.msra.mxu0 %v574
        %596 = vmatprep.subr.bf16.mxu0 0
        %597 = vmatpush1.bf16.msra.mxu0 %v575
        %598 = vmatprep.subr.bf16.mxu0 0
        %599 = vmatpush1.bf16.msra.mxu0 %v576
        %600 = vmatprep.subr.bf16.mxu0 0
        %601 = vmatpush1.bf16.msra.mxu0 %v577
        %602 = vmatprep.subr.bf16.mxu0 0
        %603 = vmatpush1.bf16.msra.mxu0 0
        %604 = vmatprep.subr.bf16.mxu0 0
        %605 = vmatpush1.bf16.msra.mxu0 0
        %606 = vmatprep.subr.bf16.mxu0 0
        %607 = vmatpush1.bf16.msra.mxu0 0
        %608 = vmatprep.subr.bf16.mxu0 0
        %609 = vmatpush1.bf16.msra.mxu0 0
        %610 = vmatprep.subr.bf16.mxu0 0
        %611 = vmatpush1.bf16.msra.mxu0 0
        %612 = vmatprep.subr.bf16.mxu0 0
        %613 = vmatpush1.bf16.msra.mxu0 0
        %614 = vmatprep.subr.bf16.mxu0 0
        %615 = vmatpush1.bf16.msra.mxu0 0
        %616 = vmatprep.subr.bf16.mxu0 0
        %617 = vmatpush1.bf16.msra.mxu0 0
        %618 = vmatprep.mubr.bf16.mxu0 0
        %619 = vmatmul.mubr.bf16.gmra.mrb[0].mxu0 %v522
        %v620 = vpop.f32.mrb[0].mxu0
        %v621 = vadd.f32 %v489, %v620
        %v622 = vpop.f32.mrb[0].mxu0
        %v623 = vpop.f32.mrb[0].mxu0
        %v624 = vadd.f32 %v489, %v623
        %v625 = vpop.f32.mrb[0].mxu0
        %626 = vmatprep.mubr.bf16.mxu0 0
        %627 = vmatmul.mubr.bf16.gmra.mrb[0].mxu0 %v523
        %v628 = vpop.f32.mrb[0].mxu0
        %v629 = vadd.f32 %v489, %v628
        %v630 = vpop.f32.mrb[0].mxu0
        %v631 = vpop.f32.mrb[0].mxu0
        %v632 = vadd.f32 %v489, %v631
        %v633 = vpop.f32.mrb[0].mxu0
        %634 = vmatprep.mubr.bf16.mxu0 0
        %635 = vmatmul.mubr.bf16.gmra.mrb[0].mxu0 %v524
        %v636 = vpop.f32.mrb[0].mxu0
        %v637 = vadd.f32 %v489, %v636
        %v638 = vpop.f32.mrb[0].mxu0
        %v639 = vpop.f32.mrb[0].mxu0
        %v640 = vadd.f32 %v489, %v639
        %v641 = vpop.f32.mrb[0].mxu0
        %642 = vmatprep.mubr.bf16.mxu0 0
        %643 = vmatmul.mubr.bf16.gmra.mrb[0].mxu0 %v525
        %v644 = vpop.f32.mrb[0].mxu0
        %v645 = vadd.f32 %v489, %v644
        %v646 = vpop.f32.mrb[0].mxu0
        %v647 = vpop.f32.mrb[0].mxu0
        %v648 = vadd.f32 %v489, %v647
        %v649 = vpop.f32.mrb[0].mxu0
        %650 = vmatprep.mubr.bf16.mxu0 0
        %651 = vmatmul.mubr.bf16.gmra.mrb[0].mxu0 %v526
        %v652 = vpop.f32.mrb[0].mxu0
        %v653 = vadd.f32 %v489, %v652
        %v654 = vpop.f32.mrb[0].mxu0
        %v655 = vpop.f32.mrb[0].mxu0
        %v656 = vadd.f32 %v489, %v655
        %v657 = vpop.f32.mrb[0].mxu0
        %658 = vmatprep.mubr.bf16.mxu0 0
        %659 = vmatmul.mubr.bf16.gmra.mrb[0].mxu0 %v527
        %v660 = vpop.f32.mrb[0].mxu0
        %v661 = vadd.f32 %v489, %v660
        %v662 = vpop.f32.mrb[0].mxu0
        %v663 = vpop.f32.mrb[0].mxu0
        %v664 = vadd.f32 %v489, %v663
        %v665 = vpop.f32.mrb[0].mxu0
        %666 = vmatprep.mubr.bf16.mxu0 0
        %667 = vmatmul.mubr.bf16.gmra.mrb[0].mxu0 %v528
        %v668 = vpop.f32.mrb[0].mxu0
        %v669 = vadd.f32 %v489, %v668
        %v670 = vpop.f32.mrb[0].mxu0
        %v671 = vpop.f32.mrb[0].mxu0
        %v672 = vadd.f32 %v489, %v671
        %v673 = vpop.f32.mrb[0].mxu0
        %674 = vmatprep.mubr.bf16.mxu0 0
        %675 = vmatmul.mubr.bf16.gmra.mrb[0].mxu0 %v529
        %v676 = vpop.f32.mrb[0].mxu0
        %v677 = vadd.f32 %v489, %v676
        %v678 = vpop.f32.mrb[0].mxu0
        %v679 = vpop.f32.mrb[0].mxu0
        %v680 = vadd.f32 %v489, %v679
        %v681 = vpop.f32.mrb[0].mxu0
        %682 = vdwg.mxu0
        %v683 = vmax.f32 %v621, 0.0
        %v684 = vmax.f32 %v624, 0.0
        %v685 = vmax.f32 %v629, 0.0
        %v686 = vmax.f32 %v632, 0.0
        %v687 = vmax.f32 %v637, 0.0
        %v688 = vmax.f32 %v640, 0.0
        %v689 = vmax.f32 %v645, 0.0
        %v690 = vmax.f32 %v648, 0.0
        %v691 = vmax.f32 %v653, 0.0
        %v692 = vmax.f32 %v656, 0.0
        %v693 = vmax.f32 %v661, 0.0
        %v694 = vmax.f32 %v664, 0.0
        %v695 = vmax.f32 %v669, 0.0
        %v696 = vmax.f32 %v672, 0.0
        %v697 = vmax.f32 %v677, 0.0
        %v698 = vmax.f32 %v680, 0.0
        %v699 = vpack.c.bf16 %v684, %v683
        %v700 = vpack.c.bf16 %v686, %v685
        %v701 = vpack.c.bf16 %v688, %v687
        %v702 = vpack.c.bf16 %v690, %v689
        %v703 = vpack.c.bf16 %v692, %v691
        %v704 = vpack.c.bf16 %v694, %v693
        %v705 = vpack.c.bf16 %v696, %v695
        %v706 = vpack.c.bf16 %v698, %v697
        %v707 = vld [vmem:[#allocation7] sm:$0xf]
        %v708 = vld [vmem:[#allocation7 + $0x4] sm:$0xf]
        %v709 = vld [vmem:[#allocation7 + $0x8] sm:$0xf]
        %v710 = vld [vmem:[#allocation7 + $0xc] sm:$0xf]
        %v711 = vld [vmem:[#allocation7 + $0x10] sm:$0xf]
        %v712 = vld [vmem:[#allocation7 + $0x14] sm:$0xf]
        %v713 = vld [vmem:[#allocation7 + $0x18] sm:$0xf]
        %v714 = vld [vmem:[#allocation7 + $0x1c] sm:$0xf]
        %v715 = vld [vmem:[#allocation7 + $0x20] sm:$0xf]
        %v716 = vld [vmem:[#allocation7 + $0x24] sm:$0xf]
        %v717 = vld [vmem:[#allocation7 + $0x28] sm:$0xf]
        %v718 = vld [vmem:[#allocation7 + $0x2c] sm:$0xf]
        %v719 = vld [vmem:[#allocation7 + $0x30] sm:$0xf]
        %v720 = vld [vmem:[#allocation7 + $0x34] sm:$0xf]
        %v721 = vld [vmem:[#allocation7 + $0x38] sm:$0xf]
        %v722 = vld [vmem:[#allocation7 + $0x3c] sm:$0xf]
        %v723 = vlaneseq
        %v724 = vshrl.u32 %v723, 7
        %v725 = vsub.s32 1, %v724
        %v726 = vrot.slane %v453, %v725
        %v743 = vunpack.c.l.b16 %v707
        %v744 = vunpack.c.l.b16 %v708
        %v745 = vunpack.c.l.b16 %v709
        %v746 = vunpack.c.l.b16 %v710
        %v747 = vunpack.c.l.b16 %v711
        %v748 = vunpack.c.l.b16 %v712
        %v749 = vunpack.c.l.b16 %v713
        %v750 = vunpack.c.l.b16 %v714
        %v751 = vunpack.c.l.b16 %v715
        %v752 = vunpack.c.l.b16 %v716
        %v753 = vunpack.c.l.b16 %v717
        %v754 = vunpack.c.l.b16 %v718
        %v755 = vunpack.c.l.b16 %v719
        %v756 = vunpack.c.l.b16 %v720
        %v757 = vunpack.c.l.b16 %v721
        %v758 = vunpack.c.l.b16 %v722
        %v759 = vpack.c.b16 %v744, %v743
        %v760 = vpack.c.b16 %v746, %v745
        %v761 = vpack.c.b16 %v748, %v747
        %v762 = vpack.c.b16 %v750, %v749
        %v763 = vpack.c.b16 %v752, %v751
        %v764 = vpack.c.b16 %v754, %v753
        %v765 = vpack.c.b16 %v756, %v755
        %v766 = vpack.c.b16 %v758, %v757
        %775 = vmatprep.subr.bf16.mxu0 0
        %776 = vmatpush1.bf16.msra.mxu0 %v759
        %777 = vmatprep.subr.bf16.mxu0 0
        %778 = vmatpush1.bf16.msra.mxu0 %v760
        %779 = vmatprep.subr.bf16.mxu0 0
        %780 = vmatpush1.bf16.msra.mxu0 %v761
        %781 = vmatprep.subr.bf16.mxu0 0
        %782 = vmatpush1.bf16.msra.mxu0 %v762
        %783 = vmatprep.subr.bf16.mxu0 0
        %784 = vmatpush1.bf16.msra.mxu0 %v763
        %785 = vmatprep.subr.bf16.mxu0 0
        %786 = vmatpush1.bf16.msra.mxu0 %v764
        %787 = vmatprep.subr.bf16.mxu0 0
        %788 = vmatpush1.bf16.msra.mxu0 %v765
        %789 = vmatprep.subr.bf16.mxu0 0
        %790 = vmatpush1.bf16.msra.mxu0 %v766
        %791 = vmatprep.subr.bf16.mxu0 0
        %792 = vmatpush1.bf16.msra.mxu0 0
        %793 = vmatprep.subr.bf16.mxu0 0
        %794 = vmatpush1.bf16.msra.mxu0 0
        %795 = vmatprep.subr.bf16.mxu0 0
        %796 = vmatpush1.bf16.msra.mxu0 0
        %797 = vmatprep.subr.bf16.mxu0 0
        %798 = vmatpush1.bf16.msra.mxu0 0
        %799 = vmatprep.subr.bf16.mxu0 0
        %800 = vmatpush1.bf16.msra.mxu0 0
        %801 = vmatprep.subr.bf16.mxu0 0
        %802 = vmatpush1.bf16.msra.mxu0 0
        %803 = vmatprep.subr.bf16.mxu0 0
        %804 = vmatpush1.bf16.msra.mxu0 0
        %805 = vmatprep.subr.bf16.mxu0 0
        %806 = vmatpush1.bf16.msra.mxu0 0
        %807 = vmatprep.mubr.bf16.mxu0 0
        %808 = vmatmul.mubr.bf16.gmra.mrb[0].mxu0 %v699
        %v809 = vpop.f32.mrb[0].mxu0
        %v810 = vadd.f32 %v726, %v809
        %v811 = vpop.f32.mrb[0].mxu0
        %v812 = vpop.f32.mrb[0].mxu0
        %v813 = vadd.f32 %v726, %v812
        %v814 = vpop.f32.mrb[0].mxu0
        %815 = vmatprep.mubr.bf16.mxu0 0
        %816 = vmatmul.mubr.bf16.gmra.mrb[0].mxu0 %v700
        %v817 = vpop.f32.mrb[0].mxu0
        %v818 = vadd.f32 %v726, %v817
        %v819 = vpop.f32.mrb[0].mxu0
        %v820 = vpop.f32.mrb[0].mxu0
        %v821 = vadd.f32 %v726, %v820
        %v822 = vpop.f32.mrb[0].mxu0
        %823 = vmatprep.mubr.bf16.mxu0 0
        %824 = vmatmul.mubr.bf16.gmra.mrb[0].mxu0 %v701
        %v825 = vpop.f32.mrb[0].mxu0
        %v826 = vadd.f32 %v726, %v825
        %v827 = vpop.f32.mrb[0].mxu0
        %v828 = vpop.f32.mrb[0].mxu0
        %v829 = vadd.f32 %v726, %v828
        %v830 = vpop.f32.mrb[0].mxu0
        %831 = vmatprep.mubr.bf16.mxu0 0
        %832 = vmatmul.mubr.bf16.gmra.mrb[0].mxu0 %v702
        %v833 = vpop.f32.mrb[0].mxu0
        %v834 = vadd.f32 %v726, %v833
        %v835 = vpop.f32.mrb[0].mxu0
        %v836 = vpop.f32.mrb[0].mxu0
        %v837 = vadd.f32 %v726, %v836
        %v838 = vpop.f32.mrb[0].mxu0
        %839 = vmatprep.mubr.bf16.mxu0 0
        %840 = vmatmul.mubr.bf16.gmra.mrb[0].mxu0 %v703
        %v841 = vpop.f32.mrb[0].mxu0
        %v842 = vadd.f32 %v726, %v841
        %v843 = vpop.f32.mrb[0].mxu0
        %v844 = vpop.f32.mrb[0].mxu0
        %v845 = vadd.f32 %v726, %v844
        %v846 = vpop.f32.mrb[0].mxu0
        %847 = vmatprep.mubr.bf16.mxu0 0
        %848 = vmatmul.mubr.bf16.gmra.mrb[0].mxu0 %v704
        %v849 = vpop.f32.mrb[0].mxu0
        %v850 = vadd.f32 %v726, %v849
        %v851 = vpop.f32.mrb[0].mxu0
        %v852 = vpop.f32.mrb[0].mxu0
        %v853 = vadd.f32 %v726, %v852
        %v854 = vpop.f32.mrb[0].mxu0
        %855 = vmatprep.mubr.bf16.mxu0 0
        %856 = vmatmul.mubr.bf16.gmra.mrb[0].mxu0 %v705
        %v857 = vpop.f32.mrb[0].mxu0
        %v858 = vadd.f32 %v726, %v857
        %v859 = vpop.f32.mrb[0].mxu0
        %v860 = vpop.f32.mrb[0].mxu0
        %v861 = vadd.f32 %v726, %v860
        %v862 = vpop.f32.mrb[0].mxu0
        %863 = vmatprep.mubr.bf16.mxu0 0
        %864 = vmatmul.mubr.bf16.gmra.mrb[0].mxu0 %v706
        %v865 = vpop.f32.mrb[0].mxu0
        %v866 = vadd.f32 %v726, %v865
        %v867 = vpop.f32.mrb[0].mxu0
        %v868 = vpop.f32.mrb[0].mxu0
        %v869 = vadd.f32 %v726, %v868
        %v870 = vpop.f32.mrb[0].mxu0
        %871 = vdwg.mxu0
        %v872 = vmax.f32 %v810, 0.0
        %v873 = vmax.f32 %v813, 0.0
        %v874 = vmax.f32 %v818, 0.0
        %v875 = vmax.f32 %v821, 0.0
        %v876 = vmax.f32 %v826, 0.0
        %v877 = vmax.f32 %v829, 0.0
        %v878 = vmax.f32 %v834, 0.0
        %v879 = vmax.f32 %v837, 0.0
        %v880 = vmax.f32 %v842, 0.0
        %v881 = vmax.f32 %v845, 0.0
        %v882 = vmax.f32 %v850, 0.0
        %v883 = vmax.f32 %v853, 0.0
        %v884 = vmax.f32 %v858, 0.0
        %v885 = vmax.f32 %v861, 0.0
        %v886 = vmax.f32 %v866, 0.0
        %v887 = vmax.f32 %v869, 0.0
        %v888 = vpack.c.bf16 %v873, %v872
        %v889 = vpack.c.bf16 %v875, %v874
        %v890 = vpack.c.bf16 %v877, %v876
        %v891 = vpack.c.bf16 %v879, %v878
        %v892 = vpack.c.bf16 %v881, %v880
        %v893 = vpack.c.bf16 %v883, %v882
        %v894 = vpack.c.bf16 %v885, %v884
        %v895 = vpack.c.bf16 %v887, %v886
        %v896 = vld [vmem:[#allocation8] sm:$0xf]
        %v897 = vld [vmem:[#allocation8 + $0x4] sm:$0xf]
        %v898 = vld [vmem:[#allocation8 + $0x8] sm:$0xf]
        %v899 = vld [vmem:[#allocation8 + $0xc] sm:$0xf]
        %v900 = vld [vmem:[#allocation8 + $0x10] sm:$0xf]
        %v901 = vld [vmem:[#allocation8 + $0x14] sm:$0xf]
        %v902 = vld [vmem:[#allocation8 + $0x18] sm:$0xf]
        %v903 = vld [vmem:[#allocation8 + $0x1c] sm:$0xf]
        %v904 = vld [vmem:[#allocation8 + $0x20] sm:$0xf]
        %v905 = vld [vmem:[#allocation8 + $0x24] sm:$0xf]
        %v906 = vld [vmem:[#allocation8 + $0x28] sm:$0xf]
        %v907 = vld [vmem:[#allocation8 + $0x2c] sm:$0xf]
        %v908 = vld [vmem:[#allocation8 + $0x30] sm:$0xf]
        %v909 = vld [vmem:[#allocation8 + $0x34] sm:$0xf]
        %v910 = vld [vmem:[#allocation8 + $0x38] sm:$0xf]
        %v911 = vld [vmem:[#allocation8 + $0x3c] sm:$0xf]
        %v912 = vlaneseq
        %v913 = vshrl.u32 %v912, 7
        %v914 = vsub.s32 2, %v913
        %v915 = vrot.slane %v453, %v914
        %v932 = vunpack.c.l.b16 %v896
        %v933 = vunpack.c.l.b16 %v897
        %v934 = vunpack.c.l.b16 %v898
        %v935 = vunpack.c.l.b16 %v899
        %v936 = vunpack.c.l.b16 %v900
        %v937 = vunpack.c.l.b16 %v901
        %v938 = vunpack.c.l.b16 %v902
        %v939 = vunpack.c.l.b16 %v903
        %v940 = vunpack.c.l.b16 %v904
        %v941 = vunpack.c.l.b16 %v905
        %v942 = vunpack.c.l.b16 %v906
        %v943 = vunpack.c.l.b16 %v907
        %v944 = vunpack.c.l.b16 %v908
        %v945 = vunpack.c.l.b16 %v909
        %v946 = vunpack.c.l.b16 %v910
        %v947 = vunpack.c.l.b16 %v911
        %v948 = vpack.c.b16 %v933, %v932
        %v949 = vpack.c.b16 %v935, %v934
        %v950 = vpack.c.b16 %v937, %v936
        %v951 = vpack.c.b16 %v939, %v938
        %v952 = vpack.c.b16 %v941, %v940
        %v953 = vpack.c.b16 %v943, %v942
        %v954 = vpack.c.b16 %v945, %v944
        %v955 = vpack.c.b16 %v947, %v946
        %964 = vmatprep.subr.bf16.mxu0 0
        %965 = vmatpush1.bf16.msra.mxu0 %v948
        %966 = vmatprep.subr.bf16.mxu0 0
        %967 = vmatpush1.bf16.msra.mxu0 %v949
        %968 = vmatprep.subr.bf16.mxu0 0
        %969 = vmatpush1.bf16.msra.mxu0 %v950
        %970 = vmatprep.subr.bf16.mxu0 0
        %971 = vmatpush1.bf16.msra.mxu0 %v951
        %972 = vmatprep.subr.bf16.mxu0 0
        %973 = vmatpush1.bf16.msra.mxu0 %v952
        %974 = vmatprep.subr.bf16.mxu0 0
        %975 = vmatpush1.bf16.msra.mxu0 %v953
        %976 = vmatprep.subr.bf16.mxu0 0
        %977 = vmatpush1.bf16.msra.mxu0 %v954
        %978 = vmatprep.subr.bf16.mxu0 0
        %979 = vmatpush1.bf16.msra.mxu0 %v955
        %980 = vmatprep.subr.bf16.mxu0 0
        %981 = vmatpush1.bf16.msra.mxu0 0
        %982 = vmatprep.subr.bf16.mxu0 0
        %983 = vmatpush1.bf16.msra.mxu0 0
        %984 = vmatprep.subr.bf16.mxu0 0
        %985 = vmatpush1.bf16.msra.mxu0 0
        %986 = vmatprep.subr.bf16.mxu0 0
        %987 = vmatpush1.bf16.msra.mxu0 0
        %988 = vmatprep.subr.bf16.mxu0 0
        %989 = vmatpush1.bf16.msra.mxu0 0
        %990 = vmatprep.subr.bf16.mxu0 0
        %991 = vmatpush1.bf16.msra.mxu0 0
        %992 = vmatprep.subr.bf16.mxu0 0
        %993 = vmatpush1.bf16.msra.mxu0 0
        %994 = vmatprep.subr.bf16.mxu0 0
        %995 = vmatpush1.bf16.msra.mxu0 0
        %996 = vmatprep.mubr.bf16.mxu0 0
        %997 = vmatmul.mubr.bf16.gmra.mrb[0].mxu0 %v888
        %v998 = vpop.f32.mrb[0].mxu0
        %v999 = vadd.f32 %v915, %v998
        %v1000 = vpop.f32.mrb[0].mxu0
        %v1001 = vpop.f32.mrb[0].mxu0
        %v1002 = vadd.f32 %v915, %v1001
        %v1003 = vpop.f32.mrb[0].mxu0
        %1004 = vmatprep.mubr.bf16.mxu0 0
        %1005 = vmatmul.mubr.bf16.gmra.mrb[0].mxu0 %v889
        %v1006 = vpop.f32.mrb[0].mxu0
        %v1007 = vadd.f32 %v915, %v1006
        %v1008 = vpop.f32.mrb[0].mxu0
        %v1009 = vpop.f32.mrb[0].mxu0
        %v1010 = vadd.f32 %v915, %v1009
        %v1011 = vpop.f32.mrb[0].mxu0
        %1012 = vmatprep.mubr.bf16.mxu0 0
        %1013 = vmatmul.mubr.bf16.gmra.mrb[0].mxu0 %v890
        %v1014 = vpop.f32.mrb[0].mxu0
        %v1015 = vadd.f32 %v915, %v1014
        %v1016 = vpop.f32.mrb[0].mxu0
        %v1017 = vpop.f32.mrb[0].mxu0
        %v1018 = vadd.f32 %v915, %v1017
        %v1019 = vpop.f32.mrb[0].mxu0
        %1020 = vmatprep.mubr.bf16.mxu0 0
        %1021 = vmatmul.mubr.bf16.gmra.mrb[0].mxu0 %v891
        %v1022 = vpop.f32.mrb[0].mxu0
        %v1023 = vadd.f32 %v915, %v1022
        %v1024 = vpop.f32.mrb[0].mxu0
        %v1025 = vpop.f32.mrb[0].mxu0
        %v1026 = vadd.f32 %v915, %v1025
        %v1027 = vpop.f32.mrb[0].mxu0
        %1028 = vmatprep.mubr.bf16.mxu0 0
        %1029 = vmatmul.mubr.bf16.gmra.mrb[0].mxu0 %v892
        %v1030 = vpop.f32.mrb[0].mxu0
        %v1031 = vadd.f32 %v915, %v1030
        %v1032 = vpop.f32.mrb[0].mxu0
        %v1033 = vpop.f32.mrb[0].mxu0
        %v1034 = vadd.f32 %v915, %v1033
        %v1035 = vpop.f32.mrb[0].mxu0
        %1036 = vmatprep.mubr.bf16.mxu0 0
        %1037 = vmatmul.mubr.bf16.gmra.mrb[0].mxu0 %v893
        %v1038 = vpop.f32.mrb[0].mxu0
        %v1039 = vadd.f32 %v915, %v1038
        %v1040 = vpop.f32.mrb[0].mxu0
        %v1041 = vpop.f32.mrb[0].mxu0
        %v1042 = vadd.f32 %v915, %v1041
        %v1043 = vpop.f32.mrb[0].mxu0
        %1044 = vmatprep.mubr.bf16.mxu0 0
        %1045 = vmatmul.mubr.bf16.gmra.mrb[0].mxu0 %v894
        %v1046 = vpop.f32.mrb[0].mxu0
        %v1047 = vadd.f32 %v915, %v1046
        %v1048 = vpop.f32.mrb[0].mxu0
        %v1049 = vpop.f32.mrb[0].mxu0
        %v1050 = vadd.f32 %v915, %v1049
        %v1051 = vpop.f32.mrb[0].mxu0
        %1052 = vmatprep.mubr.bf16.mxu0 0
        %1053 = vmatmul.mubr.bf16.gmra.mrb[0].mxu0 %v895
        %v1054 = vpop.f32.mrb[0].mxu0
        %v1055 = vadd.f32 %v915, %v1054
        %v1056 = vpop.f32.mrb[0].mxu0
        %v1057 = vpop.f32.mrb[0].mxu0
        %v1058 = vadd.f32 %v915, %v1057
        %v1059 = vpop.f32.mrb[0].mxu0
        %1060 = vdwg.mxu0
        %1061 = vst [vmem:[%s441] sm:$0xff] %v999
        %1062 = vst [vmem:[%s441 + $0x8] sm:$0xff] %v1002
        %1063 = vst [vmem:[%s441 + $0x10] sm:$0xff] %v1007
        %1064 = vst [vmem:[%s441 + $0x18] sm:$0xff] %v1010
        %1065 = vst [vmem:[%s441 + $0x20] sm:$0xff] %v1015
        %1066 = vst [vmem:[%s441 + $0x28] sm:$0xff] %v1018
        %1067 = vst [vmem:[%s441 + $0x30] sm:$0xff] %v1023
        %1068 = vst [vmem:[%s441 + $0x38] sm:$0xff] %v1026
        %1069 = vst [vmem:[%s441 + $0x40] sm:$0xff] %v1031
        %1070 = vst [vmem:[%s441 + $0x48] sm:$0xff] %v1034
        %1071 = vst [vmem:[%s441 + $0x50] sm:$0xff] %v1039
        %1072 = vst [vmem:[%s441 + $0x58] sm:$0xff] %v1042
        %1073 = vst [vmem:[%s441 + $0x60] sm:$0xff] %v1047
        %1074 = vst [vmem:[%s441 + $0x68] sm:$0xff] %v1050
        %1075 = vst [vmem:[%s441 + $0x70] sm:$0xff] %v1055
        %1076 = vst [vmem:[%s441 + $0x78] sm:$0xff] %v1058
        %v1077 = vpack.c.bf16 %v1002, %v999
        %v1078 = vpack.c.bf16 %v1010, %v1007
        %v1079 = vpack.c.bf16 %v1018, %v1015
        %v1080 = vpack.c.bf16 %v1026, %v1023
        %v1081 = vpack.c.bf16 %v1034, %v1031
        %v1082 = vpack.c.bf16 %v1042, %v1039
        %v1083 = vpack.c.bf16 %v1050, %v1047
        %v1084 = vpack.c.bf16 %v1058, %v1055
        %v1085 = vld [vmem:[#allocation10] sm:$0xf]
        %v1086 = vld [vmem:[#allocation10 + $0x4] sm:$0xf]
        %v1087 = vld [vmem:[#allocation10 + $0x8] sm:$0xf]
        %v1088 = vld [vmem:[#allocation10 + $0xc] sm:$0xf]
        %v1089 = vld [vmem:[#allocation10 + $0x10] sm:$0xf]
        %v1090 = vld [vmem:[#allocation10 + $0x14] sm:$0xf]
        %v1091 = vld [vmem:[#allocation10 + $0x18] sm:$0xf]
        %v1092 = vld [vmem:[#allocation10 + $0x1c] sm:$0xf]
        %v1093 = vld [vmem:[#allocation10 + $0x20] sm:$0xf]
        %v1094 = vld [vmem:[#allocation10 + $0x24] sm:$0xf]
        %v1095 = vld [vmem:[#allocation10 + $0x28] sm:$0xf]
        %v1096 = vld [vmem:[#allocation10 + $0x2c] sm:$0xf]
        %v1097 = vld [vmem:[#allocation10 + $0x30] sm:$0xf]
        %v1098 = vld [vmem:[#allocation10 + $0x34] sm:$0xf]
        %v1099 = vld [vmem:[#allocation10 + $0x38] sm:$0xf]
        %v1100 = vld [vmem:[#allocation10 + $0x3c] sm:$0xf]
        %v1101 = vlaneseq
        %v1102 = vshrl.u32 %v1101, 7
        %v1103 = vsub.s32 3, %v1102
        %v1104 = vrot.slane %v453, %v1103
        %v1121 = vunpack.c.l.b16 %v1085
        %v1122 = vunpack.c.l.b16 %v1086
        %v1123 = vunpack.c.l.b16 %v1087
        %v1124 = vunpack.c.l.b16 %v1088
        %v1125 = vunpack.c.l.b16 %v1089
        %v1126 = vunpack.c.l.b16 %v1090
        %v1127 = vunpack.c.l.b16 %v1091
        %v1128 = vunpack.c.l.b16 %v1092
        %v1129 = vunpack.c.l.b16 %v1093
        %v1130 = vunpack.c.l.b16 %v1094
        %v1131 = vunpack.c.l.b16 %v1095
        %v1132 = vunpack.c.l.b16 %v1096
        %v1133 = vunpack.c.l.b16 %v1097
        %v1134 = vunpack.c.l.b16 %v1098
        %v1135 = vunpack.c.l.b16 %v1099
        %v1136 = vunpack.c.l.b16 %v1100
        %v1137 = vpack.c.b16 %v1122, %v1121
        %v1138 = vpack.c.b16 %v1124, %v1123
        %v1139 = vpack.c.b16 %v1126, %v1125
        %v1140 = vpack.c.b16 %v1128, %v1127
        %v1141 = vpack.c.b16 %v1130, %v1129
        %v1142 = vpack.c.b16 %v1132, %v1131
        %v1143 = vpack.c.b16 %v1134, %v1133
        %v1144 = vpack.c.b16 %v1136, %v1135
        %1153 = vmatprep.subr.bf16.mxu0 0
        %1154 = vmatpush1.bf16.msra.mxu0 %v1137
        %1155 = vmatprep.subr.bf16.mxu0 0
        %1156 = vmatpush1.bf16.msra.mxu0 %v1138
        %1157 = vmatprep.subr.bf16.mxu0 0
        %1158 = vmatpush1.bf16.msra.mxu0 %v1139
        %1159 = vmatprep.subr.bf16.mxu0 0
        %1160 = vmatpush1.bf16.msra.mxu0 %v1140
        %1161 = vmatprep.subr.bf16.mxu0 0
        %1162 = vmatpush1.bf16.msra.mxu0 %v1141
        %1163 = vmatprep.subr.bf16.mxu0 0
        %1164 = vmatpush1.bf16.msra.mxu0 %v1142
        %1165 = vmatprep.subr.bf16.mxu0 0
        %1166 = vmatpush1.bf16.msra.mxu0 %v1143
        %1167 = vmatprep.subr.bf16.mxu0 0
        %1168 = vmatpush1.bf16.msra.mxu0 %v1144
        %1169 = vmatprep.subr.bf16.mxu0 0
        %1170 = vmatpush1.bf16.msra.mxu0 0
        %1171 = vmatprep.subr.bf16.mxu0 0
        %1172 = vmatpush1.bf16.msra.mxu0 0
        %1173 = vmatprep.subr.bf16.mxu0 0
        %1174 = vmatpush1.bf16.msra.mxu0 0
        %1175 = vmatprep.subr.bf16.mxu0 0
        %1176 = vmatpush1.bf16.msra.mxu0 0
        %1177 = vmatprep.subr.bf16.mxu0 0
        %1178 = vmatpush1.bf16.msra.mxu0 0
        %1179 = vmatprep.subr.bf16.mxu0 0
        %1180 = vmatpush1.bf16.msra.mxu0 0
        %1181 = vmatprep.subr.bf16.mxu0 0
        %1182 = vmatpush1.bf16.msra.mxu0 0
        %1183 = vmatprep.subr.bf16.mxu0 0
        %1184 = vmatpush1.bf16.msra.mxu0 0
        %1185 = vmatprep.mubr.bf16.mxu0 0
        %1186 = vmatmul.mubr.bf16.gmra.mrb[0].mxu0 %v1077
        %v1187 = vpop.f32.mrb[0].mxu0
        %v1188 = vadd.f32 %v1104, %v1187
        %v1189 = vpop.f32.mrb[0].mxu0
        %v1190 = vpop.f32.mrb[0].mxu0
        %v1191 = vadd.f32 %v1104, %v1190
        %v1192 = vpop.f32.mrb[0].mxu0
        %1193 = vmatprep.mubr.bf16.mxu0 0
        %1194 = vmatmul.mubr.bf16.gmra.mrb[0].mxu0 %v1078
        %v1195 = vpop.f32.mrb[0].mxu0
        %v1196 = vadd.f32 %v1104, %v1195
        %v1197 = vpop.f32.mrb[0].mxu0
        %v1198 = vpop.f32.mrb[0].mxu0
        %v1199 = vadd.f32 %v1104, %v1198
        %v1200 = vpop.f32.mrb[0].mxu0
        %1201 = vmatprep.mubr.bf16.mxu0 0
        %1202 = vmatmul.mubr.bf16.gmra.mrb[0].mxu0 %v1079
        %v1203 = vpop.f32.mrb[0].mxu0
        %v1204 = vadd.f32 %v1104, %v1203
        %v1205 = vpop.f32.mrb[0].mxu0
        %v1206 = vpop.f32.mrb[0].mxu0
        %v1207 = vadd.f32 %v1104, %v1206
        %v1208 = vpop.f32.mrb[0].mxu0
        %1209 = vmatprep.mubr.bf16.mxu0 0
        %1210 = vmatmul.mubr.bf16.gmra.mrb[0].mxu0 %v1080
        %v1211 = vpop.f32.mrb[0].mxu0
        %v1212 = vadd.f32 %v1104, %v1211
        %v1213 = vpop.f32.mrb[0].mxu0
        %v1214 = vpop.f32.mrb[0].mxu0
        %v1215 = vadd.f32 %v1104, %v1214
        %v1216 = vpop.f32.mrb[0].mxu0
        %1217 = vmatprep.mubr.bf16.mxu0 0
        %1218 = vmatmul.mubr.bf16.gmra.mrb[0].mxu0 %v1081
        %v1219 = vpop.f32.mrb[0].mxu0
        %v1220 = vadd.f32 %v1104, %v1219
        %v1221 = vpop.f32.mrb[0].mxu0
        %v1222 = vpop.f32.mrb[0].mxu0
        %v1223 = vadd.f32 %v1104, %v1222
        %v1224 = vpop.f32.mrb[0].mxu0
        %1225 = vmatprep.mubr.bf16.mxu0 0
        %1226 = vmatmul.mubr.bf16.gmra.mrb[0].mxu0 %v1082
        %v1227 = vpop.f32.mrb[0].mxu0
        %v1228 = vadd.f32 %v1104, %v1227
        %v1229 = vpop.f32.mrb[0].mxu0
        %v1230 = vpop.f32.mrb[0].mxu0
        %v1231 = vadd.f32 %v1104, %v1230
        %v1232 = vpop.f32.mrb[0].mxu0
        %1233 = vmatprep.mubr.bf16.mxu0 0
        %1234 = vmatmul.mubr.bf16.gmra.mrb[0].mxu0 %v1083
        %v1235 = vpop.f32.mrb[0].mxu0
        %v1236 = vadd.f32 %v1104, %v1235
        %v1237 = vpop.f32.mrb[0].mxu0
        %v1238 = vpop.f32.mrb[0].mxu0
        %v1239 = vadd.f32 %v1104, %v1238
        %v1240 = vpop.f32.mrb[0].mxu0
        %1241 = vmatprep.mubr.bf16.mxu0 0
        %1242 = vmatmul.mubr.bf16.gmra.mrb[0].mxu0 %v1084
        %v1243 = vpop.f32.mrb[0].mxu0
        %v1244 = vadd.f32 %v1104, %v1243
        %v1245 = vpop.f32.mrb[0].mxu0
        %v1246 = vpop.f32.mrb[0].mxu0
        %v1247 = vadd.f32 %v1104, %v1246
        %v1248 = vpop.f32.mrb[0].mxu0
        %1249 = vdwg.mxu0
        %v1250 = vmax.f32 %v1188, 0.0
        %v1251 = vmax.f32 %v1191, 0.0
        %v1252 = vmax.f32 %v1196, 0.0
        %v1253 = vmax.f32 %v1199, 0.0
        %v1254 = vmax.f32 %v1204, 0.0
        %v1255 = vmax.f32 %v1207, 0.0
        %v1256 = vmax.f32 %v1212, 0.0
        %v1257 = vmax.f32 %v1215, 0.0
        %v1258 = vmax.f32 %v1220, 0.0
        %v1259 = vmax.f32 %v1223, 0.0
        %v1260 = vmax.f32 %v1228, 0.0
        %v1261 = vmax.f32 %v1231, 0.0
        %v1262 = vmax.f32 %v1236, 0.0
        %v1263 = vmax.f32 %v1239, 0.0
        %v1264 = vmax.f32 %v1244, 0.0
        %v1265 = vmax.f32 %v1247, 0.0
        %v1266 = vpack.c.bf16 %v1251, %v1250
        %v1267 = vpack.c.bf16 %v1253, %v1252
        %v1268 = vpack.c.bf16 %v1255, %v1254
        %v1269 = vpack.c.bf16 %v1257, %v1256
        %v1270 = vpack.c.bf16 %v1259, %v1258
        %v1271 = vpack.c.bf16 %v1261, %v1260
        %v1272 = vpack.c.bf16 %v1263, %v1262
        %v1273 = vpack.c.bf16 %v1265, %v1264
        %v1274 = vld [vmem:[#allocation11] sm:$0xf]
        %v1275 = vld [vmem:[#allocation11 + $0x4] sm:$0xf]
        %v1276 = vld [vmem:[#allocation11 + $0x8] sm:$0xf]
        %v1277 = vld [vmem:[#allocation11 + $0xc] sm:$0xf]
        %v1278 = vld [vmem:[#allocation11 + $0x10] sm:$0xf]
        %v1279 = vld [vmem:[#allocation11 + $0x14] sm:$0xf]
        %v1280 = vld [vmem:[#allocation11 + $0x18] sm:$0xf]
        %v1281 = vld [vmem:[#allocation11 + $0x1c] sm:$0xf]
        %v1282 = vld [vmem:[#allocation11 + $0x20] sm:$0xf]
        %v1283 = vld [vmem:[#allocation11 + $0x24] sm:$0xf]
        %v1284 = vld [vmem:[#allocation11 + $0x28] sm:$0xf]
        %v1285 = vld [vmem:[#allocation11 + $0x2c] sm:$0xf]
        %v1286 = vld [vmem:[#allocation11 + $0x30] sm:$0xf]
        %v1287 = vld [vmem:[#allocation11 + $0x34] sm:$0xf]
        %v1288 = vld [vmem:[#allocation11 + $0x38] sm:$0xf]
        %v1289 = vld [vmem:[#allocation11 + $0x3c] sm:$0xf]
        %v1290 = vlaneseq
        %v1291 = vshrl.u32 %v1290, 7
        %v1292 = vsub.s32 4, %v1291
        %v1293 = vrot.slane %v453, %v1292
        %v1310 = vunpack.c.l.b16 %v1274
        %v1311 = vunpack.c.l.b16 %v1275
        %v1312 = vunpack.c.l.b16 %v1276
        %v1313 = vunpack.c.l.b16 %v1277
        %v1314 = vunpack.c.l.b16 %v1278
        %v1315 = vunpack.c.l.b16 %v1279
        %v1316 = vunpack.c.l.b16 %v1280
        %v1317 = vunpack.c.l.b16 %v1281
        %v1318 = vunpack.c.l.b16 %v1282
        %v1319 = vunpack.c.l.b16 %v1283
        %v1320 = vunpack.c.l.b16 %v1284
        %v1321 = vunpack.c.l.b16 %v1285
        %v1322 = vunpack.c.l.b16 %v1286
        %v1323 = vunpack.c.l.b16 %v1287
        %v1324 = vunpack.c.l.b16 %v1288
        %v1325 = vunpack.c.l.b16 %v1289
        %v1326 = vpack.c.b16 %v1311, %v1310
        %v1327 = vpack.c.b16 %v1313, %v1312
        %v1328 = vpack.c.b16 %v1315, %v1314
        %v1329 = vpack.c.b16 %v1317, %v1316
        %v1330 = vpack.c.b16 %v1319, %v1318
        %v1331 = vpack.c.b16 %v1321, %v1320
        %v1332 = vpack.c.b16 %v1323, %v1322
        %v1333 = vpack.c.b16 %v1325, %v1324
        %1342 = vmatprep.subr.bf16.mxu0 0
        %1343 = vmatpush1.bf16.msra.mxu0 %v1326
        %1344 = vmatprep.subr.bf16.mxu0 0
        %1345 = vmatpush1.bf16.msra.mxu0 %v1327
        %1346 = vmatprep.subr.bf16.mxu0 0
        %1347 = vmatpush1.bf16.msra.mxu0 %v1328
        %1348 = vmatprep.subr.bf16.mxu0 0
        %1349 = vmatpush1.bf16.msra.mxu0 %v1329
        %1350 = vmatprep.subr.bf16.mxu0 0
        %1351 = vmatpush1.bf16.msra.mxu0 %v1330
        %1352 = vmatprep.subr.bf16.mxu0 0
        %1353 = vmatpush1.bf16.msra.mxu0 %v1331
        %1354 = vmatprep.subr.bf16.mxu0 0
        %1355 = vmatpush1.bf16.msra.mxu0 %v1332
        %1356 = vmatprep.subr.bf16.mxu0 0
        %1357 = vmatpush1.bf16.msra.mxu0 %v1333
        %1358 = vmatprep.subr.bf16.mxu0 0
        %1359 = vmatpush1.bf16.msra.mxu0 0
        %1360 = vmatprep.subr.bf16.mxu0 0
        %1361 = vmatpush1.bf16.msra.mxu0 0
        %1362 = vmatprep.subr.bf16.mxu0 0
        %1363 = vmatpush1.bf16.msra.mxu0 0
        %1364 = vmatprep.subr.bf16.mxu0 0
        %1365 = vmatpush1.bf16.msra.mxu0 0
        %1366 = vmatprep.subr.bf16.mxu0 0
        %1367 = vmatpush1.bf16.msra.mxu0 0
        %1368 = vmatprep.subr.bf16.mxu0 0
        %1369 = vmatpush1.bf16.msra.mxu0 0
        %1370 = vmatprep.subr.bf16.mxu0 0
        %1371 = vmatpush1.bf16.msra.mxu0 0
        %1372 = vmatprep.subr.bf16.mxu0 0
        %1373 = vmatpush1.bf16.msra.mxu0 0
        %1374 = vmatprep.mubr.bf16.mxu0 0
        %1375 = vmatmul.mubr.bf16.gmra.mrb[0].mxu0 %v1266
        %v1376 = vpop.f32.mrb[0].mxu0
        %v1377 = vadd.f32 %v1293, %v1376
        %v1378 = vpop.f32.mrb[0].mxu0
        %v1379 = vpop.f32.mrb[0].mxu0
        %v1380 = vadd.f32 %v1293, %v1379
        %v1381 = vpop.f32.mrb[0].mxu0
        %1382 = vmatprep.mubr.bf16.mxu0 0
        %1383 = vmatmul.mubr.bf16.gmra.mrb[0].mxu0 %v1267
        %v1384 = vpop.f32.mrb[0].mxu0
        %v1385 = vadd.f32 %v1293, %v1384
        %v1386 = vpop.f32.mrb[0].mxu0
        %v1387 = vpop.f32.mrb[0].mxu0
        %v1388 = vadd.f32 %v1293, %v1387
        %v1389 = vpop.f32.mrb[0].mxu0
        %1390 = vmatprep.mubr.bf16.mxu0 0
        %1391 = vmatmul.mubr.bf16.gmra.mrb[0].mxu0 %v1268
        %v1392 = vpop.f32.mrb[0].mxu0
        %v1393 = vadd.f32 %v1293, %v1392
        %v1394 = vpop.f32.mrb[0].mxu0
        %v1395 = vpop.f32.mrb[0].mxu0
        %v1396 = vadd.f32 %v1293, %v1395
        %v1397 = vpop.f32.mrb[0].mxu0
        %1398 = vmatprep.mubr.bf16.mxu0 0
        %1399 = vmatmul.mubr.bf16.gmra.mrb[0].mxu0 %v1269
        %v1400 = vpop.f32.mrb[0].mxu0
        %v1401 = vadd.f32 %v1293, %v1400
        %v1402 = vpop.f32.mrb[0].mxu0
        %v1403 = vpop.f32.mrb[0].mxu0
        %v1404 = vadd.f32 %v1293, %v1403
        %v1405 = vpop.f32.mrb[0].mxu0
        %1406 = vmatprep.mubr.bf16.mxu0 0
        %1407 = vmatmul.mubr.bf16.gmra.mrb[0].mxu0 %v1270
        %v1408 = vpop.f32.mrb[0].mxu0
        %v1409 = vadd.f32 %v1293, %v1408
        %v1410 = vpop.f32.mrb[0].mxu0
        %v1411 = vpop.f32.mrb[0].mxu0
        %v1412 = vadd.f32 %v1293, %v1411
        %v1413 = vpop.f32.mrb[0].mxu0
        %1414 = vmatprep.mubr.bf16.mxu0 0
        %1415 = vmatmul.mubr.bf16.gmra.mrb[0].mxu0 %v1271
        %v1416 = vpop.f32.mrb[0].mxu0
        %v1417 = vadd.f32 %v1293, %v1416
        %v1418 = vpop.f32.mrb[0].mxu0
        %v1419 = vpop.f32.mrb[0].mxu0
        %v1420 = vadd.f32 %v1293, %v1419
        %v1421 = vpop.f32.mrb[0].mxu0
        %1422 = vmatprep.mubr.bf16.mxu0 0
        %1423 = vmatmul.mubr.bf16.gmra.mrb[0].mxu0 %v1272
        %v1424 = vpop.f32.mrb[0].mxu0
        %v1425 = vadd.f32 %v1293, %v1424
        %v1426 = vpop.f32.mrb[0].mxu0
        %v1427 = vpop.f32.mrb[0].mxu0
        %v1428 = vadd.f32 %v1293, %v1427
        %v1429 = vpop.f32.mrb[0].mxu0
        %1430 = vmatprep.mubr.bf16.mxu0 0
        %1431 = vmatmul.mubr.bf16.gmra.mrb[0].mxu0 %v1273
        %v1432 = vpop.f32.mrb[0].mxu0
        %v1433 = vadd.f32 %v1293, %v1432
        %v1434 = vpop.f32.mrb[0].mxu0
        %v1435 = vpop.f32.mrb[0].mxu0
        %v1436 = vadd.f32 %v1293, %v1435
        %v1437 = vpop.f32.mrb[0].mxu0
        %1438 = vdwg.mxu0
        %v1439 = vmax.f32 %v1377, 0.0
        %v1440 = vmax.f32 %v1380, 0.0
        %v1441 = vmax.f32 %v1385, 0.0
        %v1442 = vmax.f32 %v1388, 0.0
        %v1443 = vmax.f32 %v1393, 0.0
        %v1444 = vmax.f32 %v1396, 0.0
        %v1445 = vmax.f32 %v1401, 0.0
        %v1446 = vmax.f32 %v1404, 0.0
        %v1447 = vmax.f32 %v1409, 0.0
        %v1448 = vmax.f32 %v1412, 0.0
        %v1449 = vmax.f32 %v1417, 0.0
        %v1450 = vmax.f32 %v1420, 0.0
        %v1451 = vmax.f32 %v1425, 0.0
        %v1452 = vmax.f32 %v1428, 0.0
        %v1453 = vmax.f32 %v1433, 0.0
        %v1454 = vmax.f32 %v1436, 0.0
        %v1455 = vpack.c.bf16 %v1440, %v1439
        %v1456 = vpack.c.bf16 %v1442, %v1441
        %v1457 = vpack.c.bf16 %v1444, %v1443
        %v1458 = vpack.c.bf16 %v1446, %v1445
        %v1459 = vpack.c.bf16 %v1448, %v1447
        %v1460 = vpack.c.bf16 %v1450, %v1449
        %v1461 = vpack.c.bf16 %v1452, %v1451
        %v1462 = vpack.c.bf16 %v1454, %v1453
        %v1463 = vld [vmem:[#allocation13] sm:$0xf]
        %v1464 = vld [vmem:[#allocation13 + $0x4] sm:$0xf]
        %v1465 = vld [vmem:[#allocation13 + $0x8] sm:$0xf]
        %v1466 = vld [vmem:[#allocation13 + $0xc] sm:$0xf]
        %v1467 = vld [vmem:[#allocation13 + $0x10] sm:$0xf]
        %v1468 = vld [vmem:[#allocation13 + $0x14] sm:$0xf]
        %v1469 = vld [vmem:[#allocation13 + $0x18] sm:$0xf]
        %v1470 = vld [vmem:[#allocation13 + $0x1c] sm:$0xf]
        %v1471 = vld [vmem:[#allocation13 + $0x20] sm:$0xf]
        %v1472 = vld [vmem:[#allocation13 + $0x24] sm:$0xf]
        %v1473 = vld [vmem:[#allocation13 + $0x28] sm:$0xf]
        %v1474 = vld [vmem:[#allocation13 + $0x2c] sm:$0xf]
        %v1475 = vld [vmem:[#allocation13 + $0x30] sm:$0xf]
        %v1476 = vld [vmem:[#allocation13 + $0x34] sm:$0xf]
        %v1477 = vld [vmem:[#allocation13 + $0x38] sm:$0xf]
        %v1478 = vld [vmem:[#allocation13 + $0x3c] sm:$0xf]
        %v1479 = vlaneseq
        %v1480 = vshrl.u32 %v1479, 7
        %v1481 = vsub.s32 5, %v1480
        %v1482 = vrot.slane %v453, %v1481
        %v1499 = vunpack.c.l.b16 %v1463
        %v1500 = vunpack.c.l.b16 %v1464
        %v1501 = vunpack.c.l.b16 %v1465
        %v1502 = vunpack.c.l.b16 %v1466
        %v1503 = vunpack.c.l.b16 %v1467
        %v1504 = vunpack.c.l.b16 %v1468
        %v1505 = vunpack.c.l.b16 %v1469
        %v1506 = vunpack.c.l.b16 %v1470
        %v1507 = vunpack.c.l.b16 %v1471
        %v1508 = vunpack.c.l.b16 %v1472
        %v1509 = vunpack.c.l.b16 %v1473
        %v1510 = vunpack.c.l.b16 %v1474
        %v1511 = vunpack.c.l.b16 %v1475
        %v1512 = vunpack.c.l.b16 %v1476
        %v1513 = vunpack.c.l.b16 %v1477
        %v1514 = vunpack.c.l.b16 %v1478
        %v1515 = vpack.c.b16 %v1500, %v1499
        %v1516 = vpack.c.b16 %v1502, %v1501
        %v1517 = vpack.c.b16 %v1504, %v1503
        %v1518 = vpack.c.b16 %v1506, %v1505
        %v1519 = vpack.c.b16 %v1508, %v1507
        %v1520 = vpack.c.b16 %v1510, %v1509
        %v1521 = vpack.c.b16 %v1512, %v1511
        %v1522 = vpack.c.b16 %v1514, %v1513
        %1531 = vmatprep.subr.bf16.mxu0 0
        %1532 = vmatpush1.bf16.msra.mxu0 %v1515
        %1533 = vmatprep.subr.bf16.mxu0 0
        %1534 = vmatpush1.bf16.msra.mxu0 %v1516
        %1535 = vmatprep.subr.bf16.mxu0 0
        %1536 = vmatpush1.bf16.msra.mxu0 %v1517
        %1537 = vmatprep.subr.bf16.mxu0 0
        %1538 = vmatpush1.bf16.msra.mxu0 %v1518
        %1539 = vmatprep.subr.bf16.mxu0 0
        %1540 = vmatpush1.bf16.msra.mxu0 %v1519
        %1541 = vmatprep.subr.bf16.mxu0 0
        %1542 = vmatpush1.bf16.msra.mxu0 %v1520
        %1543 = vmatprep.subr.bf16.mxu0 0
        %1544 = vmatpush1.bf16.msra.mxu0 %v1521
        %1545 = vmatprep.subr.bf16.mxu0 0
        %1546 = vmatpush1.bf16.msra.mxu0 %v1522
        %1547 = vmatprep.subr.bf16.mxu0 0
        %1548 = vmatpush1.bf16.msra.mxu0 0
        %1549 = vmatprep.subr.bf16.mxu0 0
        %1550 = vmatpush1.bf16.msra.mxu0 0
        %1551 = vmatprep.subr.bf16.mxu0 0
        %1552 = vmatpush1.bf16.msra.mxu0 0
        %1553 = vmatprep.subr.bf16.mxu0 0
        %1554 = vmatpush1.bf16.msra.mxu0 0
        %1555 = vmatprep.subr.bf16.mxu0 0
        %1556 = vmatpush1.bf16.msra.mxu0 0
        %1557 = vmatprep.subr.bf16.mxu0 0
        %1558 = vmatpush1.bf16.msra.mxu0 0
        %1559 = vmatprep.subr.bf16.mxu0 0
        %1560 = vmatpush1.bf16.msra.mxu0 0
        %1561 = vmatprep.subr.bf16.mxu0 0
        %1562 = vmatpush1.bf16.msra.mxu0 0
        %1563 = vmatprep.mubr.bf16.mxu0 0
        %1564 = vmatmul.mubr.bf16.gmra.mrb[0].mxu0 %v1455
        %v1565 = vpop.f32.mrb[0].mxu0
        %v1566 = vadd.f32 %v1482, %v1565
        %v1567 = vpop.f32.mrb[0].mxu0
        %v1568 = vpop.f32.mrb[0].mxu0
        %v1569 = vadd.f32 %v1482, %v1568
        %v1570 = vpop.f32.mrb[0].mxu0
        %1571 = vmatprep.mubr.bf16.mxu0 0
        %1572 = vmatmul.mubr.bf16.gmra.mrb[0].mxu0 %v1456
        %v1573 = vpop.f32.mrb[0].mxu0
        %v1574 = vadd.f32 %v1482, %v1573
        %v1575 = vpop.f32.mrb[0].mxu0
        %v1576 = vpop.f32.mrb[0].mxu0
        %v1577 = vadd.f32 %v1482, %v1576
        %v1578 = vpop.f32.mrb[0].mxu0
        %1579 = vmatprep.mubr.bf16.mxu0 0
        %1580 = vmatmul.mubr.bf16.gmra.mrb[0].mxu0 %v1457
        %v1581 = vpop.f32.mrb[0].mxu0
        %v1582 = vadd.f32 %v1482, %v1581
        %v1583 = vpop.f32.mrb[0].mxu0
        %v1584 = vpop.f32.mrb[0].mxu0
        %v1585 = vadd.f32 %v1482, %v1584
        %v1586 = vpop.f32.mrb[0].mxu0
        %1587 = vmatprep.mubr.bf16.mxu0 0
        %1588 = vmatmul.mubr.bf16.gmra.mrb[0].mxu0 %v1458
        %v1589 = vpop.f32.mrb[0].mxu0
        %v1590 = vadd.f32 %v1482, %v1589
        %v1591 = vpop.f32.mrb[0].mxu0
        %v1592 = vpop.f32.mrb[0].mxu0
        %v1593 = vadd.f32 %v1482, %v1592
        %v1594 = vpop.f32.mrb[0].mxu0
        %1595 = vmatprep.mubr.bf16.mxu0 0
        %1596 = vmatmul.mubr.bf16.gmra.mrb[0].mxu0 %v1459
        %v1597 = vpop.f32.mrb[0].mxu0
        %v1598 = vadd.f32 %v1482, %v1597
        %v1599 = vpop.f32.mrb[0].mxu0
        %v1600 = vpop.f32.mrb[0].mxu0
        %v1601 = vadd.f32 %v1482, %v1600
        %v1602 = vpop.f32.mrb[0].mxu0
        %1603 = vmatprep.mubr.bf16.mxu0 0
        %1604 = vmatmul.mubr.bf16.gmra.mrb[0].mxu0 %v1460
        %v1605 = vpop.f32.mrb[0].mxu0
        %v1606 = vadd.f32 %v1482, %v1605
        %v1607 = vpop.f32.mrb[0].mxu0
        %v1608 = vpop.f32.mrb[0].mxu0
        %v1609 = vadd.f32 %v1482, %v1608
        %v1610 = vpop.f32.mrb[0].mxu0
        %1611 = vmatprep.mubr.bf16.mxu0 0
        %1612 = vmatmul.mubr.bf16.gmra.mrb[0].mxu0 %v1461
        %v1613 = vpop.f32.mrb[0].mxu0
        %v1614 = vadd.f32 %v1482, %v1613
        %v1615 = vpop.f32.mrb[0].mxu0
        %v1616 = vpop.f32.mrb[0].mxu0
        %v1617 = vadd.f32 %v1482, %v1616
        %v1618 = vpop.f32.mrb[0].mxu0
        %1619 = vmatprep.mubr.bf16.mxu0 0
        %1620 = vmatmul.mubr.bf16.gmra.mrb[0].mxu0 %v1462
        %v1621 = vpop.f32.mrb[0].mxu0
        %v1622 = vadd.f32 %v1482, %v1621
        %v1623 = vpop.f32.mrb[0].mxu0
        %v1624 = vpop.f32.mrb[0].mxu0
        %v1625 = vadd.f32 %v1482, %v1624
        %v1626 = vpop.f32.mrb[0].mxu0
        %1627 = vdwg.mxu0
        %1628 = vst [vmem:[%s448] sm:$0xff] %v1566
        %1629 = vst [vmem:[%s448 + $0x8] sm:$0xff] %v1569
        %1630 = vst [vmem:[%s448 + $0x10] sm:$0xff] %v1574
        %1631 = vst [vmem:[%s448 + $0x18] sm:$0xff] %v1577
        %1632 = vst [vmem:[%s448 + $0x20] sm:$0xff] %v1582
        %1633 = vst [vmem:[%s448 + $0x28] sm:$0xff] %v1585
        %1634 = vst [vmem:[%s448 + $0x30] sm:$0xff] %v1590
        %1635 = vst [vmem:[%s448 + $0x38] sm:$0xff] %v1593
        %1636 = vst [vmem:[%s448 + $0x40] sm:$0xff] %v1598
        %1637 = vst [vmem:[%s448 + $0x48] sm:$0xff] %v1601
        %1638 = vst [vmem:[%s448 + $0x50] sm:$0xff] %v1606
        %1639 = vst [vmem:[%s448 + $0x58] sm:$0xff] %v1609
        %1640 = vst [vmem:[%s448 + $0x60] sm:$0xff] %v1614
        %1641 = vst [vmem:[%s448 + $0x68] sm:$0xff] %v1617
        %1642 = vst [vmem:[%s448 + $0x70] sm:$0xff] %v1622
        %1643 = vst [vmem:[%s448 + $0x78] sm:$0xff] %v1625
        %s1644 = sand.u32 %s214, 1
        %s1645 = scalar_lea.sflag [#allocation4], %s1644
        %s1646 = sand.u32 %s214, 1
        %s1647 = smul.addr %s1646, 128
        %s1648 = scalar_lea.vmem [#allocation14], %s1647
        %s1649 = sand.u32 %s240, 1
        %s1650 = scalar_lea.sflag [#allocation16], %s1649
        %s1651 = sand.u32 %s240, 1
        %s1652 = smul.addr %s1651, 128
        %s1653 = scalar_lea.vmem [#allocation15], %s1652
        // Predicated region
        $region81: #{tpu_custom_call.1} parent=51 // pred_check
          %p1654 = pneg %p224
        $region82: #{tpu_custom_call.1} parent=51 // pred_check_branch
          %1656 = sbr.rel (%p1654) target = $region84
        $region83: #{tpu_custom_call.1} parent=51 // pred_region
          %s1657 = smul.u32 16, %s33
          %s1659 = ssub.s32 2048, 2048
          %1660 = vsyncadd %s1645, %s1659
          %s1661 = smul.addr %s1657, 128
          %s1662 = scalar_lea.hbm %s8, %s1661
          %s1663 = sshll.u32 %s1648, 4
          %s1664 = int_to_ptr.vmem [resolvable:$true] %s1663
          %1669 = dma.vmem_to_hbm [thread:$0]  %s1664, 2048, %s1662, %s1645, 128, 128, 8
        $region84: #{tpu_custom_call.1} parent=51 // pred_fallthru
          _
        // Predicated region
        $region85: #{tpu_custom_call.1} parent=51 // pred_check
          %p1670 = pneg %p250
        $region86: #{tpu_custom_call.1} parent=51 // pred_check_branch
          %1672 = sbr.rel (%p1670) target = $region88
        $region87: #{tpu_custom_call.1} parent=51 // pred_region
          %s1673 = smul.u32 16, %s33
          %s1675 = ssub.s32 2048, 2048
          %1676 = vsyncadd %s1650, %s1675
          %s1677 = smul.addr %s1673, 128
          %s1678 = scalar_lea.hbm %s9, %s1677
          %s1679 = sshll.u32 %s1653, 4
          %s1680 = int_to_ptr.vmem [resolvable:$true] %s1679
          %1685 = dma.vmem_to_hbm [thread:$0]  %s1680, 2048, %s1678, %s1650, 128, 128, 8
        $region88: #{tpu_custom_call.1} parent=51 // pred_fallthru
          _
      $region52: #{tpu_custom_call.1} parent=5 // pred_fallthru
        _
      %p1686 = scmp.le.s32.totalorder 2, %s28
      // Predicated region
      $region89: #{tpu_custom_call.1} parent=5 // pred_check
        %p1687 = pneg %p1686
      $region90: #{tpu_custom_call.1} parent=5 // pred_check_branch
        %1689 = sbr.rel (%p1687) target = $region92
      $region91: #{tpu_custom_call.1} parent=5 // pred_region
        %s1690 = ssub.s32 %s28, 2
        // Predicated region
        $region93: #{tpu_custom_call.1} parent=91 // pred_check
          %p1691 = pneg %p230
        $region94: #{tpu_custom_call.1} parent=91 // pred_check_branch
          %1693 = sbr.rel (%p1691) target = $region96
        $region95: #{tpu_custom_call.1} parent=91 // pred_region
          %s1694 = sand.u32 %s215, 1
          %s1695 = scalar_lea.sflag [#allocation4], %s1694
          %s1696 = sand.u32 %s215, 1
          %s1697 = smul.addr %s1696, 128
          %s1698 = scalar_lea.vmem [#allocation14], %s1697
          %1699 = dma.done %s1695, 2048
        $region96: #{tpu_custom_call.1} parent=91 // pred_fallthru
          _
        // Predicated region
        $region97: #{tpu_custom_call.1} parent=91 // pred_check
          %p1700 = pneg %p256
        $region98: #{tpu_custom_call.1} parent=91 // pred_check_branch
          %1702 = sbr.rel (%p1700) target = $region100
        $region99: #{tpu_custom_call.1} parent=91 // pred_region
          %s1703 = sand.u32 %s241, 1
          %s1704 = scalar_lea.sflag [#allocation16], %s1703
          %s1705 = sand.u32 %s241, 1
          %s1706 = smul.addr %s1705, 128
          %s1707 = scalar_lea.vmem [#allocation15], %s1706
          %1708 = dma.done %s1704, 2048
        $region100: #{tpu_custom_call.1} parent=91 // pred_fallthru
          _
      $region92: #{tpu_custom_call.1} parent=5 // pred_fallthru
        _
    $region6: #{tpu_custom_call.1} parent=1 // loop_footer
      %s32 = sadd.s32 1, %s28
    $region7: #{tpu_custom_call.1} parent=1 // loop_footer_branch
      %27 = sbr.rel target = $region3
    $region8: #{tpu_custom_call.1} parent=1 // loop_exit
      _
    %1709 = vsyncpa [#allocation3], 1
    %s1710 = scalar_lea.sflag [#allocation3], 1
    %1711 = vsyncpa %s1710, 1
    %1712 = vsyncpa [#allocation6], 1
    %1713 = vsyncpa [#allocation9], 1
    %1714 = vsyncpa [#allocation12], 1
    %1715 = vsyncpa [#allocation4], 1
    %s1716 = scalar_lea.sflag [#allocation4], 1
    %1717 = vsyncpa %s1716, 1
    %1718 = vsyncpa [#allocation16], 1
    %s1719 = scalar_lea.sflag [#allocation16], 1
    %1720 = vsyncpa %s1719, 1

// kernel: tpu_custom_call.1
$region0: #{tpu_custom_call.1}
  #allocation0 [shape = 'u32[]', space=smem, size = 0x4, offset = 0x4, fixed_abs, tag = 'smem constant byte address 0x4 - core index']
  #allocation1 [shape = 'u32[144,128]{1,0:T(1,128)}', space=vmem, size = 0x12000, scoped, tag = 'internal scratch']
  %s0 = inlined_call_operand.hbm [shape: bf16[384,128], index: 0, kind: input, shape index: {}]
  %s1 = inlined_call_operand.hbm [shape: bf16[128,128], index: 1, kind: input, shape index: {}]
  %s2 = inlined_call_operand.hbm [shape: bf16[128,128], index: 2, kind: input, shape index: {}]
  %s3 = inlined_call_operand.hbm [shape: bf16[128,128], index: 3, kind: input, shape index: {}]
  %s4 = inlined_call_operand.hbm [shape: bf16[128,128], index: 4, kind: input, shape index: {}]
  %s5 = inlined_call_operand.hbm [shape: bf16[128,128], index: 5, kind: input, shape index: {}]
  %s6 = inlined_call_operand.hbm [shape: bf16[128,128], index: 6, kind: input, shape index: {}]
  %s7 = inlined_call_operand.vmem [shape: f32[6,128], index: 7, kind: input, shape index: {}]
  %s8 = inlined_call_operand.hbm [shape: f32[384,128], index: 8, kind: output, shape index: {0}]
  %s9 = inlined_call_operand.hbm [shape: f32[384,128], index: 9, kind: output, shape index: {1}]
  %10 = xla_tuple %s8, %s9
  %s11 = sld [smem:[#allocation0]]
  $region101: #{tpu_custom_call.1} parent=0
    _
  %s13 = ssub.s32 1, %s11
  %s14 = scalar_select 0, %s13, %s11
  $region1: #{tpu_custom_call.1} parent=0
    #allocation2 [shape = 'u8[65536]{0}', space=vmem, size = 0x10000, scoped, tag = 'input window, operand 0']
    #allocation3 [shape = 's32[2]{0}', space=sflag, size = 0x8, scoped, tag = 'scoped memory for tpu_custom_call.1']
    #allocation4 [shape = 's32[2]{0}', space=sflag, size = 0x8, scoped, tag = 'scoped memory for tpu_custom_call.1']
    #allocation5 [shape = 'u8[32768]{0}', space=vmem, size = 0x8000, scoped, tag = 'input window, operand 1, single buffered']
    #allocation6 [shape = 's32[1]{0}', space=sflag, size = 0x4, scoped, tag = 'scoped memory for tpu_custom_call.1']
    #allocation7 [shape = 'u8[32768]{0}', space=vmem, size = 0x8000, scoped, tag = 'input window, operand 2, single buffered']
    #allocation8 [shape = 'u8[32768]{0}', space=vmem, size = 0x8000, scoped, tag = 'input window, operand 3, single buffered']
    #allocation9 [shape = 's32[1]{0}', space=sflag, size = 0x4, scoped, tag = 'scoped memory for tpu_custom_call.1']
    #allocation10 [shape = 'u8[32768]{0}', space=vmem, size = 0x8000, scoped, tag = 'input window, operand 4, single buffered']
    #allocation11 [shape = 'u8[32768]{0}', space=vmem, size = 0x8000, scoped, tag = 'input window, operand 5, single buffered']
    #allocation12 [shape = 's32[1]{0}', space=sflag, size = 0x4, scoped, tag = 'scoped memory for tpu_custom_call.1']
    #allocation13 [shape = 'u8[32768]{0}', space=vmem, size = 0x8000, scoped, tag = 'input window, operand 6, single buffered']
    #allocation14 [shape = 'u8[131072]{0}', space=vmem, size = 0x20000, scoped, tag = 'output window, operand 0']
    #allocation15 [shape = 'u8[131072]{0}', space=vmem, size = 0x20000, scoped, tag = 'output window, operand 1']
    #allocation16 [shape = 's32[2]{0}', space=sflag, size = 0x8, scoped, tag = 'scoped memory for tpu_custom_call.1']
    %15 = vsyncpa [#allocation3], 0
    %s16 = scalar_lea.sflag [#allocation3], 1
    %17 = vsyncpa %s16, 0
    %18 = vsyncpa [#allocation6], 0
    %19 = vsyncpa [#allocation9], 0
    %20 = vsyncpa [#allocation12], 0
    %21 = vsyncpa [#allocation4], 0
    %s22 = scalar_lea.sflag [#allocation4], 1
    %23 = vsyncpa %s22, 0
    %24 = vsyncpa [#allocation16], 0
    %s25 = scalar_lea.sflag [#allocation16], 1
    %26 = vsyncpa %s25, 0
    loop: start=0, step=1, limit=5
    $region2: #{tpu_custom_call.1} parent=1 // loop_pre_header
      _
    $region3: #{tpu_custom_call.1} parent=1 // loop_header
      %s28 = sphi 0, %s32
      %p29 = scmp.ge.s32.totalorder %s28, 5
      %s38 = sphi 0, %s40
      %s41 = sphi 0, %s38
      %s42 = sphi 0, %s41
      %s58 = sphi 0, %s42
      %s62 = sphi 0, %s62
      %s64 = sphi 0, %s62
      %s65 = sphi 0, %s64
      %s79 = sphi 0, %s65
      %s83 = sphi 0, %s83
      %s85 = sphi 0, %s83
      %s86 = sphi 0, %s85
      %s100 = sphi 0, %s86
      %s104 = sphi 0, %s104
      %s106 = sphi 0, %s104
      %s107 = sphi 0, %s106
      %s121 = sphi 0, %s107
      %s125 = sphi 0, %s125
      %s127 = sphi 0, %s125
      %s128 = sphi 0, %s127
      %s142 = sphi 0, %s128
      %s146 = sphi 0, %s146
      %s148 = sphi 0, %s146
      %s149 = sphi 0, %s148
      %s163 = sphi 0, %s149
      %s167 = sphi 0, %s167
      %s169 = sphi 0, %s167
      %s170 = sphi 0, %s169
      %s184 = sphi 0, %s170
      %s188 = sphi 0, %s188
      %s190 = sphi 0, %s188
      %s191 = sphi 0, %s190
      %s205 = sphi 0, %s191
      %s211 = sphi 0, %s213
      %s214 = sphi 0, %s211
      %s215 = sphi 0, %s214
      %s231 = sphi 0, %s215
      %s237 = sphi 0, %s239
      %s240 = sphi 0, %s237
      %s241 = sphi 0, %s240
      %s257 = sphi 0, %s241
    $region4: #{tpu_custom_call.1} parent=1 // loop_header_branch
      %31 = sbr.rel (%p29) target = $region8
    $region5: #{tpu_custom_call.1} parent=1 // loop_body
      %s33 = ssub.s32 %s28, 1
      %s34 = ssub.s32 %s28, 2
      %s35 = sadd.s32 %s28, 1
      %s36 = ssub.s32 %s28, %s35
      %p37 = scmp.eq.s32.totalorder %s36, 0
      %s39 = sadd.s32 %s38, 1
      %s40 = scalar_select %p37, %s38, %s39
      %p43 = pneg %p37
      %p44 = scmp.eq.s32.totalorder %s28, 2
      %p45 = por %p43, %p44
      %p46 = scmp.ne.s32.totalorder %s38, %s41
      %p47 = scmp.eq.s32.totalorder %s28, 0
      %p48 = por %p46, %p47
      %p49 = scmp.ne.s32.totalorder %s38, %s41
      %p50 = scmp.eq.s32.totalorder %s33, 2
      %p51 = por %p49, %p50
      %p52 = scmp.ne.s32.totalorder %s41, %s42
      %p53 = scmp.eq.s32.totalorder %s33, 0
      %p54 = por %p52, %p53
      %p55 = scmp.ne.s32.totalorder %s41, %s42
      %p56 = scmp.eq.s32.totalorder %s34, 2
      %p57 = por %p55, %p56
      %p59 = scmp.ne.s32.totalorder %s42, %s58
      %p60 = scmp.eq.s32.totalorder %s34, 0
      %p61 = por %p59, %p60
      %s63 = sadd.s32 %s62, 1
      %p66 = scmp.eq.s32.totalorder %s28, 2
      %p67 = scmp.ne.s32.totalorder %s62, %s64
      %p68 = scmp.eq.s32.totalorder %s28, 0
      %p69 = por %p67, %p68
      %p70 = scmp.ne.s32.totalorder %s62, %s64
      %p71 = scmp.eq.s32.totalorder %s33, 2
      %p72 = por %p70, %p71
      %p73 = scmp.ne.s32.totalorder %s64, %s65
      %p74 = scmp.eq.s32.totalorder %s33, 0
      %p75 = por %p73, %p74
      %p76 = scmp.ne.s32.totalorder %s64, %s65
      %p77 = scmp.eq.s32.totalorder %s34, 2
      %p78 = por %p76, %p77
      %p80 = scmp.ne.s32.totalorder %s65, %s79
      %p81 = scmp.eq.s32.totalorder %s34, 0
      %p82 = por %p80, %p81
      %s84 = sadd.s32 %s83, 1
      %p87 = scmp.eq.s32.totalorder %s28, 2
      %p88 = scmp.ne.s32.totalorder %s83, %s85
      %p89 = scmp.eq.s32.totalorder %s28, 0
      %p90 = por %p88, %p89
      %p91 = scmp.ne.s32.totalorder %s83, %s85
      %p92 = scmp.eq.s32.totalorder %s33, 2
      %p93 = por %p91, %p92
      %p94 = scmp.ne.s32.totalorder %s85, %s86
      %p95 = scmp.eq.s32.totalorder %s33, 0
      %p96 = por %p94, %p95
      %p97 = scmp.ne.s32.totalorder %s85, %s86
      %p98 = scmp.eq.s32.totalorder %s34, 2
      %p99 = por %p97, %p98
      %p101 = scmp.ne.s32.totalorder %s86, %s100
      %p102 = scmp.eq.s32.totalorder %s34, 0
      %p103 = por %p101, %p102
      %s105 = sadd.s32 %s104, 1
      %p108 = scmp.eq.s32.totalorder %s28, 2
      %p109 = scmp.ne.s32.totalorder %s104, %s106
      %p110 = scmp.eq.s32.totalorder %s28, 0
      %p111 = por %p109, %p110
      %p112 = scmp.ne.s32.totalorder %s104, %s106
      %p113 = scmp.eq.s32.totalorder %s33, 2
      %p114 = por %p112, %p113
      %p115 = scmp.ne.s32.totalorder %s106, %s107
      %p116 = scmp.eq.s32.totalorder %s33, 0
      %p117 = por %p115, %p116
      %p118 = scmp.ne.s32.totalorder %s106, %s107
      %p119 = scmp.eq.s32.totalorder %s34, 2
      %p120 = por %p118, %p119
      %p122 = scmp.ne.s32.totalorder %s107, %s121
      %p123 = scmp.eq.s32.totalorder %s34, 0
      %p124 = por %p122, %p123
      %s126 = sadd.s32 %s125, 1
      %p129 = scmp.eq.s32.totalorder %s28, 2
      %p130 = scmp.ne.s32.totalorder %s125, %s127
      %p131 = scmp.eq.s32.totalorder %s28, 0
      %p132 = por %p130, %p131
      %p133 = scmp.ne.s32.totalorder %s125, %s127
      %p134 = scmp.eq.s32.totalorder %s33, 2
      %p135 = por %p133, %p134
      %p136 = scmp.ne.s32.totalorder %s127, %s128
      %p137 = scmp.eq.s32.totalorder %s33, 0
      %p138 = por %p136, %p137
      %p139 = scmp.ne.s32.totalorder %s127, %s128
      %p140 = scmp.eq.s32.totalorder %s34, 2
      %p141 = por %p139, %p140
      %p143 = scmp.ne.s32.totalorder %s128, %s142
      %p144 = scmp.eq.s32.totalorder %s34, 0
      %p145 = por %p143, %p144
      %s147 = sadd.s32 %s146, 1
      %p150 = scmp.eq.s32.totalorder %s28, 2
      %p151 = scmp.ne.s32.totalorder %s146, %s148
      %p152 = scmp.eq.s32.totalorder %s28, 0
      %p153 = por %p151, %p152
      %p154 = scmp.ne.s32.totalorder %s146, %s148
      %p155 = scmp.eq.s32.totalorder %s33, 2
      %p156 = por %p154, %p155
      %p157 = scmp.ne.s32.totalorder %s148, %s149
      %p158 = scmp.eq.s32.totalorder %s33, 0
      %p159 = por %p157, %p158
      %p160 = scmp.ne.s32.totalorder %s148, %s149
      %p161 = scmp.eq.s32.totalorder %s34, 2
      %p162 = por %p160, %p161
      %p164 = scmp.ne.s32.totalorder %s149, %s163
      %p165 = scmp.eq.s32.totalorder %s34, 0
      %p166 = por %p164, %p165
      %s168 = sadd.s32 %s167, 1
      %p171 = scmp.eq.s32.totalorder %s28, 2
      %p172 = scmp.ne.s32.totalorder %s167, %s169
      %p173 = scmp.eq.s32.totalorder %s28, 0
      %p174 = por %p172, %p173
      %p175 = scmp.ne.s32.totalorder %s167, %s169
      %p176 = scmp.eq.s32.totalorder %s33, 2
      %p177 = por %p175, %p176
      %p178 = scmp.ne.s32.totalorder %s169, %s170
      %p179 = scmp.eq.s32.totalorder %s33, 0
      %p180 = por %p178, %p179
      %p181 = scmp.ne.s32.totalorder %s169, %s170
      %p182 = scmp.eq.s32.totalorder %s34, 2
      %p183 = por %p181, %p182
      %p185 = scmp.ne.s32.totalorder %s170, %s184
      %p186 = scmp.eq.s32.totalorder %s34, 0
      %p187 = por %p185, %p186
      %s189 = sadd.s32 %s188, 1
      %p192 = scmp.eq.s32.totalorder %s28, 2
      %p193 = scmp.ne.s32.totalorder %s188, %s190
      %p194 = scmp.eq.s32.totalorder %s28, 0
      %p195 = por %p193, %p194
      %p196 = scmp.ne.s32.totalorder %s188, %s190
      %p197 = scmp.eq.s32.totalorder %s33, 2
      %p198 = por %p196, %p197
      %p199 = scmp.ne.s32.totalorder %s190, %s191
      %p200 = scmp.eq.s32.totalorder %s33, 0
      %p201 = por %p199, %p200
      %p202 = scmp.ne.s32.totalorder %s190, %s191
      %p203 = scmp.eq.s32.totalorder %s34, 2
      %p204 = por %p202, %p203
      %p206 = scmp.ne.s32.totalorder %s191, %s205
      %p207 = scmp.eq.s32.totalorder %s34, 0
      %p208 = por %p206, %p207
      %s209 = ssub.s32 %s28, %s35
      %p210 = scmp.eq.s32.totalorder %s209, 0
      %s212 = sadd.s32 %s211, 1
      %s213 = scalar_select %p210, %s211, %s212
      %p216 = pneg %p210
      %p217 = scmp.eq.s32.totalorder %s28, 2
      %p218 = por %p216, %p217
      %p219 = scmp.ne.s32.totalorder %s211, %s214
      %p220 = scmp.eq.s32.totalorder %s28, 0
      %p221 = por %p219, %p220
      %p222 = scmp.ne.s32.totalorder %s211, %s214
      %p223 = scmp.eq.s32.totalorder %s33, 2
      %p224 = por %p222, %p223
      %p225 = scmp.ne.s32.totalorder %s214, %s215
      %p226 = scmp.eq.s32.totalorder %s33, 0
      %p227 = por %p225, %p226
      %p228 = scmp.ne.s32.totalorder %s214, %s215
      %p229 = scmp.eq.s32.totalorder %s34, 2
      %p230 = por %p228, %p229
      %p232 = scmp.ne.s32.totalorder %s215, %s231
      %p233 = scmp.eq.s32.totalorder %s34, 0
      %p234 = por %p232, %p233
      %s235 = ssub.s32 %s28, %s35
      %p236 = scmp.eq.s32.totalorder %s235, 0
      %s238 = sadd.s32 %s237, 1
      %s239 = scalar_select %p236, %s237, %s238
      %p242 = pneg %p236
      %p243 = scmp.eq.s32.totalorder %s28, 2
      %p244 = por %p242, %p243
      %p245 = scmp.ne.s32.totalorder %s237, %s240
      %p246 = scmp.eq.s32.totalorder %s28, 0
      %p247 = por %p245, %p246
      %p248 = scmp.ne.s32.totalorder %s237, %s240
      %p249 = scmp.eq.s32.totalorder %s33, 2
      %p250 = por %p248, %p249
      %p251 = scmp.ne.s32.totalorder %s240, %s241
      %p252 = scmp.eq.s32.totalorder %s33, 0
      %p253 = por %p251, %p252
      %p254 = scmp.ne.s32.totalorder %s240, %s241
      %p255 = scmp.eq.s32.totalorder %s34, 2
      %p256 = por %p254, %p255
      %p258 = scmp.ne.s32.totalorder %s241, %s257
      %p259 = scmp.eq.s32.totalorder %s34, 0
      %p260 = por %p258, %p259
      %p261 = scmp.le.s32.totalorder 1, %s28
      %p262 = scmp.lt.s32.totalorder %s28, 4
      %p263 = pnand %p261, %p262
      %p264 = pneg %p263
      // Predicated region
      $region9: #{tpu_custom_call.1} parent=5 // pred_check
        _
      $region10: #{tpu_custom_call.1} parent=5 // pred_check_branch
        %266 = sbr.rel (%p263) target = $region12
      $region11: #{tpu_custom_call.1} parent=5 // pred_region
        %s267 = ssub.s32 %s28, 1
        // Predicated region
        $region13: #{tpu_custom_call.1} parent=11 // pred_check
          %p268 = pneg %p75
        $region14: #{tpu_custom_call.1} parent=11 // pred_check_branch
          %270 = sbr.rel (%p268) target = $region16
        $region15: #{tpu_custom_call.1} parent=11 // pred_region
          %s272 = ssub.s32 1024, 1024
          %273 = vsyncadd [#allocation6], %s272
          %s274 = sshll.u32 [#allocation5], 4
          %s275 = int_to_ptr.vmem [resolvable:$true] %s274
          %280 = dma.hbm_to_vmem [thread:$0]  %s1, 1024, %s275, [#allocation6], 64, 64, 4
        $region16: #{tpu_custom_call.1} parent=11 // pred_fallthru
          _
        // Predicated region
        $region17: #{tpu_custom_call.1} parent=11 // pred_check
          %p281 = pneg %p96
        $region18: #{tpu_custom_call.1} parent=11 // pred_check_branch
          %283 = sbr.rel (%p281) target = $region20
        $region19: #{tpu_custom_call.1} parent=11 // pred_region
          %s285 = ssub.s32 1024, 1024
          %286 = vsyncadd [#allocation6], %s285
          %s287 = sshll.u32 [#allocation7], 4
          %s288 = int_to_ptr.vmem [resolvable:$true] %s287
          %293 = dma.hbm_to_vmem [thread:$0]  %s2, 1024, %s288, [#allocation6], 64, 64, 4
        $region20: #{tpu_custom_call.1} parent=11 // pred_fallthru
          _
        // Predicated region
        $region21: #{tpu_custom_call.1} parent=11 // pred_check
          %p294 = pneg %p117
        $region22: #{tpu_custom_call.1} parent=11 // pred_check_branch
          %296 = sbr.rel (%p294) target = $region24
        $region23: #{tpu_custom_call.1} parent=11 // pred_region
          %s298 = ssub.s32 1024, 1024
          %299 = vsyncadd [#allocation9], %s298
          %s300 = sshll.u32 [#allocation8], 4
          %s301 = int_to_ptr.vmem [resolvable:$true] %s300
          %306 = dma.hbm_to_vmem [thread:$0]  %s3, 1024, %s301, [#allocation9], 64, 64, 4
        $region24: #{tpu_custom_call.1} parent=11 // pred_fallthru
          _
        // Predicated region
        $region25: #{tpu_custom_call.1} parent=11 // pred_check
          %p307 = pneg %p138
        $region26: #{tpu_custom_call.1} parent=11 // pred_check_branch
          %309 = sbr.rel (%p307) target = $region28
        $region27: #{tpu_custom_call.1} parent=11 // pred_region
          %s311 = ssub.s32 1024, 1024
          %312 = vsyncadd [#allocation9], %s311
          %s313 = sshll.u32 [#allocation10], 4
          %s314 = int_to_ptr.vmem [resolvable:$true] %s313
          %319 = dma.hbm_to_vmem [thread:$0]  %s4, 1024, %s314, [#allocation9], 64, 64, 4
        $region28: #{tpu_custom_call.1} parent=11 // pred_fallthru
          _
        // Predicated region
        $region29: #{tpu_custom_call.1} parent=11 // pred_check
          %p320 = pneg %p159
        $region30: #{tpu_custom_call.1} parent=11 // pred_check_branch
          %322 = sbr.rel (%p320) target = $region32
        $region31: #{tpu_custom_call.1} parent=11 // pred_region
          %s324 = ssub.s32 1024, 1024
          %325 = vsyncadd [#allocation12], %s324
          %s326 = sshll.u32 [#allocation11], 4
          %s327 = int_to_ptr.vmem [resolvable:$true] %s326
          %332 = dma.hbm_to_vmem [thread:$0]  %s5, 1024, %s327, [#allocation12], 64, 64, 4
        $region32: #{tpu_custom_call.1} parent=11 // pred_fallthru
          _
        // Predicated region
        $region33: #{tpu_custom_call.1} parent=11 // pred_check
          %p333 = pneg %p180
        $region34: #{tpu_custom_call.1} parent=11 // pred_check_branch
          %335 = sbr.rel (%p333) target = $region36
        $region35: #{tpu_custom_call.1} parent=11 // pred_region
          %s337 = ssub.s32 1024, 1024
          %338 = vsyncadd [#allocation12], %s337
          %s339 = sshll.u32 [#allocation13], 4
          %s340 = int_to_ptr.vmem [resolvable:$true] %s339
          %345 = dma.hbm_to_vmem [thread:$0]  %s6, 1024, %s340, [#allocation12], 64, 64, 4
        $region36: #{tpu_custom_call.1} parent=11 // pred_fallthru
          _
        // Predicated region
        $region37: #{tpu_custom_call.1} parent=11 // pred_check
          %p346 = pneg %p201
        $region38: #{tpu_custom_call.1} parent=11 // pred_check_branch
          %348 = sbr.rel (%p346) target = $region40
        $region39: #{tpu_custom_call.1} parent=11 // pred_region
          _
        $region40: #{tpu_custom_call.1} parent=11 // pred_fallthru
          _
      $region12: #{tpu_custom_call.1} parent=5 // pred_fallthru
        _
      %p349 = scmp.lt.s32.totalorder %s28, 3
      // Predicated region
      $region41: #{tpu_custom_call.1} parent=5 // pred_check
        %p350 = pneg %p349
      $region42: #{tpu_custom_call.1} parent=5 // pred_check_branch
        %352 = sbr.rel (%p350) target = $region44
      $region43: #{tpu_custom_call.1} parent=5 // pred_region
        // Predicated region
        $region45: #{tpu_custom_call.1} parent=43 // pred_check
          %p353 = pneg %p48
        $region46: #{tpu_custom_call.1} parent=43 // pred_check_branch
          %355 = sbr.rel (%p353) target = $region48
        $region47: #{tpu_custom_call.1} parent=43 // pred_region
          %s356 = sand.u32 %s38, 1
          %s357 = scalar_lea.sflag [#allocation3], %s356
          %s358 = sand.u32 %s38, 1
          %s359 = smul.addr %s358, 64
          %s360 = scalar_lea.vmem [#allocation2], %s359
          %s361 = smul.u32 16, %s28
          %s363 = ssub.s32 1024, 1024
          %364 = vsyncadd %s357, %s363
          %s365 = smul.addr %s361, 64
          %s366 = scalar_lea.hbm %s0, %s365
          %s367 = sshll.u32 %s360, 4
          %s368 = int_to_ptr.vmem [resolvable:$true] %s367
          %373 = dma.hbm_to_vmem [thread:$0]  %s366, 1024, %s368, %s357, 64, 64, 4
        $region48: #{tpu_custom_call.1} parent=43 // pred_fallthru
          _
      $region44: #{tpu_custom_call.1} parent=5 // pred_fallthru
        _
      %p374 = scmp.le.s32.totalorder 1, %s28
      %p375 = scmp.lt.s32.totalorder %s28, 4
      %p376 = pnand %p374, %p375
      %p377 = pneg %p376
      // Predicated region
      $region49: #{tpu_custom_call.1} parent=5 // pred_check
        _
      $region50: #{tpu_custom_call.1} parent=5 // pred_check_branch
        %379 = sbr.rel (%p376) target = $region52
      $region51: #{tpu_custom_call.1} parent=5 // pred_region
        %s380 = ssub.s32 %s28, 1
        %s381 = sand.u32 %s41, 1
        %s382 = scalar_lea.sflag [#allocation3], %s381
        %s383 = sand.u32 %s41, 1
        %s384 = smul.addr %s383, 64
        %s385 = scalar_lea.vmem [#allocation2], %s384
        // Predicated region
        $region53: #{tpu_custom_call.1} parent=51 // pred_check
          %p386 = pneg %p54
        $region54: #{tpu_custom_call.1} parent=51 // pred_check_branch
          %388 = sbr.rel (%p386) target = $region56
        $region55: #{tpu_custom_call.1} parent=51 // pred_region
          %389 = dma.done %s382, 1024
        $region56: #{tpu_custom_call.1} parent=51 // pred_fallthru
          _
        // Predicated region
        $region57: #{tpu_custom_call.1} parent=51 // pred_check
          %p390 = pneg %p75
        $region58: #{tpu_custom_call.1} parent=51 // pred_check_branch
          %392 = sbr.rel (%p390) target = $region60
        $region59: #{tpu_custom_call.1} parent=51 // pred_region
          %393 = dma.done [#allocation6], 1024
        $region60: #{tpu_custom_call.1} parent=51 // pred_fallthru
          _
        // Predicated region
        $region61: #{tpu_custom_call.1} parent=51 // pred_check
          %p394 = pneg %p96
        $region62: #{tpu_custom_call.1} parent=51 // pred_check_branch
          %396 = sbr.rel (%p394) target = $region64
        $region63: #{tpu_custom_call.1} parent=51 // pred_region
          %397 = dma.done [#allocation6], 1024
        $region64: #{tpu_custom_call.1} parent=51 // pred_fallthru
          _
        // Predicated region
        $region65: #{tpu_custom_call.1} parent=51 // pred_check
          %p398 = pneg %p117
        $region66: #{tpu_custom_call.1} parent=51 // pred_check_branch
          %400 = sbr.rel (%p398) target = $region68
        $region67: #{tpu_custom_call.1} parent=51 // pred_region
          %401 = dma.done [#allocation9], 1024
        $region68: #{tpu_custom_call.1} parent=51 // pred_fallthru
          _
        // Predicated region
        $region69: #{tpu_custom_call.1} parent=51 // pred_check
          %p402 = pneg %p138
        $region70: #{tpu_custom_call.1} parent=51 // pred_check_branch
          %404 = sbr.rel (%p402) target = $region72
        $region71: #{tpu_custom_call.1} parent=51 // pred_region
          %405 = dma.done [#allocation9], 1024
        $region72: #{tpu_custom_call.1} parent=51 // pred_fallthru
          _
        // Predicated region
        $region73: #{tpu_custom_call.1} parent=51 // pred_check
          %p406 = pneg %p159
        $region74: #{tpu_custom_call.1} parent=51 // pred_check_branch
          %408 = sbr.rel (%p406) target = $region76
        $region75: #{tpu_custom_call.1} parent=51 // pred_region
          %409 = dma.done [#allocation12], 1024
        $region76: #{tpu_custom_call.1} parent=51 // pred_fallthru
          _
        // Predicated region
        $region77: #{tpu_custom_call.1} parent=51 // pred_check
          %p410 = pneg %p180
        $region78: #{tpu_custom_call.1} parent=51 // pred_check_branch
          %412 = sbr.rel (%p410) target = $region80
        $region79: #{tpu_custom_call.1} parent=51 // pred_region
          %413 = dma.done [#allocation12], 1024
        $region80: #{tpu_custom_call.1} parent=51 // pred_fallthru
          _
        %s414 = sand.u32 %s41, 1
        %s415 = scalar_lea.sflag [#allocation3], %s414
        %s416 = sand.u32 %s41, 1
        %s417 = smul.addr %s416, 64
        %s418 = scalar_lea.vmem [#allocation2], %s417
        %p419 = pneg %p54
        %p420 = pneg %p51
        %p421 = pneg %p75
        %p422 = pneg %p72
        %p423 = pneg %p96
        %p424 = pneg %p93
        %p425 = pneg %p117
        %p426 = pneg %p114
        %p427 = pneg %p138
        %p428 = pneg %p135
        %p429 = pneg %p159
        %p430 = pneg %p156
        %p431 = pneg %p180
        %p432 = pneg %p177
        %p433 = pneg %p201
        %p434 = pneg %p198
        %p435 = pneg %p227
        %p436 = pneg %p224
        %s437 = sand.u32 %s214, 1
        %s438 = scalar_lea.sflag [#allocation4], %s437
        %s439 = sand.u32 %s214, 1
        %s440 = smul.addr %s439, 128
        %s441 = scalar_lea.vmem [#allocation14], %s440
        %p442 = pneg %p253
        %p443 = pneg %p250
        %s444 = sand.u32 %s240, 1
        %s445 = scalar_lea.sflag [#allocation16], %s444
        %s446 = sand.u32 %s240, 1
        %s447 = smul.addr %s446, 128
        %s448 = scalar_lea.vmem [#allocation15], %s447
        %s449 = smul.u32 16, %s33
        %s450 = smul.u32 16, %s33
        %s451 = smul.u32 16, %s33
        %v453 = vld [vmem:[%s7] sm:$0x3f]
        %v454 = vld [vmem:[%s385] sm:$0xf]
        %v455 = vld [vmem:[%s385 + $0x4] sm:$0xf]
        %v456 = vld [vmem:[%s385 + $0x8] sm:$0xf]
        %v457 = vld [vmem:[%s385 + $0xc] sm:$0xf]
        %v458 = vld [vmem:[%s385 + $0x10] sm:$0xf]
        %v459 = vld [vmem:[%s385 + $0x14] sm:$0xf]
        %v460 = vld [vmem:[%s385 + $0x18] sm:$0xf]
        %v461 = vld [vmem:[%s385 + $0x1c] sm:$0xf]
        %v462 = vld [vmem:[%s385 + $0x20] sm:$0xf]
        %v463 = vld [vmem:[%s385 + $0x24] sm:$0xf]
        %v464 = vld [vmem:[%s385 + $0x28] sm:$0xf]
        %v465 = vld [vmem:[%s385 + $0x2c] sm:$0xf]
        %v466 = vld [vmem:[%s385 + $0x30] sm:$0xf]
        %v467 = vld [vmem:[%s385 + $0x34] sm:$0xf]
        %v468 = vld [vmem:[%s385 + $0x38] sm:$0xf]
        %v469 = vld [vmem:[%s385 + $0x3c] sm:$0xf]
        %v470 = vld [vmem:[#allocation5] sm:$0xf]
        %v471 = vld [vmem:[#allocation5 + $0x4] sm:$0xf]
        %v472 = vld [vmem:[#allocation5 + $0x8] sm:$0xf]
        %v473 = vld [vmem:[#allocation5 + $0xc] sm:$0xf]
        %v474 = vld [vmem:[#allocation5 + $0x10] sm:$0xf]
        %v475 = vld [vmem:[#allocation5 + $0x14] sm:$0xf]
        %v476 = vld [vmem:[#allocation5 + $0x18] sm:$0xf]
        %v477 = vld [vmem:[#allocation5 + $0x1c] sm:$0xf]
        %v478 = vld [vmem:[#allocation5 + $0x20] sm:$0xf]
        %v479 = vld [vmem:[#allocation5 + $0x24] sm:$0xf]
        %v480 = vld [vmem:[#allocation5 + $0x28] sm:$0xf]
        %v481 = vld [vmem:[#allocation5 + $0x2c] sm:$0xf]
        %v482 = vld [vmem:[#allocation5 + $0x30] sm:$0xf]
        %v483 = vld [vmem:[#allocation5 + $0x34] sm:$0xf]
        %v484 = vld [vmem:[#allocation5 + $0x38] sm:$0xf]
        %v485 = vld [vmem:[#allocation5 + $0x3c] sm:$0xf]
        %v486 = vlaneseq
        %v487 = vshrl.u32 %v486, 7
        %v488 = vsub.s32 0, %v487
        %v489 = vrot.slane %v453, %v488
        %v506 = vunpack.c.l.b16 %v454
        %v507 = vunpack.c.l.b16 %v455
        %v508 = vunpack.c.l.b16 %v456
        %v509 = vunpack.c.l.b16 %v457
        %v510 = vunpack.c.l.b16 %v458
        %v511 = vunpack.c.l.b16 %v459
        %v512 = vunpack.c.l.b16 %v460
        %v513 = vunpack.c.l.b16 %v461
        %v514 = vunpack.c.l.b16 %v462
        %v515 = vunpack.c.l.b16 %v463
        %v516 = vunpack.c.l.b16 %v464
        %v517 = vunpack.c.l.b16 %v465
        %v518 = vunpack.c.l.b16 %v466
        %v519 = vunpack.c.l.b16 %v467
        %v520 = vunpack.c.l.b16 %v468
        %v521 = vunpack.c.l.b16 %v469
        %v522 = vpack.c.b16 %v507, %v506
        %v523 = vpack.c.b16 %v509, %v508
        %v524 = vpack.c.b16 %v511, %v510
        %v525 = vpack.c.b16 %v513, %v512
        %v526 = vpack.c.b16 %v515, %v514
        %v527 = vpack.c.b16 %v517, %v516
        %v528 = vpack.c.b16 %v519, %v518
        %v529 = vpack.c.b16 %v521, %v520
        %v554 = vunpack.c.l.b16 %v470
        %v555 = vunpack.c.l.b16 %v471
        %v556 = vunpack.c.l.b16 %v472
        %v557 = vunpack.c.l.b16 %v473
        %v558 = vunpack.c.l.b16 %v474
        %v559 = vunpack.c.l.b16 %v475
        %v560 = vunpack.c.l.b16 %v476
        %v561 = vunpack.c.l.b16 %v477
        %v562 = vunpack.c.l.b16 %v478
        %v563 = vunpack.c.l.b16 %v479
        %v564 = vunpack.c.l.b16 %v480
        %v565 = vunpack.c.l.b16 %v481
        %v566 = vunpack.c.l.b16 %v482
        %v567 = vunpack.c.l.b16 %v483
        %v568 = vunpack.c.l.b16 %v484
        %v569 = vunpack.c.l.b16 %v485
        %v570 = vpack.c.b16 %v555, %v554
        %v571 = vpack.c.b16 %v557, %v556
        %v572 = vpack.c.b16 %v559, %v558
        %v573 = vpack.c.b16 %v561, %v560
        %v574 = vpack.c.b16 %v563, %v562
        %v575 = vpack.c.b16 %v565, %v564
        %v576 = vpack.c.b16 %v567, %v566
        %v577 = vpack.c.b16 %v569, %v568
        %586 = vmatprep.subr.bf16.mxu0 0
        %587 = vmatpush1.bf16.msra.mxu0 %v570
        %588 = vmatprep.subr.bf16.mxu0 0
        %589 = vmatpush1.bf16.msra.mxu0 %v571
        %590 = vmatprep.subr.bf16.mxu0 0
        %591 = vmatpush1.bf16.msra.mxu0 %v572
        %592 = vmatprep.subr.bf16.mxu0 0
        %593 = vmatpush1.bf16.msra.mxu0 %v573
        %594 = vmatprep.subr.bf16.mxu0 0
        %595 = vmatpush1.bf16.msra.mxu0 %v574
        %596 = vmatprep.subr.bf16.mxu0 0
        %597 = vmatpush1.bf16.msra.mxu0 %v575
        %598 = vmatprep.subr.bf16.mxu0 0
        %599 = vmatpush1.bf16.msra.mxu0 %v576
        %600 = vmatprep.subr.bf16.mxu0 0
        %601 = vmatpush1.bf16.msra.mxu0 %v577
        %602 = vmatprep.subr.bf16.mxu0 0
        %603 = vmatpush1.bf16.msra.mxu0 0
        %604 = vmatprep.subr.bf16.mxu0 0
        %605 = vmatpush1.bf16.msra.mxu0 0
        %606 = vmatprep.subr.bf16.mxu0 0
        %607 = vmatpush1.bf16.msra.mxu0 0
        %608 = vmatprep.subr.bf16.mxu0 0
        %609 = vmatpush1.bf16.msra.mxu0 0
        %610 = vmatprep.subr.bf16.mxu0 0
        %611 = vmatpush1.bf16.msra.mxu0 0
        %612 = vmatprep.subr.bf16.mxu0 0
        %613 = vmatpush1.bf16.msra.mxu0 0
        %614 = vmatprep.subr.bf16.mxu0 0
        %615 = vmatpush1.bf16.msra.mxu0 0
        %616 = vmatprep.subr.bf16.mxu0 0
        %617 = vmatpush1.bf16.msra.mxu0 0
        %618 = vmatprep.mubr.bf16.mxu0 0
        %619 = vmatmul.mubr.bf16.gmra.mrb[0].mxu0 %v522
        %v620 = vpop.f32.mrb[0].mxu0
        %v621 = vadd.f32 %v489, %v620
        %v622 = vpop.f32.mrb[0].mxu0
        %v623 = vpop.f32.mrb[0].mxu0
        %v624 = vadd.f32 %v489, %v623
        %v625 = vpop.f32.mrb[0].mxu0
        %626 = vmatprep.mubr.bf16.mxu0 0
        %627 = vmatmul.mubr.bf16.gmra.mrb[0].mxu0 %v523
        %v628 = vpop.f32.mrb[0].mxu0
        %v629 = vadd.f32 %v489, %v628
        %v630 = vpop.f32.mrb[0].mxu0
        %v631 = vpop.f32.mrb[0].mxu0
        %v632 = vadd.f32 %v489, %v631
        %v633 = vpop.f32.mrb[0].mxu0
        %634 = vmatprep.mubr.bf16.mxu0 0
        %635 = vmatmul.mubr.bf16.gmra.mrb[0].mxu0 %v524
        %v636 = vpop.f32.mrb[0].mxu0
        %v637 = vadd.f32 %v489, %v636
        %v638 = vpop.f32.mrb[0].mxu0
        %v639 = vpop.f32.mrb[0].mxu0
        %v640 = vadd.f32 %v489, %v639
        %v641 = vpop.f32.mrb[0].mxu0
        %642 = vmatprep.mubr.bf16.mxu0 0
        %643 = vmatmul.mubr.bf16.gmra.mrb[0].mxu0 %v525
        %v644 = vpop.f32.mrb[0].mxu0
        %v645 = vadd.f32 %v489, %v644
        %v646 = vpop.f32.mrb[0].mxu0
        %v647 = vpop.f32.mrb[0].mxu0
        %v648 = vadd.f32 %v489, %v647
        %v649 = vpop.f32.mrb[0].mxu0
        %650 = vmatprep.mubr.bf16.mxu0 0
        %651 = vmatmul.mubr.bf16.gmra.mrb[0].mxu0 %v526
        %v652 = vpop.f32.mrb[0].mxu0
        %v653 = vadd.f32 %v489, %v652
        %v654 = vpop.f32.mrb[0].mxu0
        %v655 = vpop.f32.mrb[0].mxu0
        %v656 = vadd.f32 %v489, %v655
        %v657 = vpop.f32.mrb[0].mxu0
        %658 = vmatprep.mubr.bf16.mxu0 0
        %659 = vmatmul.mubr.bf16.gmra.mrb[0].mxu0 %v527
        %v660 = vpop.f32.mrb[0].mxu0
        %v661 = vadd.f32 %v489, %v660
        %v662 = vpop.f32.mrb[0].mxu0
        %v663 = vpop.f32.mrb[0].mxu0
        %v664 = vadd.f32 %v489, %v663
        %v665 = vpop.f32.mrb[0].mxu0
        %666 = vmatprep.mubr.bf16.mxu0 0
        %667 = vmatmul.mubr.bf16.gmra.mrb[0].mxu0 %v528
        %v668 = vpop.f32.mrb[0].mxu0
        %v669 = vadd.f32 %v489, %v668
        %v670 = vpop.f32.mrb[0].mxu0
        %v671 = vpop.f32.mrb[0].mxu0
        %v672 = vadd.f32 %v489, %v671
        %v673 = vpop.f32.mrb[0].mxu0
        %674 = vmatprep.mubr.bf16.mxu0 0
        %675 = vmatmul.mubr.bf16.gmra.mrb[0].mxu0 %v529
        %v676 = vpop.f32.mrb[0].mxu0
        %v677 = vadd.f32 %v489, %v676
        %v678 = vpop.f32.mrb[0].mxu0
        %v679 = vpop.f32.mrb[0].mxu0
        %v680 = vadd.f32 %v489, %v679
        %v681 = vpop.f32.mrb[0].mxu0
        %682 = vdwg.mxu0
        %v683 = vmax.f32 %v621, 0.0
        %v684 = vmax.f32 %v624, 0.0
        %v685 = vmax.f32 %v629, 0.0
        %v686 = vmax.f32 %v632, 0.0
        %v687 = vmax.f32 %v637, 0.0
        %v688 = vmax.f32 %v640, 0.0
        %v689 = vmax.f32 %v645, 0.0
        %v690 = vmax.f32 %v648, 0.0
        %v691 = vmax.f32 %v653, 0.0
        %v692 = vmax.f32 %v656, 0.0
        %v693 = vmax.f32 %v661, 0.0
        %v694 = vmax.f32 %v664, 0.0
        %v695 = vmax.f32 %v669, 0.0
        %v696 = vmax.f32 %v672, 0.0
        %v697 = vmax.f32 %v677, 0.0
        %v698 = vmax.f32 %v680, 0.0
        %v699 = vpack.c.bf16 %v684, %v683
        %v700 = vpack.c.bf16 %v686, %v685
        %v701 = vpack.c.bf16 %v688, %v687
        %v702 = vpack.c.bf16 %v690, %v689
        %v703 = vpack.c.bf16 %v692, %v691
        %v704 = vpack.c.bf16 %v694, %v693
        %v705 = vpack.c.bf16 %v696, %v695
        %v706 = vpack.c.bf16 %v698, %v697
        %v707 = vld [vmem:[#allocation7] sm:$0xf]
        %v708 = vld [vmem:[#allocation7 + $0x4] sm:$0xf]
        %v709 = vld [vmem:[#allocation7 + $0x8] sm:$0xf]
        %v710 = vld [vmem:[#allocation7 + $0xc] sm:$0xf]
        %v711 = vld [vmem:[#allocation7 + $0x10] sm:$0xf]
        %v712 = vld [vmem:[#allocation7 + $0x14] sm:$0xf]
        %v713 = vld [vmem:[#allocation7 + $0x18] sm:$0xf]
        %v714 = vld [vmem:[#allocation7 + $0x1c] sm:$0xf]
        %v715 = vld [vmem:[#allocation7 + $0x20] sm:$0xf]
        %v716 = vld [vmem:[#allocation7 + $0x24] sm:$0xf]
        %v717 = vld [vmem:[#allocation7 + $0x28] sm:$0xf]
        %v718 = vld [vmem:[#allocation7 + $0x2c] sm:$0xf]
        %v719 = vld [vmem:[#allocation7 + $0x30] sm:$0xf]
        %v720 = vld [vmem:[#allocation7 + $0x34] sm:$0xf]
        %v721 = vld [vmem:[#allocation7 + $0x38] sm:$0xf]
        %v722 = vld [vmem:[#allocation7 + $0x3c] sm:$0xf]
        %v723 = vlaneseq
        %v724 = vshrl.u32 %v723, 7
        %v725 = vsub.s32 1, %v724
        %v726 = vrot.slane %v453, %v725
        %v743 = vunpack.c.l.b16 %v707
        %v744 = vunpack.c.l.b16 %v708
        %v745 = vunpack.c.l.b16 %v709
        %v746 = vunpack.c.l.b16 %v710
        %v747 = vunpack.c.l.b16 %v711
        %v748 = vunpack.c.l.b16 %v712
        %v749 = vunpack.c.l.b16 %v713
        %v750 = vunpack.c.l.b16 %v714
        %v751 = vunpack.c.l.b16 %v715
        %v752 = vunpack.c.l.b16 %v716
        %v753 = vunpack.c.l.b16 %v717
        %v754 = vunpack.c.l.b16 %v718
        %v755 = vunpack.c.l.b16 %v719
        %v756 = vunpack.c.l.b16 %v720
        %v757 = vunpack.c.l.b16 %v721
        %v758 = vunpack.c.l.b16 %v722
        %v759 = vpack.c.b16 %v744, %v743
        %v760 = vpack.c.b16 %v746, %v745
        %v761 = vpack.c.b16 %v748, %v747
        %v762 = vpack.c.b16 %v750, %v749
        %v763 = vpack.c.b16 %v752, %v751
        %v764 = vpack.c.b16 %v754, %v753
        %v765 = vpack.c.b16 %v756, %v755
        %v766 = vpack.c.b16 %v758, %v757
        %775 = vmatprep.subr.bf16.mxu0 0
        %776 = vmatpush1.bf16.msra.mxu0 %v759
        %777 = vmatprep.subr.bf16.mxu0 0
        %778 = vmatpush1.bf16.msra.mxu0 %v760
        %779 = vmatprep.subr.bf16.mxu0 0
        %780 = vmatpush1.bf16.msra.mxu0 %v761
        %781 = vmatprep.subr.bf16.mxu0 0
        %782 = vmatpush1.bf16.msra.mxu0 %v762
        %783 = vmatprep.subr.bf16.mxu0 0
        %784 = vmatpush1.bf16.msra.mxu0 %v763
        %785 = vmatprep.subr.bf16.mxu0 0
        %786 = vmatpush1.bf16.msra.mxu0 %v764
        %787 = vmatprep.subr.bf16.mxu0 0
        %788 = vmatpush1.bf16.msra.mxu0 %v765
        %789 = vmatprep.subr.bf16.mxu0 0
        %790 = vmatpush1.bf16.msra.mxu0 %v766
        %791 = vmatprep.subr.bf16.mxu0 0
        %792 = vmatpush1.bf16.msra.mxu0 0
        %793 = vmatprep.subr.bf16.mxu0 0
        %794 = vmatpush1.bf16.msra.mxu0 0
        %795 = vmatprep.subr.bf16.mxu0 0
        %796 = vmatpush1.bf16.msra.mxu0 0
        %797 = vmatprep.subr.bf16.mxu0 0
        %798 = vmatpush1.bf16.msra.mxu0 0
        %799 = vmatprep.subr.bf16.mxu0 0
        %800 = vmatpush1.bf16.msra.mxu0 0
        %801 = vmatprep.subr.bf16.mxu0 0
        %802 = vmatpush1.bf16.msra.mxu0 0
        %803 = vmatprep.subr.bf16.mxu0 0
        %804 = vmatpush1.bf16.msra.mxu0 0
        %805 = vmatprep.subr.bf16.mxu0 0
        %806 = vmatpush1.bf16.msra.mxu0 0
        %807 = vmatprep.mubr.bf16.mxu0 0
        %808 = vmatmul.mubr.bf16.gmra.mrb[0].mxu0 %v699
        %v809 = vpop.f32.mrb[0].mxu0
        %v810 = vadd.f32 %v726, %v809
        %v811 = vpop.f32.mrb[0].mxu0
        %v812 = vpop.f32.mrb[0].mxu0
        %v813 = vadd.f32 %v726, %v812
        %v814 = vpop.f32.mrb[0].mxu0
        %815 = vmatprep.mubr.bf16.mxu0 0
        %816 = vmatmul.mubr.bf16.gmra.mrb[0].mxu0 %v700
        %v817 = vpop.f32.mrb[0].mxu0
        %v818 = vadd.f32 %v726, %v817
        %v819 = vpop.f32.mrb[0].mxu0
        %v820 = vpop.f32.mrb[0].mxu0
        %v821 = vadd.f32 %v726, %v820
        %v822 = vpop.f32.mrb[0].mxu0
        %823 = vmatprep.mubr.bf16.mxu0 0
        %824 = vmatmul.mubr.bf16.gmra.mrb[0].mxu0 %v701
        %v825 = vpop.f32.mrb[0].mxu0
        %v826 = vadd.f32 %v726, %v825
        %v827 = vpop.f32.mrb[0].mxu0
        %v828 = vpop.f32.mrb[0].mxu0
        %v829 = vadd.f32 %v726, %v828
        %v830 = vpop.f32.mrb[0].mxu0
        %831 = vmatprep.mubr.bf16.mxu0 0
        %832 = vmatmul.mubr.bf16.gmra.mrb[0].mxu0 %v702
        %v833 = vpop.f32.mrb[0].mxu0
        %v834 = vadd.f32 %v726, %v833
        %v835 = vpop.f32.mrb[0].mxu0
        %v836 = vpop.f32.mrb[0].mxu0
        %v837 = vadd.f32 %v726, %v836
        %v838 = vpop.f32.mrb[0].mxu0
        %839 = vmatprep.mubr.bf16.mxu0 0
        %840 = vmatmul.mubr.bf16.gmra.mrb[0].mxu0 %v703
        %v841 = vpop.f32.mrb[0].mxu0
        %v842 = vadd.f32 %v726, %v841
        %v843 = vpop.f32.mrb[0].mxu0
        %v844 = vpop.f32.mrb[0].mxu0
        %v845 = vadd.f32 %v726, %v844
        %v846 = vpop.f32.mrb[0].mxu0
        %847 = vmatprep.mubr.bf16.mxu0 0
        %848 = vmatmul.mubr.bf16.gmra.mrb[0].mxu0 %v704
        %v849 = vpop.f32.mrb[0].mxu0
        %v850 = vadd.f32 %v726, %v849
        %v851 = vpop.f32.mrb[0].mxu0
        %v852 = vpop.f32.mrb[0].mxu0
        %v853 = vadd.f32 %v726, %v852
        %v854 = vpop.f32.mrb[0].mxu0
        %855 = vmatprep.mubr.bf16.mxu0 0
        %856 = vmatmul.mubr.bf16.gmra.mrb[0].mxu0 %v705
        %v857 = vpop.f32.mrb[0].mxu0
        %v858 = vadd.f32 %v726, %v857
        %v859 = vpop.f32.mrb[0].mxu0
        %v860 = vpop.f32.mrb[0].mxu0
        %v861 = vadd.f32 %v726, %v860
        %v862 = vpop.f32.mrb[0].mxu0
        %863 = vmatprep.mubr.bf16.mxu0 0
        %864 = vmatmul.mubr.bf16.gmra.mrb[0].mxu0 %v706
        %v865 = vpop.f32.mrb[0].mxu0
        %v866 = vadd.f32 %v726, %v865
        %v867 = vpop.f32.mrb[0].mxu0
        %v868 = vpop.f32.mrb[0].mxu0
        %v869 = vadd.f32 %v726, %v868
        %v870 = vpop.f32.mrb[0].mxu0
        %871 = vdwg.mxu0
        %v872 = vmax.f32 %v810, 0.0
        %v873 = vmax.f32 %v813, 0.0
        %v874 = vmax.f32 %v818, 0.0
        %v875 = vmax.f32 %v821, 0.0
        %v876 = vmax.f32 %v826, 0.0
        %v877 = vmax.f32 %v829, 0.0
        %v878 = vmax.f32 %v834, 0.0
        %v879 = vmax.f32 %v837, 0.0
        %v880 = vmax.f32 %v842, 0.0
        %v881 = vmax.f32 %v845, 0.0
        %v882 = vmax.f32 %v850, 0.0
        %v883 = vmax.f32 %v853, 0.0
        %v884 = vmax.f32 %v858, 0.0
        %v885 = vmax.f32 %v861, 0.0
        %v886 = vmax.f32 %v866, 0.0
        %v887 = vmax.f32 %v869, 0.0
        %v888 = vpack.c.bf16 %v873, %v872
        %v889 = vpack.c.bf16 %v875, %v874
        %v890 = vpack.c.bf16 %v877, %v876
        %v891 = vpack.c.bf16 %v879, %v878
        %v892 = vpack.c.bf16 %v881, %v880
        %v893 = vpack.c.bf16 %v883, %v882
        %v894 = vpack.c.bf16 %v885, %v884
        %v895 = vpack.c.bf16 %v887, %v886
        %v896 = vld [vmem:[#allocation8] sm:$0xf]
        %v897 = vld [vmem:[#allocation8 + $0x4] sm:$0xf]
        %v898 = vld [vmem:[#allocation8 + $0x8] sm:$0xf]
        %v899 = vld [vmem:[#allocation8 + $0xc] sm:$0xf]
        %v900 = vld [vmem:[#allocation8 + $0x10] sm:$0xf]
        %v901 = vld [vmem:[#allocation8 + $0x14] sm:$0xf]
        %v902 = vld [vmem:[#allocation8 + $0x18] sm:$0xf]
        %v903 = vld [vmem:[#allocation8 + $0x1c] sm:$0xf]
        %v904 = vld [vmem:[#allocation8 + $0x20] sm:$0xf]
        %v905 = vld [vmem:[#allocation8 + $0x24] sm:$0xf]
        %v906 = vld [vmem:[#allocation8 + $0x28] sm:$0xf]
        %v907 = vld [vmem:[#allocation8 + $0x2c] sm:$0xf]
        %v908 = vld [vmem:[#allocation8 + $0x30] sm:$0xf]
        %v909 = vld [vmem:[#allocation8 + $0x34] sm:$0xf]
        %v910 = vld [vmem:[#allocation8 + $0x38] sm:$0xf]
        %v911 = vld [vmem:[#allocation8 + $0x3c] sm:$0xf]
        %v912 = vlaneseq
        %v913 = vshrl.u32 %v912, 7
        %v914 = vsub.s32 2, %v913
        %v915 = vrot.slane %v453, %v914
        %v932 = vunpack.c.l.b16 %v896
        %v933 = vunpack.c.l.b16 %v897
        %v934 = vunpack.c.l.b16 %v898
        %v935 = vunpack.c.l.b16 %v899
        %v936 = vunpack.c.l.b16 %v900
        %v937 = vunpack.c.l.b16 %v901
        %v938 = vunpack.c.l.b16 %v902
        %v939 = vunpack.c.l.b16 %v903
        %v940 = vunpack.c.l.b16 %v904
        %v941 = vunpack.c.l.b16 %v905
        %v942 = vunpack.c.l.b16 %v906
        %v943 = vunpack.c.l.b16 %v907
        %v944 = vunpack.c.l.b16 %v908
        %v945 = vunpack.c.l.b16 %v909
        %v946 = vunpack.c.l.b16 %v910
        %v947 = vunpack.c.l.b16 %v911
        %v948 = vpack.c.b16 %v933, %v932
        %v949 = vpack.c.b16 %v935, %v934
        %v950 = vpack.c.b16 %v937, %v936
        %v951 = vpack.c.b16 %v939, %v938
        %v952 = vpack.c.b16 %v941, %v940
        %v953 = vpack.c.b16 %v943, %v942
        %v954 = vpack.c.b16 %v945, %v944
        %v955 = vpack.c.b16 %v947, %v946
        %964 = vmatprep.subr.bf16.mxu0 0
        %965 = vmatpush1.bf16.msra.mxu0 %v948
        %966 = vmatprep.subr.bf16.mxu0 0
        %967 = vmatpush1.bf16.msra.mxu0 %v949
        %968 = vmatprep.subr.bf16.mxu0 0
        %969 = vmatpush1.bf16.msra.mxu0 %v950
        %970 = vmatprep.subr.bf16.mxu0 0
        %971 = vmatpush1.bf16.msra.mxu0 %v951
        %972 = vmatprep.subr.bf16.mxu0 0
        %973 = vmatpush1.bf16.msra.mxu0 %v952
        %974 = vmatprep.subr.bf16.mxu0 0
        %975 = vmatpush1.bf16.msra.mxu0 %v953
        %976 = vmatprep.subr.bf16.mxu0 0
        %977 = vmatpush1.bf16.msra.mxu0 %v954
        %978 = vmatprep.subr.bf16.mxu0 0
        %979 = vmatpush1.bf16.msra.mxu0 %v955
        %980 = vmatprep.subr.bf16.mxu0 0
        %981 = vmatpush1.bf16.msra.mxu0 0
        %982 = vmatprep.subr.bf16.mxu0 0
        %983 = vmatpush1.bf16.msra.mxu0 0
        %984 = vmatprep.subr.bf16.mxu0 0
        %985 = vmatpush1.bf16.msra.mxu0 0
        %986 = vmatprep.subr.bf16.mxu0 0
        %987 = vmatpush1.bf16.msra.mxu0 0
        %988 = vmatprep.subr.bf16.mxu0 0
        %989 = vmatpush1.bf16.msra.mxu0 0
        %990 = vmatprep.subr.bf16.mxu0 0
        %991 = vmatpush1.bf16.msra.mxu0 0
        %992 = vmatprep.subr.bf16.mxu0 0
        %993 = vmatpush1.bf16.msra.mxu0 0
        %994 = vmatprep.subr.bf16.mxu0 0
        %995 = vmatpush1.bf16.msra.mxu0 0
        %996 = vmatprep.mubr.bf16.mxu0 0
        %997 = vmatmul.mubr.bf16.gmra.mrb[0].mxu0 %v888
        %v998 = vpop.f32.mrb[0].mxu0
        %v999 = vadd.f32 %v915, %v998
        %v1000 = vpop.f32.mrb[0].mxu0
        %v1001 = vpop.f32.mrb[0].mxu0
        %v1002 = vadd.f32 %v915, %v1001
        %v1003 = vpop.f32.mrb[0].mxu0
        %1004 = vmatprep.mubr.bf16.mxu0 0
        %1005 = vmatmul.mubr.bf16.gmra.mrb[0].mxu0 %v889
        %v1006 = vpop.f32.mrb[0].mxu0
        %v1007 = vadd.f32 %v915, %v1006
        %v1008 = vpop.f32.mrb[0].mxu0
        %v1009 = vpop.f32.mrb[0].mxu0
        %v1010 = vadd.f32 %v915, %v1009
        %v1011 = vpop.f32.mrb[0].mxu0
        %1012 = vmatprep.mubr.bf16.mxu0 0
        %1013 = vmatmul.mubr.bf16.gmra.mrb[0].mxu0 %v890
        %v1014 = vpop.f32.mrb[0].mxu0
        %v1015 = vadd.f32 %v915, %v1014
        %v1016 = vpop.f32.mrb[0].mxu0
        %v1017 = vpop.f32.mrb[0].mxu0
        %v1018 = vadd.f32 %v915, %v1017
        %v1019 = vpop.f32.mrb[0].mxu0
        %1020 = vmatprep.mubr.bf16.mxu0 0
        %1021 = vmatmul.mubr.bf16.gmra.mrb[0].mxu0 %v891
        %v1022 = vpop.f32.mrb[0].mxu0
        %v1023 = vadd.f32 %v915, %v1022
        %v1024 = vpop.f32.mrb[0].mxu0
        %v1025 = vpop.f32.mrb[0].mxu0
        %v1026 = vadd.f32 %v915, %v1025
        %v1027 = vpop.f32.mrb[0].mxu0
        %1028 = vmatprep.mubr.bf16.mxu0 0
        %1029 = vmatmul.mubr.bf16.gmra.mrb[0].mxu0 %v892
        %v1030 = vpop.f32.mrb[0].mxu0
        %v1031 = vadd.f32 %v915, %v1030
        %v1032 = vpop.f32.mrb[0].mxu0
        %v1033 = vpop.f32.mrb[0].mxu0
        %v1034 = vadd.f32 %v915, %v1033
        %v1035 = vpop.f32.mrb[0].mxu0
        %1036 = vmatprep.mubr.bf16.mxu0 0
        %1037 = vmatmul.mubr.bf16.gmra.mrb[0].mxu0 %v893
        %v1038 = vpop.f32.mrb[0].mxu0
        %v1039 = vadd.f32 %v915, %v1038
        %v1040 = vpop.f32.mrb[0].mxu0
        %v1041 = vpop.f32.mrb[0].mxu0
        %v1042 = vadd.f32 %v915, %v1041
        %v1043 = vpop.f32.mrb[0].mxu0
        %1044 = vmatprep.mubr.bf16.mxu0 0
        %1045 = vmatmul.mubr.bf16.gmra.mrb[0].mxu0 %v894
        %v1046 = vpop.f32.mrb[0].mxu0
        %v1047 = vadd.f32 %v915, %v1046
        %v1048 = vpop.f32.mrb[0].mxu0
        %v1049 = vpop.f32.mrb[0].mxu0
        %v1050 = vadd.f32 %v915, %v1049
        %v1051 = vpop.f32.mrb[0].mxu0
        %1052 = vmatprep.mubr.bf16.mxu0 0
        %1053 = vmatmul.mubr.bf16.gmra.mrb[0].mxu0 %v895
        %v1054 = vpop.f32.mrb[0].mxu0
        %v1055 = vadd.f32 %v915, %v1054
        %v1056 = vpop.f32.mrb[0].mxu0
        %v1057 = vpop.f32.mrb[0].mxu0
        %v1058 = vadd.f32 %v915, %v1057
        %v1059 = vpop.f32.mrb[0].mxu0
        %1060 = vdwg.mxu0
        %1061 = vst [vmem:[%s441] sm:$0xff] %v999
        %1062 = vst [vmem:[%s441 + $0x8] sm:$0xff] %v1002
        %1063 = vst [vmem:[%s441 + $0x10] sm:$0xff] %v1007
        %1064 = vst [vmem:[%s441 + $0x18] sm:$0xff] %v1010
        %1065 = vst [vmem:[%s441 + $0x20] sm:$0xff] %v1015
        %1066 = vst [vmem:[%s441 + $0x28] sm:$0xff] %v1018
        %1067 = vst [vmem:[%s441 + $0x30] sm:$0xff] %v1023
        %1068 = vst [vmem:[%s441 + $0x38] sm:$0xff] %v1026
        %1069 = vst [vmem:[%s441 + $0x40] sm:$0xff] %v1031
        %1070 = vst [vmem:[%s441 + $0x48] sm:$0xff] %v1034
        %1071 = vst [vmem:[%s441 + $0x50] sm:$0xff] %v1039
        %1072 = vst [vmem:[%s441 + $0x58] sm:$0xff] %v1042
        %1073 = vst [vmem:[%s441 + $0x60] sm:$0xff] %v1047
        %1074 = vst [vmem:[%s441 + $0x68] sm:$0xff] %v1050
        %1075 = vst [vmem:[%s441 + $0x70] sm:$0xff] %v1055
        %1076 = vst [vmem:[%s441 + $0x78] sm:$0xff] %v1058
        %v1077 = vpack.c.bf16 %v1002, %v999
        %v1078 = vpack.c.bf16 %v1010, %v1007
        %v1079 = vpack.c.bf16 %v1018, %v1015
        %v1080 = vpack.c.bf16 %v1026, %v1023
        %v1081 = vpack.c.bf16 %v1034, %v1031
        %v1082 = vpack.c.bf16 %v1042, %v1039
        %v1083 = vpack.c.bf16 %v1050, %v1047
        %v1084 = vpack.c.bf16 %v1058, %v1055
        %v1085 = vld [vmem:[#allocation10] sm:$0xf]
        %v1086 = vld [vmem:[#allocation10 + $0x4] sm:$0xf]
        %v1087 = vld [vmem:[#allocation10 + $0x8] sm:$0xf]
        %v1088 = vld [vmem:[#allocation10 + $0xc] sm:$0xf]
        %v1089 = vld [vmem:[#allocation10 + $0x10] sm:$0xf]
        %v1090 = vld [vmem:[#allocation10 + $0x14] sm:$0xf]
        %v1091 = vld [vmem:[#allocation10 + $0x18] sm:$0xf]
        %v1092 = vld [vmem:[#allocation10 + $0x1c] sm:$0xf]
        %v1093 = vld [vmem:[#allocation10 + $0x20] sm:$0xf]
        %v1094 = vld [vmem:[#allocation10 + $0x24] sm:$0xf]
        %v1095 = vld [vmem:[#allocation10 + $0x28] sm:$0xf]
        %v1096 = vld [vmem:[#allocation10 + $0x2c] sm:$0xf]
        %v1097 = vld [vmem:[#allocation10 + $0x30] sm:$0xf]
        %v1098 = vld [vmem:[#allocation10 + $0x34] sm:$0xf]
        %v1099 = vld [vmem:[#allocation10 + $0x38] sm:$0xf]
        %v1100 = vld [vmem:[#allocation10 + $0x3c] sm:$0xf]
        %v1101 = vlaneseq
        %v1102 = vshrl.u32 %v1101, 7
        %v1103 = vsub.s32 3, %v1102
        %v1104 = vrot.slane %v453, %v1103
        %v1121 = vunpack.c.l.b16 %v1085
        %v1122 = vunpack.c.l.b16 %v1086
        %v1123 = vunpack.c.l.b16 %v1087
        %v1124 = vunpack.c.l.b16 %v1088
        %v1125 = vunpack.c.l.b16 %v1089
        %v1126 = vunpack.c.l.b16 %v1090
        %v1127 = vunpack.c.l.b16 %v1091
        %v1128 = vunpack.c.l.b16 %v1092
        %v1129 = vunpack.c.l.b16 %v1093
        %v1130 = vunpack.c.l.b16 %v1094
        %v1131 = vunpack.c.l.b16 %v1095
        %v1132 = vunpack.c.l.b16 %v1096
        %v1133 = vunpack.c.l.b16 %v1097
        %v1134 = vunpack.c.l.b16 %v1098
        %v1135 = vunpack.c.l.b16 %v1099
        %v1136 = vunpack.c.l.b16 %v1100
        %v1137 = vpack.c.b16 %v1122, %v1121
        %v1138 = vpack.c.b16 %v1124, %v1123
        %v1139 = vpack.c.b16 %v1126, %v1125
        %v1140 = vpack.c.b16 %v1128, %v1127
        %v1141 = vpack.c.b16 %v1130, %v1129
        %v1142 = vpack.c.b16 %v1132, %v1131
        %v1143 = vpack.c.b16 %v1134, %v1133
        %v1144 = vpack.c.b16 %v1136, %v1135
        %1153 = vmatprep.subr.bf16.mxu0 0
        %1154 = vmatpush1.bf16.msra.mxu0 %v1137
        %1155 = vmatprep.subr.bf16.mxu0 0
        %1156 = vmatpush1.bf16.msra.mxu0 %v1138
        %1157 = vmatprep.subr.bf16.mxu0 0
        %1158 = vmatpush1.bf16.msra.mxu0 %v1139
        %1159 = vmatprep.subr.bf16.mxu0 0
        %1160 = vmatpush1.bf16.msra.mxu0 %v1140
        %1161 = vmatprep.subr.bf16.mxu0 0
        %1162 = vmatpush1.bf16.msra.mxu0 %v1141
        %1163 = vmatprep.subr.bf16.mxu0 0
        %1164 = vmatpush1.bf16.msra.mxu0 %v1142
        %1165 = vmatprep.subr.bf16.mxu0 0
        %1166 = vmatpush1.bf16.msra.mxu0 %v1143
        %1167 = vmatprep.subr.bf16.mxu0 0
        %1168 = vmatpush1.bf16.msra.mxu0 %v1144
        %1169 = vmatprep.subr.bf16.mxu0 0
        %1170 = vmatpush1.bf16.msra.mxu0 0
        %1171 = vmatprep.subr.bf16.mxu0 0
        %1172 = vmatpush1.bf16.msra.mxu0 0
        %1173 = vmatprep.subr.bf16.mxu0 0
        %1174 = vmatpush1.bf16.msra.mxu0 0
        %1175 = vmatprep.subr.bf16.mxu0 0
        %1176 = vmatpush1.bf16.msra.mxu0 0
        %1177 = vmatprep.subr.bf16.mxu0 0
        %1178 = vmatpush1.bf16.msra.mxu0 0
        %1179 = vmatprep.subr.bf16.mxu0 0
        %1180 = vmatpush1.bf16.msra.mxu0 0
        %1181 = vmatprep.subr.bf16.mxu0 0
        %1182 = vmatpush1.bf16.msra.mxu0 0
        %1183 = vmatprep.subr.bf16.mxu0 0
        %1184 = vmatpush1.bf16.msra.mxu0 0
        %1185 = vmatprep.mubr.bf16.mxu0 0
        %1186 = vmatmul.mubr.bf16.gmra.mrb[0].mxu0 %v1077
        %v1187 = vpop.f32.mrb[0].mxu0
        %v1188 = vadd.f32 %v1104, %v1187
        %v1189 = vpop.f32.mrb[0].mxu0
        %v1190 = vpop.f32.mrb[0].mxu0
        %v1191 = vadd.f32 %v1104, %v1190
        %v1192 = vpop.f32.mrb[0].mxu0
        %1193 = vmatprep.mubr.bf16.mxu0 0
        %1194 = vmatmul.mubr.bf16.gmra.mrb[0].mxu0 %v1078
        %v1195 = vpop.f32.mrb[0].mxu0
        %v1196 = vadd.f32 %v1104, %v1195
        %v1197 = vpop.f32.mrb[0].mxu0
        %v1198 = vpop.f32.mrb[0].mxu0
        %v1199 = vadd.f32 %v1104, %v1198
        %v1200 = vpop.f32.mrb[0].mxu0
        %1201 = vmatprep.mubr.bf16.mxu0 0
        %1202 = vmatmul.mubr.bf16.gmra.mrb[0].mxu0 %v1079
        %v1203 = vpop.f32.mrb[0].mxu0
        %v1204 = vadd.f32 %v1104, %v1203
        %v1205 = vpop.f32.mrb[0].mxu0
        %v1206 = vpop.f32.mrb[0].mxu0
        %v1207 = vadd.f32 %v1104, %v1206
        %v1208 = vpop.f32.mrb[0].mxu0
        %1209 = vmatprep.mubr.bf16.mxu0 0
        %1210 = vmatmul.mubr.bf16.gmra.mrb[0].mxu0 %v1080
        %v1211 = vpop.f32.mrb[0].mxu0
        %v1212 = vadd.f32 %v1104, %v1211
        %v1213 = vpop.f32.mrb[0].mxu0
        %v1214 = vpop.f32.mrb[0].mxu0
        %v1215 = vadd.f32 %v1104, %v1214
        %v1216 = vpop.f32.mrb[0].mxu0
        %1217 = vmatprep.mubr.bf16.mxu0 0
        %1218 = vmatmul.mubr.bf16.gmra.mrb[0].mxu0 %v1081
        %v1219 = vpop.f32.mrb[0].mxu0
        %v1220 = vadd.f32 %v1104, %v1219
        %v1221 = vpop.f32.mrb[0].mxu0
        %v1222 = vpop.f32.mrb[0].mxu0
        %v1223 = vadd.f32 %v1104, %v1222
        %v1224 = vpop.f32.mrb[0].mxu0
        %1225 = vmatprep.mubr.bf16.mxu0 0
        %1226 = vmatmul.mubr.bf16.gmra.mrb[0].mxu0 %v1082
        %v1227 = vpop.f32.mrb[0].mxu0
        %v1228 = vadd.f32 %v1104, %v1227
        %v1229 = vpop.f32.mrb[0].mxu0
        %v1230 = vpop.f32.mrb[0].mxu0
        %v1231 = vadd.f32 %v1104, %v1230
        %v1232 = vpop.f32.mrb[0].mxu0
        %1233 = vmatprep.mubr.bf16.mxu0 0
        %1234 = vmatmul.mubr.bf16.gmra.mrb[0].mxu0 %v1083
        %v1235 = vpop.f32.mrb[0].mxu0
        %v1236 = vadd.f32 %v1104, %v1235
        %v1237 = vpop.f32.mrb[0].mxu0
        %v1238 = vpop.f32.mrb[0].mxu0
        %v1239 = vadd.f32 %v1104, %v1238
        %v1240 = vpop.f32.mrb[0].mxu0
        %1241 = vmatprep.mubr.bf16.mxu0 0
        %1242 = vmatmul.mubr.bf16.gmra.mrb[0].mxu0 %v1084
        %v1243 = vpop.f32.mrb[0].mxu0
        %v1244 = vadd.f32 %v1104, %v1243
        %v1245 = vpop.f32.mrb[0].mxu0
        %v1246 = vpop.f32.mrb[0].mxu0
        %v1247 = vadd.f32 %v1104, %v1246
        %v1248 = vpop.f32.mrb[0].mxu0
        %1249 = vdwg.mxu0
        %v1250 = vmax.f32 %v1188, 0.0
        %v1251 = vmax.f32 %v1191, 0.0
        %v1252 = vmax.f32 %v1196, 0.0
        %v1253 = vmax.f32 %v1199, 0.0
        %v1254 = vmax.f32 %v1204, 0.0
        %v1255 = vmax.f32 %v1207, 0.0
        %v1256 = vmax.f32 %v1212, 0.0
        %v1257 = vmax.f32 %v1215, 0.0
        %v1258 = vmax.f32 %v1220, 0.0
        %v1259 = vmax.f32 %v1223, 0.0
        %v1260 = vmax.f32 %v1228, 0.0
        %v1261 = vmax.f32 %v1231, 0.0
        %v1262 = vmax.f32 %v1236, 0.0
        %v1263 = vmax.f32 %v1239, 0.0
        %v1264 = vmax.f32 %v1244, 0.0
        %v1265 = vmax.f32 %v1247, 0.0
        %v1266 = vpack.c.bf16 %v1251, %v1250
        %v1267 = vpack.c.bf16 %v1253, %v1252
        %v1268 = vpack.c.bf16 %v1255, %v1254
        %v1269 = vpack.c.bf16 %v1257, %v1256
        %v1270 = vpack.c.bf16 %v1259, %v1258
        %v1271 = vpack.c.bf16 %v1261, %v1260
        %v1272 = vpack.c.bf16 %v1263, %v1262
        %v1273 = vpack.c.bf16 %v1265, %v1264
        %v1274 = vld [vmem:[#allocation11] sm:$0xf]
        %v1275 = vld [vmem:[#allocation11 + $0x4] sm:$0xf]
        %v1276 = vld [vmem:[#allocation11 + $0x8] sm:$0xf]
        %v1277 = vld [vmem:[#allocation11 + $0xc] sm:$0xf]
        %v1278 = vld [vmem:[#allocation11 + $0x10] sm:$0xf]
        %v1279 = vld [vmem:[#allocation11 + $0x14] sm:$0xf]
        %v1280 = vld [vmem:[#allocation11 + $0x18] sm:$0xf]
        %v1281 = vld [vmem:[#allocation11 + $0x1c] sm:$0xf]
        %v1282 = vld [vmem:[#allocation11 + $0x20] sm:$0xf]
        %v1283 = vld [vmem:[#allocation11 + $0x24] sm:$0xf]
        %v1284 = vld [vmem:[#allocation11 + $0x28] sm:$0xf]
        %v1285 = vld [vmem:[#allocation11 + $0x2c] sm:$0xf]
        %v1286 = vld [vmem:[#allocation11 + $0x30] sm:$0xf]
        %v1287 = vld [vmem:[#allocation11 + $0x34] sm:$0xf]
        %v1288 = vld [vmem:[#allocation11 + $0x38] sm:$0xf]
        %v1289 = vld [vmem:[#allocation11 + $0x3c] sm:$0xf]
        %v1290 = vlaneseq
        %v1291 = vshrl.u32 %v1290, 7
        %v1292 = vsub.s32 4, %v1291
        %v1293 = vrot.slane %v453, %v1292
        %v1310 = vunpack.c.l.b16 %v1274
        %v1311 = vunpack.c.l.b16 %v1275
        %v1312 = vunpack.c.l.b16 %v1276
        %v1313 = vunpack.c.l.b16 %v1277
        %v1314 = vunpack.c.l.b16 %v1278
        %v1315 = vunpack.c.l.b16 %v1279
        %v1316 = vunpack.c.l.b16 %v1280
        %v1317 = vunpack.c.l.b16 %v1281
        %v1318 = vunpack.c.l.b16 %v1282
        %v1319 = vunpack.c.l.b16 %v1283
        %v1320 = vunpack.c.l.b16 %v1284
        %v1321 = vunpack.c.l.b16 %v1285
        %v1322 = vunpack.c.l.b16 %v1286
        %v1323 = vunpack.c.l.b16 %v1287
        %v1324 = vunpack.c.l.b16 %v1288
        %v1325 = vunpack.c.l.b16 %v1289
        %v1326 = vpack.c.b16 %v1311, %v1310
        %v1327 = vpack.c.b16 %v1313, %v1312
        %v1328 = vpack.c.b16 %v1315, %v1314
        %v1329 = vpack.c.b16 %v1317, %v1316
        %v1330 = vpack.c.b16 %v1319, %v1318
        %v1331 = vpack.c.b16 %v1321, %v1320
        %v1332 = vpack.c.b16 %v1323, %v1322
        %v1333 = vpack.c.b16 %v1325, %v1324
        %1342 = vmatprep.subr.bf16.mxu0 0
        %1343 = vmatpush1.bf16.msra.mxu0 %v1326
        %1344 = vmatprep.subr.bf16.mxu0 0
        %1345 = vmatpush1.bf16.msra.mxu0 %v1327
        %1346 = vmatprep.subr.bf16.mxu0 0
        %1347 = vmatpush1.bf16.msra.mxu0 %v1328
        %1348 = vmatprep.subr.bf16.mxu0 0
        %1349 = vmatpush1.bf16.msra.mxu0 %v1329
        %1350 = vmatprep.subr.bf16.mxu0 0
        %1351 = vmatpush1.bf16.msra.mxu0 %v1330
        %1352 = vmatprep.subr.bf16.mxu0 0
        %1353 = vmatpush1.bf16.msra.mxu0 %v1331
        %1354 = vmatprep.subr.bf16.mxu0 0
        %1355 = vmatpush1.bf16.msra.mxu0 %v1332
        %1356 = vmatprep.subr.bf16.mxu0 0
        %1357 = vmatpush1.bf16.msra.mxu0 %v1333
        %1358 = vmatprep.subr.bf16.mxu0 0
        %1359 = vmatpush1.bf16.msra.mxu0 0
        %1360 = vmatprep.subr.bf16.mxu0 0
        %1361 = vmatpush1.bf16.msra.mxu0 0
        %1362 = vmatprep.subr.bf16.mxu0 0
        %1363 = vmatpush1.bf16.msra.mxu0 0
        %1364 = vmatprep.subr.bf16.mxu0 0
        %1365 = vmatpush1.bf16.msra.mxu0 0
        %1366 = vmatprep.subr.bf16.mxu0 0
        %1367 = vmatpush1.bf16.msra.mxu0 0
        %1368 = vmatprep.subr.bf16.mxu0 0
        %1369 = vmatpush1.bf16.msra.mxu0 0
        %1370 = vmatprep.subr.bf16.mxu0 0
        %1371 = vmatpush1.bf16.msra.mxu0 0
        %1372 = vmatprep.subr.bf16.mxu0 0
        %1373 = vmatpush1.bf16.msra.mxu0 0
        %1374 = vmatprep.mubr.bf16.mxu0 0
        %1375 = vmatmul.mubr.bf16.gmra.mrb[0].mxu0 %v1266
        %v1376 = vpop.f32.mrb[0].mxu0
        %v1377 = vadd.f32 %v1293, %v1376
        %v1378 = vpop.f32.mrb[0].mxu0
        %v1379 = vpop.f32.mrb[0].mxu0
        %v1380 = vadd.f32 %v1293, %v1379
        %v1381 = vpop.f32.mrb[0].mxu0
        %1382 = vmatprep.mubr.bf16.mxu0 0
        %1383 = vmatmul.mubr.bf16.gmra.mrb[0].mxu0 %v1267
        %v1384 = vpop.f32.mrb[0].mxu0
        %v1385 = vadd.f32 %v1293, %v1384
        %v1386 = vpop.f32.mrb[0].mxu0
        %v1387 = vpop.f32.mrb[0].mxu0
        %v1388 = vadd.f32 %v1293, %v1387
        %v1389 = vpop.f32.mrb[0].mxu0
        %1390 = vmatprep.mubr.bf16.mxu0 0
        %1391 = vmatmul.mubr.bf16.gmra.mrb[0].mxu0 %v1268
        %v1392 = vpop.f32.mrb[0].mxu0
        %v1393 = vadd.f32 %v1293, %v1392
        %v1394 = vpop.f32.mrb[0].mxu0
        %v1395 = vpop.f32.mrb[0].mxu0
        %v1396 = vadd.f32 %v1293, %v1395
        %v1397 = vpop.f32.mrb[0].mxu0
        %1398 = vmatprep.mubr.bf16.mxu0 0
        %1399 = vmatmul.mubr.bf16.gmra.mrb[0].mxu0 %v1269
        %v1400 = vpop.f32.mrb[0].mxu0
        %v1401 = vadd.f32 %v1293, %v1400
        %v1402 = vpop.f32.mrb[0].mxu0
        %v1403 = vpop.f32.mrb[0].mxu0
        %v1404 = vadd.f32 %v1293, %v1403
        %v1405 = vpop.f32.mrb[0].mxu0
        %1406 = vmatprep.mubr.bf16.mxu0 0
        %1407 = vmatmul.mubr.bf16.gmra.mrb[0].mxu0 %v1270
        %v1408 = vpop.f32.mrb[0].mxu0
        %v1409 = vadd.f32 %v1293, %v1408
        %v1410 = vpop.f32.mrb[0].mxu0
        %v1411 = vpop.f32.mrb[0].mxu0
        %v1412 = vadd.f32 %v1293, %v1411
        %v1413 = vpop.f32.mrb[0].mxu0
        %1414 = vmatprep.mubr.bf16.mxu0 0
        %1415 = vmatmul.mubr.bf16.gmra.mrb[0].mxu0 %v1271
        %v1416 = vpop.f32.mrb[0].mxu0
        %v1417 = vadd.f32 %v1293, %v1416
        %v1418 = vpop.f32.mrb[0].mxu0
        %v1419 = vpop.f32.mrb[0].mxu0
        %v1420 = vadd.f32 %v1293, %v1419
        %v1421 = vpop.f32.mrb[0].mxu0
        %1422 = vmatprep.mubr.bf16.mxu0 0
        %1423 = vmatmul.mubr.bf16.gmra.mrb[0].mxu0 %v1272
        %v1424 = vpop.f32.mrb[0].mxu0
        %v1425 = vadd.f32 %v1293, %v1424
        %v1426 = vpop.f32.mrb[0].mxu0
        %v1427 = vpop.f32.mrb[0].mxu0
        %v1428 = vadd.f32 %v1293, %v1427
        %v1429 = vpop.f32.mrb[0].mxu0
        %1430 = vmatprep.mubr.bf16.mxu0 0
        %1431 = vmatmul.mubr.bf16.gmra.mrb[0].mxu0 %v1273
        %v1432 = vpop.f32.mrb[0].mxu0
        %v1433 = vadd.f32 %v1293, %v1432
        %v1434 = vpop.f32.mrb[0].mxu0
        %v1435 = vpop.f32.mrb[0].mxu0
        %v1436 = vadd.f32 %v1293, %v1435
        %v1437 = vpop.f32.mrb[0].mxu0
        %1438 = vdwg.mxu0
        %v1439 = vmax.f32 %v1377, 0.0
        %v1440 = vmax.f32 %v1380, 0.0
        %v1441 = vmax.f32 %v1385, 0.0
        %v1442 = vmax.f32 %v1388, 0.0
        %v1443 = vmax.f32 %v1393, 0.0
        %v1444 = vmax.f32 %v1396, 0.0
        %v1445 = vmax.f32 %v1401, 0.0
        %v1446 = vmax.f32 %v1404, 0.0
        %v1447 = vmax.f32 %v1409, 0.0
        %v1448 = vmax.f32 %v1412, 0.0
        %v1449 = vmax.f32 %v1417, 0.0
        %v1450 = vmax.f32 %v1420, 0.0
        %v1451 = vmax.f32 %v1425, 0.0
        %v1452 = vmax.f32 %v1428, 0.0
        %v1453 = vmax.f32 %v1433, 0.0
        %v1454 = vmax.f32 %v1436, 0.0
        %v1455 = vpack.c.bf16 %v1440, %v1439
        %v1456 = vpack.c.bf16 %v1442, %v1441
        %v1457 = vpack.c.bf16 %v1444, %v1443
        %v1458 = vpack.c.bf16 %v1446, %v1445
        %v1459 = vpack.c.bf16 %v1448, %v1447
        %v1460 = vpack.c.bf16 %v1450, %v1449
        %v1461 = vpack.c.bf16 %v1452, %v1451
        %v1462 = vpack.c.bf16 %v1454, %v1453
        %v1463 = vld [vmem:[#allocation13] sm:$0xf]
        %v1464 = vld [vmem:[#allocation13 + $0x4] sm:$0xf]
        %v1465 = vld [vmem:[#allocation13 + $0x8] sm:$0xf]
        %v1466 = vld [vmem:[#allocation13 + $0xc] sm:$0xf]
        %v1467 = vld [vmem:[#allocation13 + $0x10] sm:$0xf]
        %v1468 = vld [vmem:[#allocation13 + $0x14] sm:$0xf]
        %v1469 = vld [vmem:[#allocation13 + $0x18] sm:$0xf]
        %v1470 = vld [vmem:[#allocation13 + $0x1c] sm:$0xf]
        %v1471 = vld [vmem:[#allocation13 + $0x20] sm:$0xf]
        %v1472 = vld [vmem:[#allocation13 + $0x24] sm:$0xf]
        %v1473 = vld [vmem:[#allocation13 + $0x28] sm:$0xf]
        %v1474 = vld [vmem:[#allocation13 + $0x2c] sm:$0xf]
        %v1475 = vld [vmem:[#allocation13 + $0x30] sm:$0xf]
        %v1476 = vld [vmem:[#allocation13 + $0x34] sm:$0xf]
        %v1477 = vld [vmem:[#allocation13 + $0x38] sm:$0xf]
        %v1478 = vld [vmem:[#allocation13 + $0x3c] sm:$0xf]
        %v1479 = vlaneseq
        %v1480 = vshrl.u32 %v1479, 7
        %v1481 = vsub.s32 5, %v1480
        %v1482 = vrot.slane %v453, %v1481
        %v1499 = vunpack.c.l.b16 %v1463
        %v1500 = vunpack.c.l.b16 %v1464
        %v1501 = vunpack.c.l.b16 %v1465
        %v1502 = vunpack.c.l.b16 %v1466
        %v1503 = vunpack.c.l.b16 %v1467
        %v1504 = vunpack.c.l.b16 %v1468
        %v1505 = vunpack.c.l.b16 %v1469
        %v1506 = vunpack.c.l.b16 %v1470
        %v1507 = vunpack.c.l.b16 %v1471
        %v1508 = vunpack.c.l.b16 %v1472
        %v1509 = vunpack.c.l.b16 %v1473
        %v1510 = vunpack.c.l.b16 %v1474
        %v1511 = vunpack.c.l.b16 %v1475
        %v1512 = vunpack.c.l.b16 %v1476
        %v1513 = vunpack.c.l.b16 %v1477
        %v1514 = vunpack.c.l.b16 %v1478
        %v1515 = vpack.c.b16 %v1500, %v1499
        %v1516 = vpack.c.b16 %v1502, %v1501
        %v1517 = vpack.c.b16 %v1504, %v1503
        %v1518 = vpack.c.b16 %v1506, %v1505
        %v1519 = vpack.c.b16 %v1508, %v1507
        %v1520 = vpack.c.b16 %v1510, %v1509
        %v1521 = vpack.c.b16 %v1512, %v1511
        %v1522 = vpack.c.b16 %v1514, %v1513
        %1531 = vmatprep.subr.bf16.mxu0 0
        %1532 = vmatpush1.bf16.msra.mxu0 %v1515
        %1533 = vmatprep.subr.bf16.mxu0 0
        %1534 = vmatpush1.bf16.msra.mxu0 %v1516
        %1535 = vmatprep.subr.bf16.mxu0 0
        %1536 = vmatpush1.bf16.msra.mxu0 %v1517
        %1537 = vmatprep.subr.bf16.mxu0 0
        %1538 = vmatpush1.bf16.msra.mxu0 %v1518
        %1539 = vmatprep.subr.bf16.mxu0 0
        %1540 = vmatpush1.bf16.msra.mxu0 %v1519
        %1541 = vmatprep.subr.bf16.mxu0 0
        %1542 = vmatpush1.bf16.msra.mxu0 %v1520
        %1543 = vmatprep.subr.bf16.mxu0 0
        %1544 = vmatpush1.bf16.msra.mxu0 %v1521
        %1545 = vmatprep.subr.bf16.mxu0 0
        %1546 = vmatpush1.bf16.msra.mxu0 %v1522
        %1547 = vmatprep.subr.bf16.mxu0 0
        %1548 = vmatpush1.bf16.msra.mxu0 0
        %1549 = vmatprep.subr.bf16.mxu0 0
        %1550 = vmatpush1.bf16.msra.mxu0 0
        %1551 = vmatprep.subr.bf16.mxu0 0
        %1552 = vmatpush1.bf16.msra.mxu0 0
        %1553 = vmatprep.subr.bf16.mxu0 0
        %1554 = vmatpush1.bf16.msra.mxu0 0
        %1555 = vmatprep.subr.bf16.mxu0 0
        %1556 = vmatpush1.bf16.msra.mxu0 0
        %1557 = vmatprep.subr.bf16.mxu0 0
        %1558 = vmatpush1.bf16.msra.mxu0 0
        %1559 = vmatprep.subr.bf16.mxu0 0
        %1560 = vmatpush1.bf16.msra.mxu0 0
        %1561 = vmatprep.subr.bf16.mxu0 0
        %1562 = vmatpush1.bf16.msra.mxu0 0
        %1563 = vmatprep.mubr.bf16.mxu0 0
        %1564 = vmatmul.mubr.bf16.gmra.mrb[0].mxu0 %v1455
        %v1565 = vpop.f32.mrb[0].mxu0
        %v1566 = vadd.f32 %v1482, %v1565
        %v1567 = vpop.f32.mrb[0].mxu0
        %v1568 = vpop.f32.mrb[0].mxu0
        %v1569 = vadd.f32 %v1482, %v1568
        %v1570 = vpop.f32.mrb[0].mxu0
        %1571 = vmatprep.mubr.bf16.mxu0 0
        %1572 = vmatmul.mubr.bf16.gmra.mrb[0].mxu0 %v1456
        %v1573 = vpop.f32.mrb[0].mxu0
        %v1574 = vadd.f32 %v1482, %v1573
        %v1575 = vpop.f32.mrb[0].mxu0
        %v1576 = vpop.f32.mrb[0].mxu0
        %v1577 = vadd.f32 %v1482, %v1576
        %v1578 = vpop.f32.mrb[0].mxu0
        %1579 = vmatprep.mubr.bf16.mxu0 0
        %1580 = vmatmul.mubr.bf16.gmra.mrb[0].mxu0 %v1457
        %v1581 = vpop.f32.mrb[0].mxu0
        %v1582 = vadd.f32 %v1482, %v1581
        %v1583 = vpop.f32.mrb[0].mxu0
        %v1584 = vpop.f32.mrb[0].mxu0
        %v1585 = vadd.f32 %v1482, %v1584
        %v1586 = vpop.f32.mrb[0].mxu0
        %1587 = vmatprep.mubr.bf16.mxu0 0
        %1588 = vmatmul.mubr.bf16.gmra.mrb[0].mxu0 %v1458
        %v1589 = vpop.f32.mrb[0].mxu0
        %v1590 = vadd.f32 %v1482, %v1589
        %v1591 = vpop.f32.mrb[0].mxu0
        %v1592 = vpop.f32.mrb[0].mxu0
        %v1593 = vadd.f32 %v1482, %v1592
        %v1594 = vpop.f32.mrb[0].mxu0
        %1595 = vmatprep.mubr.bf16.mxu0 0
        %1596 = vmatmul.mubr.bf16.gmra.mrb[0].mxu0 %v1459
        %v1597 = vpop.f32.mrb[0].mxu0
        %v1598 = vadd.f32 %v1482, %v1597
        %v1599 = vpop.f32.mrb[0].mxu0
        %v1600 = vpop.f32.mrb[0].mxu0
        %v1601 = vadd.f32 %v1482, %v1600
        %v1602 = vpop.f32.mrb[0].mxu0
        %1603 = vmatprep.mubr.bf16.mxu0 0
        %1604 = vmatmul.mubr.bf16.gmra.mrb[0].mxu0 %v1460
        %v1605 = vpop.f32.mrb[0].mxu0
        %v1606 = vadd.f32 %v1482, %v1605
        %v1607 = vpop.f32.mrb[0].mxu0
        %v1608 = vpop.f32.mrb[0].mxu0
        %v1609 = vadd.f32 %v1482, %v1608
        %v1610 = vpop.f32.mrb[0].mxu0
        %1611 = vmatprep.mubr.bf16.mxu0 0
        %1612 = vmatmul.mubr.bf16.gmra.mrb[0].mxu0 %v1461
        %v1613 = vpop.f32.mrb[0].mxu0
        %v1614 = vadd.f32 %v1482, %v1613
        %v1615 = vpop.f32.mrb[0].mxu0
        %v1616 = vpop.f32.mrb[0].mxu0
        %v1617 = vadd.f32 %v1482, %v1616
        %v1618 = vpop.f32.mrb[0].mxu0
        %1619 = vmatprep.mubr.bf16.mxu0 0
        %1620 = vmatmul.mubr.bf16.gmra.mrb[0].mxu0 %v1462
        %v1621 = vpop.f32.mrb[0].mxu0
        %v1622 = vadd.f32 %v1482, %v1621
        %v1623 = vpop.f32.mrb[0].mxu0
        %v1624 = vpop.f32.mrb[0].mxu0
        %v1625 = vadd.f32 %v1482, %v1624
        %v1626 = vpop.f32.mrb[0].mxu0
        %1627 = vdwg.mxu0
        %1628 = vst [vmem:[%s448] sm:$0xff] %v1566
        %1629 = vst [vmem:[%s448 + $0x8] sm:$0xff] %v1569
        %1630 = vst [vmem:[%s448 + $0x10] sm:$0xff] %v1574
        %1631 = vst [vmem:[%s448 + $0x18] sm:$0xff] %v1577
        %1632 = vst [vmem:[%s448 + $0x20] sm:$0xff] %v1582
        %1633 = vst [vmem:[%s448 + $0x28] sm:$0xff] %v1585
        %1634 = vst [vmem:[%s448 + $0x30] sm:$0xff] %v1590
        %1635 = vst [vmem:[%s448 + $0x38] sm:$0xff] %v1593
        %1636 = vst [vmem:[%s448 + $0x40] sm:$0xff] %v1598
        %1637 = vst [vmem:[%s448 + $0x48] sm:$0xff] %v1601
        %1638 = vst [vmem:[%s448 + $0x50] sm:$0xff] %v1606
        %1639 = vst [vmem:[%s448 + $0x58] sm:$0xff] %v1609
        %1640 = vst [vmem:[%s448 + $0x60] sm:$0xff] %v1614
        %1641 = vst [vmem:[%s448 + $0x68] sm:$0xff] %v1617
        %1642 = vst [vmem:[%s448 + $0x70] sm:$0xff] %v1622
        %1643 = vst [vmem:[%s448 + $0x78] sm:$0xff] %v1625
        %s1644 = sand.u32 %s214, 1
        %s1645 = scalar_lea.sflag [#allocation4], %s1644
        %s1646 = sand.u32 %s214, 1
        %s1647 = smul.addr %s1646, 128
        %s1648 = scalar_lea.vmem [#allocation14], %s1647
        %s1649 = sand.u32 %s240, 1
        %s1650 = scalar_lea.sflag [#allocation16], %s1649
        %s1651 = sand.u32 %s240, 1
        %s1652 = smul.addr %s1651, 128
        %s1653 = scalar_lea.vmem [#allocation15], %s1652
        // Predicated region
        $region81: #{tpu_custom_call.1} parent=51 // pred_check
          %p1654 = pneg %p224
        $region82: #{tpu_custom_call.1} parent=51 // pred_check_branch
          %1656 = sbr.rel (%p1654) target = $region84
        $region83: #{tpu_custom_call.1} parent=51 // pred_region
          %s1657 = smul.u32 16, %s33
          %s1659 = ssub.s32 2048, 2048
          %1660 = vsyncadd %s1645, %s1659
          %s1661 = smul.addr %s1657, 128
          %s1662 = scalar_lea.hbm %s8, %s1661
          %s1663 = sshll.u32 %s1648, 4
          %s1664 = int_to_ptr.vmem [resolvable:$true] %s1663
          %1669 = dma.vmem_to_hbm [thread:$0]  %s1664, 2048, %s1662, %s1645, 128, 128, 8
        $region84: #{tpu_custom_call.1} parent=51 // pred_fallthru
          _
        // Predicated region
        $region85: #{tpu_custom_call.1} parent=51 // pred_check
          %p1670 = pneg %p250
        $region86: #{tpu_custom_call.1} parent=51 // pred_check_branch
          %1672 = sbr.rel (%p1670) target = $region88
        $region87: #{tpu_custom_call.1} parent=51 // pred_region
          %s1673 = smul.u32 16, %s33
          %s1675 = ssub.s32 2048, 2048
          %1676 = vsyncadd %s1650, %s1675
          %s1677 = smul.addr %s1673, 128
          %s1678 = scalar_lea.hbm %s9, %s1677
          %s1679 = sshll.u32 %s1653, 4
          %s1680 = int_to_ptr.vmem [resolvable:$true] %s1679
          %1685 = dma.vmem_to_hbm [thread:$0]  %s1680, 2048, %s1678, %s1650, 128, 128, 8
        $region88: #{tpu_custom_call.1} parent=51 // pred_fallthru
          _
      $region52: #{tpu_custom_call.1} parent=5 // pred_fallthru
        _
      %p1686 = scmp.le.s32.totalorder 2, %s28
      // Predicated region
      $region89: #{tpu_custom_call.1} parent=5 // pred_check
        %p1687 = pneg %p1686
      $region90: #{tpu_custom_call.1} parent=5 // pred_check_branch
        %1689 = sbr.rel (%p1687) target = $region92
      $region91: #{tpu_custom_call.1} parent=5 // pred_region
        %s1690 = ssub.s32 %s28, 2
        // Predicated region
        $region93: #{tpu_custom_call.1} parent=91 // pred_check
          %p1691 = pneg %p230
        $region94: #{tpu_custom_call.1} parent=91 // pred_check_branch
          %1693 = sbr.rel (%p1691) target = $region96
        $region95: #{tpu_custom_call.1} parent=91 // pred_region
          %s1694 = sand.u32 %s215, 1
          %s1695 = scalar_lea.sflag [#allocation4], %s1694
          %s1696 = sand.u32 %s215, 1
          %s1697 = smul.addr %s1696, 128
          %s1698 = scalar_lea.vmem [#allocation14], %s1697
          %1699 = dma.done %s1695, 2048
        $region96: #{tpu_custom_call.1} parent=91 // pred_fallthru
          _
        // Predicated region
        $region97: #{tpu_custom_call.1} parent=91 // pred_check
          %p1700 = pneg %p256
        $region98: #{tpu_custom_call.1} parent=91 // pred_check_branch
          %1702 = sbr.rel (%p1700) target = $region100
        $region99: #{tpu_custom_call.1} parent=91 // pred_region
          %s1703 = sand.u32 %s241, 1
          %s1704 = scalar_lea.sflag [#allocation16], %s1703
          %s1705 = sand.u32 %s241, 1
          %s1706 = smul.addr %s1705, 128
          %s1707 = scalar_lea.vmem [#allocation15], %s1706
          %1708 = dma.done %s1704, 2048
        $region100: #{tpu_custom_call.1} parent=91 // pred_fallthru
          _
      $region92: #{tpu_custom_call.1} parent=5 // pred_fallthru
        _
    $region6: #{tpu_custom_call.1} parent=1 // loop_footer
      %s32 = sadd.s32 1, %s28
    $region7: #{tpu_custom_call.1} parent=1 // loop_footer_branch
      %27 = sbr.rel target = $region3
    $region8: #{tpu_custom_call.1} parent=1 // loop_exit
      _
    %1709 = vsyncpa [#allocation3], 1
    %s1710 = scalar_lea.sflag [#allocation3], 1
    %1711 = vsyncpa %s1710, 1
    %1712 = vsyncpa [#allocation6], 1
    %1713 = vsyncpa [#allocation9], 1
    %1714 = vsyncpa [#allocation12], 1
    %1715 = vsyncpa [#allocation4], 1
    %s1716 = scalar_lea.sflag [#allocation4], 1
    %1717 = vsyncpa %s1716, 1
    %1718 = vsyncpa [#allocation16], 1
    %s1719 = scalar_lea.sflag [#allocation16], 1
    %1720 = vsyncpa %s1719, 1

</llo_original>
